<compile_context>
chip_gen: v5e
topology: v5e:2x2
jax: 0.10.0
libtpu: 0.0.40
codegen_flags: <defaults>
</compile_context>

<pallas_src>
import math
import functools

import jax
import jax.numpy as jnp
from jax.experimental import pallas as pl
from jax.experimental.pallas import tpu as pltpu

UNMASKED_LABEL = -100.0
HIDDEN = 64
FACTOR = 32
E_PAD = 128   # attention embed dim (HIDDEN + behavior_dim = 68) padded to one lane tile

_VMEM = pl.BlockSpec(memory_space=pltpu.MemorySpace.VMEM)
_CPARAMS = pltpu.CompilerParams(vmem_limit_bytes=32 * 1024 * 1024)


# ----------------------------------------------------------------------------
# Fused bidirectional GRU building blocks (traced inline inside kernels)
# ----------------------------------------------------------------------------
def _bigru_hoist(x, wcat_ref, bcat_ref, g_ref, T, B, H):
    """Hoisted input projection for a direction-fused bi-GRU layer.

    g_ref (T*B, 6H) ends up with row block t holding, per gate, the fwd gates of
    time t in lanes [0:H) and the bwd gates of time T-1-t in lanes [H:2H).
    """
    H2 = 2 * H
    g_ref[...] = (jnp.dot(x, wcat_ref[...], preferred_element_type=jnp.float32)
                  + bcat_ref[...])
    is_fwd = (jax.lax.broadcasted_iota(jnp.int32, (B, 3 * H2), 1) % H2) < H

    def swap(t, carry):
        o1 = pl.multiple_of(t * B, B)
        o2 = pl.multiple_of((T - 1 - t) * B, B)
        a = g_ref[pl.ds(o1, B), :]
        b = g_ref[pl.ds(o2, B), :]
        g_ref[pl.ds(o1, B), :] = jnp.where(is_fwd, a, b)
        g_ref[pl.ds(o2, B), :] = jnp.where(is_fwd, b, a)
        return carry

    jax.lax.fori_loop(0, (T + 1) // 2, swap, 0)


def _bigru_step_fn(g_ref, hs_ref, h_ref, ucat_ref, bhn_ref, T, B, H):
    """Returns the per-time-step closure of a fused bidirectional GRU layer.

    hs_ref receives TIME-ALIGNED hidden states: hs[t*B:(t+1)*B, :H] = fwd(t),
    hs[t*B:(t+1)*B, H:2H] = bwd(t) (bwd half stored directly to row T-1-t).
    """
    H2 = 2 * H
    bhn = jnp.broadcast_to(bhn_ref[...], (B, H2))     # hoisted broadcast
    h_ref[...] = jnp.zeros_like(h_ref)

    def step(t):
        o1 = pl.multiple_of(t * B, B)
        o2 = pl.multiple_of((T - 1 - t) * B, B)
        h = h_ref[...]
        gh = jnp.dot(h, ucat_ref[...], preferred_element_type=jnp.float32)
        gi = g_ref[pl.ds(o1, B), :]
        r = jax.nn.sigmoid(gi[:, 0:H2] + gh[:, 0:H2])
        z = jax.nn.sigmoid(gi[:, H2:2 * H2] + gh[:, H2:2 * H2])
        n = jnp.tanh(gi[:, 2 * H2:3 * H2] + r * (gh[:, 2 * H2:3 * H2] + bhn))
        h_new = (1.0 - z) * n + z * h
        h_ref[...] = h_new
        hs_ref[pl.ds(o1, B), 0:H] = h_new[:, 0:H]
        hs_ref[pl.ds(o2, B), H:H2] = h_new[:, H:H2]

    return step


def _run_steps(T, step_fns):
    def body(t, carry):
        for f in step_fns:
            f(t)
        return carry
    jax.lax.fori_loop(0, T, body, 0)


# ----------------------------------------------------------------------------
# Pallas kernels
# ----------------------------------------------------------------------------
def _dual_encoder_kernel(xn_ref, xb_ref,
                         wcat_n, bcat_n, ucat_n, bhn_n,
                         wcat_b, bcat_b, ucat_b, bhn_b,
                         wfc_n, wfc_b, bfc,
                         out_ref,
                         g_n, hs_n, h_n, g_b, hs_b, h_b, *, batch):
    """encoder(neural) + behavior_encoder bi-GRUs sharing one time loop; both
    output Linears fused into one lane-dense (TB, 128) attention input."""
    B = batch
    TB = out_ref.shape[0]
    T = TB // B
    hn = bhn_n.shape[1] // 2
    hb = bhn_b.shape[1] // 2

    _bigru_hoist(xn_ref[...], wcat_n, bcat_n, g_n, T, B, hn)
    _bigru_hoist(xb_ref[...], wcat_b, bcat_b, g_b, T, B, hb)
    step_n = _bigru_step_fn(g_n, hs_n, h_n, ucat_n, bhn_n, T, B, hn)
    step_b = _bigru_step_fn(g_b, hs_b, h_b, ucat_b, bhn_b, T, B, hb)
    _run_steps(T, (step_n, step_b))

    out_ref[...] = (jnp.dot(hs_n[...], wfc_n[...], preferred_element_type=jnp.float32)
                    + jnp.dot(hs_b[...], wfc_b[...], preferred_element_type=jnp.float32)
                    + bfc[...])


def _bigru_stack_kernel(x_ref, *rest, batch, num_layers):
    """Multi-layer bidirectional GRU stack + fused output Linear (m_encoder)."""
    nl = num_layers
    layer_p = rest[:4 * nl]
    wfc, bfc = rest[4 * nl], rest[4 * nl + 1]
    out_ref = rest[4 * nl + 2]
    scr = rest[4 * nl + 3:]
    B = batch
    TB = out_ref.shape[0]
    T = TB // B

    cur = x_ref[...]
    for l in range(nl):
        wcat, bcat, ucat, bhn = layer_p[4 * l:4 * l + 4]
        g_s, hs_s, h_s = scr[3 * l:3 * l + 3]
        H = bhn.shape[1] // 2
        _bigru_hoist(cur, wcat, bcat, g_s, T, B, H)
        step = _bigru_step_fn(g_s, hs_s, h_s, ucat, bhn, T, B, H)
        _run_steps(T, (step,))
        cur = hs_s[...]

    out_ref[...] = jnp.dot(cur, wfc[...], preferred_element_type=jnp.float32) + bfc[...]


def _attn_kernel(x_ref, wqkv, bqkv, wo, bo, out_ref, *, batch, e_real):
    """Single-head self-attention on time-major (T*B, E_PAD) rows; lanes >=
    e_real are zero (zero-padded weights) and stay zero.  Matches
    nn.MultiheadAttention(num_heads=1) up to the approx softmax reciprocal."""
    x = x_ref[...]
    TB, E = x.shape
    B = batch
    T = TB // B
    qkv = jnp.dot(x, wqkv[...], preferred_element_type=jnp.float32) + bqkv[...]

    def split(i):   # (TB,E) -> (B,T,E), reshape/transpose stay in VMEM
        return jnp.transpose(qkv[:, i * E:(i + 1) * E].reshape(T, B, E), (1, 0, 2))

    q, k, v = split(0), split(1), split(2)
    s = jnp.einsum('bqe,bke->bqk', q, k,
                   preferred_element_type=jnp.float32) * (1.0 / math.sqrt(e_real))
    m = jnp.max(s, axis=-1, keepdims=True)
    p = jnp.exp(s - m)
    p = p * pl.reciprocal(jnp.sum(p, axis=-1, keepdims=True), approx=True)
    o = jnp.einsum('bqk,bke->bqe', p, v, preferred_element_type=jnp.float32)
    o2 = jnp.transpose(o, (1, 0, 2)).reshape(TB, E)
    out_ref[...] = jnp.dot(o2, wo[...], preferred_element_type=jnp.float32) + bo[...]


def _ctrl_gen_kernel(x_ref, wc, bc, uc, bhn_c, wg, bg, ug, bhn_g,
                     out_ref, gc_s, hc_s, hg_s, *, batch):
    """Fused controller GRU + generator GRU; the generator consumes the
    controller hidden of the same time step (controller -> generator.rnn)."""
    B = batch
    TB, H = out_ref.shape
    T = TB // B

    gc_s[...] = (jnp.dot(x_ref[...], wc[...], preferred_element_type=jnp.float32)
                 + bc[...])
    bhn_c_b = jnp.broadcast_to(bhn_c[...], (B, H))
    bhn_g_b = jnp.broadcast_to(bhn_g[...], (B, H))
    bg_b = jnp.broadcast_to(bg[...], (B, 3 * H))
    hc_s[...] = jnp.zeros_like(hc_s)
    hg_s[...] = jnp.zeros_like(hg_s)

    def cell(gi, h, u_ref, bhn_b):
        gh = jnp.dot(h, u_ref[...], preferred_element_type=jnp.float32)
        r = jax.nn.sigmoid(gi[:, 0:H] + gh[:, 0:H])
        z = jax.nn.sigmoid(gi[:, H:2 * H] + gh[:, H:2 * H])
        n = jnp.tanh(gi[:, 2 * H:3 * H] + r * (gh[:, 2 * H:3 * H] + bhn_b))
        return (1.0 - z) * n + z * h

    def step(t, carry):
        o = pl.multiple_of(t * B, B)
        hc_new = cell(gc_s[pl.ds(o, B), :], hc_s[...], uc, bhn_c_b)
        gi_g = jnp.dot(hc_new, wg[...], preferred_element_type=jnp.float32) + bg_b
        hg_new = cell(gi_g, hg_s[...], ug, bhn_g_b)
        hc_s[...] = hc_new
        hg_s[...] = hg_new
        out_ref[pl.ds(o, B), :] = hg_new
        return carry

    jax.lax.fori_loop(0, T, step, 0)


def _head_loss_kernel(x_ref, tgt_ref, wg, bg, wf, bf_, w1, b1, w2, b2,
                      pred_ref, loss_ref, *, n_real):
    """generator.fc -> factor.fc -> decoder.fc1(ReLU) -> decoder.fc2 (padded to
    128 output lanes, lane-dense store) + masked-mean PoissonNLL(log_input)."""
    x = x_ref[...]
    g = jnp.dot(x, wg[...], preferred_element_type=jnp.float32) + bg[...]
    f = jnp.dot(g, wf[...], preferred_element_type=jnp.float32) + bf_[...]
    d = jnp.maximum(jnp.dot(f, w1[...], preferred_element_type=jnp.float32) + b1[...], 0.0)
    p = jnp.dot(d, w2[...], preferred_element_type=jnp.float32) + b2[...]
    pred_ref[...] = p

    pred = p[:, 0:n_real]
    t = tgt_ref[...]
    mask = (t != UNMASKED_LABEL).astype(jnp.float32)
    lm = (jnp.exp(pred) - t * pred) * mask
    s = jnp.sum(jnp.sum(lm, axis=1, keepdims=True), axis=0, keepdims=True)
    c = jnp.sum(jnp.sum(mask, axis=1, keepdims=True), axis=0, keepdims=True)
    # Guarded mean: 0 for an all-unmasked batch (PyTorch would give NaN).
    loss_ref[...] = s / jnp.maximum(c, 1.0)


# ----------------------------------------------------------------------------
# Thin wrappers around pallas_call
# ----------------------------------------------------------------------------
def dual_encoder_forward(x2, b2, p, batch):
    TB = x2.shape[0]
    hn = p['neu']['bhn'].shape[1] // 2
    hb = p['beh']['bhn'].shape[1] // 2
    e_pad = p['bfc'].shape[1]
    args = (x2, b2,
            p['neu']['wcat'], p['neu']['bcat'], p['neu']['ucat'], p['neu']['bhn'],
            p['beh']['wcat'], p['beh']['bcat'], p['beh']['ucat'], p['beh']['bhn'],
            p['wfc_n'], p['wfc_b'], p['bfc'])
    return pl.pallas_call(
        functools.partial(_dual_encoder_kernel, batch=batch),
        out_shape=jax.ShapeDtypeStruct((TB, e_pad), jnp.float32),
        in_specs=[_VMEM] * len(args),
        out_specs=_VMEM,
        scratch_shapes=[
            pltpu.VMEM((TB, 6 * hn), jnp.float32),
            pltpu.VMEM((TB, 2 * hn), jnp.float32),
            pltpu.VMEM((batch, 2 * hn), jnp.float32),
            pltpu.VMEM((TB, 6 * hb), jnp.float32),
            pltpu.VMEM((TB, 2 * hb), jnp.float32),
            pltpu.VMEM((batch, 2 * hb), jnp.float32),
        ],
        compiler_params=_CPARAMS,
    )(*args)


def bigru_stack_forward(x2, p, batch):
    TB = x2.shape[0]
    layers = p['layers']
    nl = len(layers)
    hout = p['fc']['w'].shape[1]
    args = [x2]
    scratch = []
    for L in layers:
        args += [L['wcat'], L['bcat'], L['ucat'], L['bhn']]
        h = L['bhn'].shape[1] // 2
        scratch += [pltpu.VMEM((TB, 6 * h), jnp.float32),
                    pltpu.VMEM((TB, 2 * h), jnp.float32),
                    pltpu.VMEM((batch, 2 * h), jnp.float32)]
    args += [p['fc']['w'], p['fc']['b']]
    return pl.pallas_call(
        functools.partial(_bigru_stack_kernel, batch=batch, num_layers=nl),
        out_shape=jax.ShapeDtypeStruct((TB, hout), jnp.float32),
        in_specs=[_VMEM] * len(args),
        out_specs=_VMEM,
        scratch_shapes=scratch,
        compiler_params=_CPARAMS,
    )(*args)


def attention_forward(x2, p, batch, e_real):
    TB, e_pad = x2.shape
    return pl.pallas_call(
        functools.partial(_attn_kernel, batch=batch, e_real=e_real),
        out_shape=jax.ShapeDtypeStruct((TB, e_pad), jnp.float32),
        in_specs=[_VMEM] * 5,
        out_specs=_VMEM,
        compiler_params=_CPARAMS,
    )(x2, p['wqkv'], p['bqkv'], p['wo'], p['bo'])


def ctrl_gen_forward(x2, pc, pg, batch):
    TB = x2.shape[0]
    H = pc['ucat'].shape[0]
    return pl.pallas_call(
        functools.partial(_ctrl_gen_kernel, batch=batch),
        out_shape=jax.ShapeDtypeStruct((TB, H), jnp.float32),
        in_specs=[_VMEM] * 9,
        out_specs=_VMEM,
        scratch_shapes=[pltpu.VMEM((TB, 3 * H), jnp.float32),
                        pltpu.VMEM((batch, H), jnp.float32),
                        pltpu.VMEM((batch, H), jnp.float32)],
        compiler_params=_CPARAMS,
    )(x2, pc['wcat'], pc['bcat'], pc['ucat'], pc['bhn'],
      pg['wcat'], pg['bcat'], pg['ucat'], pg['bhn'])


def head_loss_forward(x2, tgt2, p, n_real):
    TB = x2.shape[0]
    n_pad = p['decoder_fc2']['w'].shape[1]
    return pl.pallas_call(
        functools.partial(_head_loss_kernel, n_real=n_real),
        out_shape=(jax.ShapeDtypeStruct((TB, n_pad), jnp.float32),
                   jax.ShapeDtypeStruct((1, 1), jnp.float32)),
        in_specs=[_VMEM] * 10,
        out_specs=(_VMEM, _VMEM),
        compiler_params=_CPARAMS,
    )(x2, tgt2,
      p['generator_fc']['w'], p['generator_fc']['b'],
      p['factor_fc']['w'], p['factor_fc']['b'],
      p['decoder_fc1']['w'], p['decoder_fc1']['b'],
      p['decoder_fc2']['w'], p['decoder_fc2']['b'])


# ----------------------------------------------------------------------------
# Parameter init (deterministic, PyTorch-style uniform bounds), fused layouts
# ----------------------------------------------------------------------------
def _uniform(key, shape, bound):
    return jax.random.uniform(key, shape, jnp.float32, -bound, bound)


def _init_bigru_layer(key, din, h):
    """Direction/gate-fused bidirectional GRU layer (columns [r|z|n], each
    gate block laid out [fwd H | bwd H])."""
    ks = jax.random.split(key, 24)
    bd = 1.0 / math.sqrt(h)

    def gates(off):
        w = [_uniform(ks[off + i], (din, h), bd) for i in range(3)]
        u = [_uniform(ks[off + 3 + i], (h, h), bd) for i in range(3)]
        bi = [_uniform(ks[off + 6 + i], (h,), bd) for i in range(3)]
        bh = [_uniform(ks[off + 9 + i], (h,), bd) for i in range(3)]
        return w, u, bi, bh

    wf, uf, bif, bhf = gates(0)
    wb, ub, bib, bhb = gates(12)

    wcat = jnp.concatenate(
        [jnp.concatenate([wf[g], wb[g]], axis=1) for g in range(3)], axis=1)

    def gate_bias(g):
        if g < 2:   # r, z : fold bias_ih + bias_hh
            return jnp.concatenate([bif[g] + bhf[g], bib[g] + bhb[g]])
        return jnp.concatenate([bif[g], bib[g]])      # n : bias_ih only

    bcat = jnp.concatenate([gate_bias(g) for g in range(3)]).reshape(1, 6 * h)

    ucat = jnp.zeros((2 * h, 6 * h), jnp.float32)
    for g in range(3):
        ucat = ucat.at[:h, 2 * h * g:2 * h * g + h].set(uf[g])
        ucat = ucat.at[h:, 2 * h * g + h:2 * h * (g + 1)].set(ub[g])

    bhn = jnp.concatenate([bhf[2], bhb[2]]).reshape(1, 2 * h)
    return {'wcat': wcat, 'bcat': bcat, 'ucat': ucat, 'bhn': bhn}


def _init_gru(key, din, h):
    """Gate-fused unidirectional GRU (columns [r|z|n])."""
    ks = jax.random.split(key, 12)
    bd = 1.0 / math.sqrt(h)
    w = [_uniform(ks[i], (din, h), bd) for i in range(3)]
    u = [_uniform(ks[3 + i], (h, h), bd) for i in range(3)]
    bi = [_uniform(ks[6 + i], (h,), bd) for i in range(3)]
    bh = [_uniform(ks[9 + i], (h,), bd) for i in range(3)]
    return {'wcat': jnp.concatenate(w, axis=1),
            'bcat': jnp.concatenate([bi[0] + bh[0], bi[1] + bh[1], bi[2]]).reshape(1, 3 * h),
            'ucat': jnp.concatenate(u, axis=1),
            'bhn': bh[2].reshape(1, h)}


def _init_linear(key, din, dout):
    k1, k2 = jax.random.split(key)
    bd = 1.0 / math.sqrt(din)
    return {'w': _uniform(k1, (din, dout), bd), 'b': _uniform(k2, (1, dout), bd)}


def _init_dual_encoder(key, num_neurons, behavior_dim, hidden):
    kn, kb, kfn, kfb = jax.random.split(key, 4)
    neu = _init_bigru_layer(kn, num_neurons, hidden)
    beh = _init_bigru_layer(kb, behavior_dim, behavior_dim)
    fc_n = _init_linear(kfn, 2 * hidden, hidden)
    fc_b = _init_linear(kfb, 2 * behavior_dim, behavior_dim)
    wfc_n = jnp.zeros((2 * hidden, E_PAD), jnp.float32).at[:, :hidden].set(fc_n['w'])
    wfc_b = (jnp.zeros((2 * behavior_dim, E_PAD), jnp.float32)
             .at[:, hidden:hidden + behavior_dim].set(fc_b['w']))
    bfc = (jnp.zeros((1, E_PAD), jnp.float32)
           .at[:, :hidden].set(fc_n['b'])
           .at[:, hidden:hidden + behavior_dim].set(fc_b['b']))
    return {'neu': neu, 'beh': beh, 'wfc_n': wfc_n, 'wfc_b': wfc_b, 'bfc': bfc}


def _init_m_encoder(key, e_real, hidden, num_layers=2):
    ks = jax.random.split(key, num_layers + 1)
    layers = []
    l0 = _init_bigru_layer(ks[0], e_real, hidden)
    wcat0 = jnp.zeros((E_PAD, 6 * hidden), jnp.float32).at[:e_real, :].set(l0['wcat'])
    layers.append(dict(l0, wcat=wcat0))
    for l in range(1, num_layers):
        layers.append(_init_bigru_layer(ks[l], 2 * hidden, hidden))
    return {'layers': layers, 'fc': _init_linear(ks[-1], 2 * hidden, hidden)}


def _init_attn(key, e_real):
    ks = jax.random.split(key, 8)
    bd = 1.0 / math.sqrt(e_real)

    def wpad(k):
        w = _uniform(k, (e_real, e_real), bd)
        return jnp.zeros((E_PAD, E_PAD), jnp.float32).at[:e_real, :e_real].set(w)

    def bpad(k):
        b = _uniform(k, (e_real,), bd)
        return jnp.zeros((E_PAD,), jnp.float32).at[:e_real].set(b)

    wq, wk, wv, wo = wpad(ks[0]), wpad(ks[1]), wpad(ks[2]), wpad(ks[3])
    bq, bk, bv, bo = bpad(ks[4]), bpad(ks[5]), bpad(ks[6]), bpad(ks[7])
    return {'wqkv': jnp.concatenate([wq, wk, wv], axis=1),
            'bqkv': jnp.concatenate([bq, bk, bv]).reshape(1, 3 * E_PAD),
            'wo': wo, 'bo': bo.reshape(1, E_PAD)}


def _init_head(key, hidden, factor, num_neurons, n_pad):
    kg, kf, k1, k2 = jax.random.split(key, 4)
    fc2 = _init_linear(k2, hidden, num_neurons)
    w2 = jnp.zeros((hidden, n_pad), jnp.float32).at[:, :num_neurons].set(fc2['w'])
    b2 = jnp.zeros((1, n_pad), jnp.float32).at[:, :num_neurons].set(fc2['b'])
    return {'generator_fc': _init_linear(kg, hidden, hidden),
            'factor_fc': _init_linear(kf, hidden, factor),
            'decoder_fc1': _init_linear(k1, factor, hidden),
            'decoder_fc2': {'w': w2, 'b': b2}}


def init_params(key, num_neurons, behavior_dim, hidden=HIDDEN, factor=FACTOR):
    assert hidden + behavior_dim <= E_PAD
    ks = jax.random.split(key, 6)
    e_real = hidden + behavior_dim
    n_pad = ((num_neurons + E_PAD - 1) // E_PAD) * E_PAD
    return {
        'enc_dual': _init_dual_encoder(ks[0], num_neurons, behavior_dim, hidden),
        'attn': _init_attn(ks[1], e_real),
        'm_encoder': _init_m_encoder(ks[2], e_real, hidden, num_layers=2),
        'controller': _init_gru(ks[3], hidden, hidden),
        'generator_rnn': _init_gru(ks[4], hidden, hidden),
        'head': _init_head(ks[5], hidden, factor, num_neurons, n_pad),
    }


# ----------------------------------------------------------------------------
# Forward pass (glue in plain JAX, hot paths in Pallas)
# ----------------------------------------------------------------------------
def lfads_teacher_forward(params, src, mask_labels, behavior):
    B, T, N = src.shape
    Db = behavior.shape[-1]
    Bp = max(8, ((B + 7) // 8) * 8)          # pad batch to the f32 sublane tile
    pad = Bp - B

    # Identity embedders (LINEAR_EMBEDDER=False); dropout is eval-mode identity.
    x = jnp.transpose(src.astype(jnp.float32), (1, 0, 2)) * math.sqrt(N)        # (T,B,N)
    bv = jnp.transpose(behavior.astype(jnp.float32), (1, 0, 2)) * math.sqrt(Db)
    if pad:
        x = jnp.pad(x, ((0, 0), (0, pad), (0, 0)))
        bv = jnp.pad(bv, ((0, 0), (0, pad), (0, 0)))
    x2 = x.reshape(T * Bp, N)                # time-major rows throughout
    b2 = bv.reshape(T * Bp, Db)

    attn_in = dual_encoder_forward(x2, b2, params['enc_dual'], Bp)       # (TB,128)
    attn_out = attention_forward(attn_in, params['attn'], Bp, HIDDEN + Db)
    enc = bigru_stack_forward(attn_out, params['m_encoder'], Bp)         # (TB,64)
    gen_h = ctrl_gen_forward(enc, params['controller'], params['generator_rnn'], Bp)

    tgt = jnp.transpose(mask_labels.astype(jnp.float32), (1, 0, 2))
    if pad:
        tgt = jnp.pad(tgt, ((0, 0), (0, pad), (0, 0)), constant_values=UNMASKED_LABEL)
    tgt2 = tgt.reshape(T * Bp, N)

    pred_pad, loss = head_loss_forward(gen_h, tgt2, params['head'], N)
    pred_rates = jnp.transpose(pred_pad.reshape(T, Bp, -1)[:, :B, :N], (1, 0, 2))
    # TODO(synk): LOSS.TOPK < 1 top-k loss masking not implemented (config fixes TOPK=1.0).
    return loss.reshape(1), pred_rates


# ----------------------------------------------------------------------------
if __name__ == "__main__":
    B, T, N, Db = 2, 8, 16, 4   # batch, trial_length, num_neurons, behavior_dim
    key = jax.random.PRNGKey(0)
    k_p, k_src, k_beh, k_lab, k_mask = jax.random.split(key, 5)

    params = init_params(k_p, N, Db)
    src = jax.random.randint(k_src, (B, T, N), 0, 4).astype(jnp.float32)
    behavior = jax.random.normal(k_beh, (B, T, Db), jnp.float32)
    labels = jax.random.randint(k_lab, (B, T, N), 0, 4).astype(jnp.float32)
    masked = jax.random.bernoulli(k_mask, 0.3, (B, T, N))
    mask_labels = jnp.where(masked, labels, UNMASKED_LABEL)

    fwd = jax.jit(lfads_teacher_forward)
    loss, pred_rates = fwd(params, src, mask_labels, behavior)
    jax.block_until_ready((loss, pred_rates))
    assert loss.shape == (1,) and pred_rates.shape == (B, T, N)
    assert bool(jnp.isfinite(loss).all()) and bool(jnp.isfinite(pred_rates).all())
    print("KERNEL_OK")
</pallas_src>

<mosaic_0001>
module attributes {stable_mosaic.version = 11 : i64} {
  func.func @_ctrl_gen_kernel(%arg0: memref<64x64xf32, #tpu.memory_space<vmem>>, %arg1: memref<64x192xf32, #tpu.memory_space<vmem>>, %arg2: memref<1x192xf32, #tpu.memory_space<vmem>>, %arg3: memref<64x192xf32, #tpu.memory_space<vmem>>, %arg4: memref<1x64xf32, #tpu.memory_space<vmem>>, %arg5: memref<64x192xf32, #tpu.memory_space<vmem>>, %arg6: memref<1x192xf32, #tpu.memory_space<vmem>>, %arg7: memref<64x192xf32, #tpu.memory_space<vmem>>, %arg8: memref<1x64xf32, #tpu.memory_space<vmem>>, %arg9: memref<64x64xf32, #tpu.memory_space<vmem>>, %arg10: memref<64x192xf32, #tpu.memory_space<vmem>>, %arg11: memref<8x64xf32, #tpu.memory_space<vmem>>, %arg12: memref<8x64xf32, #tpu.memory_space<vmem>>) attributes {dimension_semantics = [], scalar_prefetch = 0 : i64, scratch_operands = 3 : i64, tpu.core_type = #tpu.core_type<tc>} {
    %c0 = arith.constant 0 : index
    %c0_0 = arith.constant 0 : index
    %0 = vector.load %arg0[%c0, %c0_0] : memref<64x64xf32, #tpu.memory_space<vmem>>, vector<64x64xf32>
    %c0_1 = arith.constant 0 : index
    %c0_2 = arith.constant 0 : index
    %1 = vector.load %arg1[%c0_1, %c0_2] : memref<64x192xf32, #tpu.memory_space<vmem>>, vector<64x192xf32>
    %cst = arith.constant dense<0.000000e+00> : vector<64x192xf32>
    %2 = tpu.matmul %0, %1, %cst {dimension_numbers = #tpu.dot_dimension_numbers<[1], [0], [0], [1], [0, 0, 1, 1], [], []>} : vector<64x64xf32>, vector<64x192xf32>, vector<64x192xf32> -> vector<64x192xf32>
    %c0_3 = arith.constant 0 : index
    %c0_4 = arith.constant 0 : index
    %3 = vector.load %arg2[%c0_3, %c0_4] : memref<1x192xf32, #tpu.memory_space<vmem>>, vector<1x192xf32>
    %4 = vector.broadcast %3 : vector<1x192xf32> to vector<64x192xf32>
    %5 = arith.addf %2, %4 : vector<64x192xf32>
    %c0_5 = arith.constant 0 : index
    %c0_6 = arith.constant 0 : index
    %6 = vector.load %arg10[%c0_5, %c0_6] : memref<64x192xf32, #tpu.memory_space<vmem>>, vector<64x192xf32>
    tpu.vector_store %arg10[%c0_5, %c0_6], %5 {strides = array<i32>} : memref<64x192xf32, #tpu.memory_space<vmem>>, vector<64x192xf32>,
    %c0_7 = arith.constant 0 : index
    %c0_8 = arith.constant 0 : index
    %7 = vector.load %arg4[%c0_7, %c0_8] : memref<1x64xf32, #tpu.memory_space<vmem>>, vector<1x64xf32>
    %8 = vector.shape_cast %7 : vector<1x64xf32> to vector<1x64xf32>
    %9 = vector.broadcast %8 : vector<1x64xf32> to vector<8x64xf32>
    %c0_9 = arith.constant 0 : index
    %c0_10 = arith.constant 0 : index
    %10 = vector.load %arg8[%c0_9, %c0_10] : memref<1x64xf32, #tpu.memory_space<vmem>>, vector<1x64xf32>
    %11 = vector.shape_cast %10 : vector<1x64xf32> to vector<1x64xf32>
    %12 = vector.broadcast %11 : vector<1x64xf32> to vector<8x64xf32>
    %c0_11 = arith.constant 0 : index
    %c0_12 = arith.constant 0 : index
    %13 = vector.load %arg6[%c0_11, %c0_12] : memref<1x192xf32, #tpu.memory_space<vmem>>, vector<1x192xf32>
    %14 = vector.shape_cast %13 : vector<1x192xf32> to vector<1x192xf32>
    %15 = vector.broadcast %14 : vector<1x192xf32> to vector<8x192xf32>
    %cst_13 = arith.constant 0.000000e+00 : f32
    %16 = vector.broadcast %cst_13 : f32 to vector<8x64xf32>
    %c0_14 = arith.constant 0 : index
    %c0_15 = arith.constant 0 : index
    %17 = vector.load %arg11[%c0_14, %c0_15] : memref<8x64xf32, #tpu.memory_space<vmem>>, vector<8x64xf32>
    tpu.vector_store %arg11[%c0_14, %c0_15], %16 {strides = array<i32>} : memref<8x64xf32, #tpu.memory_space<vmem>>, vector<8x64xf32>,
    %cst_16 = arith.constant 0.000000e+00 : f32
    %18 = vector.broadcast %cst_16 : f32 to vector<8x64xf32>
    %c0_17 = arith.constant 0 : index
    %c0_18 = arith.constant 0 : index
    %19 = vector.load %arg12[%c0_17, %c0_18] : memref<8x64xf32, #tpu.memory_space<vmem>>, vector<8x64xf32>
    tpu.vector_store %arg12[%c0_17, %c0_18], %18 {strides = array<i32>} : memref<8x64xf32, #tpu.memory_space<vmem>>, vector<8x64xf32>,
    %c0_i32 = arith.constant 0 : i32
    %c8_i32 = arith.constant 8 : i32
    %20 = arith.addi %c0_i32, %c8_i32 : i32
    %c1_i32 = arith.constant 1 : i32
    scf.for %arg13 = %c0_i32 to %20 step %c1_i32  : i32 {
      %c8_i32_20 = arith.constant 8 : i32
      %21 = arith.muli %arg13, %c8_i32_20 : i32
      %22 = tpu.assume_multiple %21, 8 : i32
      %23 = arith.index_cast %22 : i32 to index
      %c0_21 = arith.constant 0 : index
      %24 = vector.load %arg10[%23, %c0_21] : memref<64x192xf32, #tpu.memory_space<vmem>>, vector<8x192xf32>
      %c0_22 = arith.constant 0 : index
      %c0_23 = arith.constant 0 : index
      %25 = vector.load %arg11[%c0_22, %c0_23] : memref<8x64xf32, #tpu.memory_space<vmem>>, vector<8x64xf32>
      %c0_24 = arith.constant 0 : index
      %c0_25 = arith.constant 0 : index
      %26 = vector.load %arg3[%c0_24, %c0_25] : memref<64x192xf32, #tpu.memory_space<vmem>>, vector<64x192xf32>
      %cst_26 = arith.constant dense<0.000000e+00> : vector<8x192xf32>
      %27 = tpu.matmul %25, %26, %cst_26 {dimension_numbers = #tpu.dot_dimension_numbers<[1], [0], [0], [1], [0, 0, 1, 1], [], []>} : vector<8x64xf32>, vector<64x192xf32>, vector<8x192xf32> -> vector<8x192xf32>
      %28 = vector.extract_strided_slice %24 {offsets = [0, 0], sizes = [8, 64], strides = [1, 1]} : vector<8x192xf32> to vector<8x64xf32>
      %29 = vector.extract_strided_slice %27 {offsets = [0, 0], sizes = [8, 64], strides = [1, 1]} : vector<8x192xf32> to vector<8x64xf32>
      %30 = arith.addf %28, %29 : vector<8x64xf32>
      %31 = arith.negf %30 : vector<8x64xf32>
      %32 = math.exp %31 : vector<8x64xf32>
      %cst_27 = arith.constant 1.000000e+00 : f32
      %33 = vector.broadcast %cst_27 : f32 to vector<8x64xf32>
      %34 = arith.addf %33, %32 : vector<8x64xf32>
      %35 = arith.divf %33, %34 : vector<8x64xf32>
      %36 = vector.extract_strided_slice %24 {offsets = [0, 64], sizes = [8, 64], strides = [1, 1]} : vector<8x192xf32> to vector<8x64xf32>
      %37 = vector.extract_strided_slice %27 {offsets = [0, 64], sizes = [8, 64], strides = [1, 1]} : vector<8x192xf32> to vector<8x64xf32>
      %38 = arith.addf %36, %37 : vector<8x64xf32>
      %39 = arith.negf %38 : vector<8x64xf32>
      %40 = math.exp %39 : vector<8x64xf32>
      %cst_28 = arith.constant 1.000000e+00 : f32
      %41 = vector.broadcast %cst_28 : f32 to vector<8x64xf32>
      %42 = arith.addf %41, %40 : vector<8x64xf32>
      %43 = arith.divf %41, %42 : vector<8x64xf32>
      %44 = vector.extract_strided_slice %24 {offsets = [0, 128], sizes = [8, 64], strides = [1, 1]} : vector<8x192xf32> to vector<8x64xf32>
      %45 = vector.extract_strided_slice %27 {offsets = [0, 128], sizes = [8, 64], strides = [1, 1]} : vector<8x192xf32> to vector<8x64xf32>
      %46 = arith.addf %45, %9 : vector<8x64xf32>
      %47 = arith.mulf %35, %46 : vector<8x64xf32>
      %48 = arith.addf %44, %47 : vector<8x64xf32>
      %49 = math.tanh %48 : vector<8x64xf32>
      %cst_29 = arith.constant 1.000000e+00 : f32
      %50 = vector.broadcast %cst_29 : f32 to vector<8x64xf32>
      %51 = arith.subf %50, %43 : vector<8x64xf32>
      %52 = arith.mulf %51, %49 : vector<8x64xf32>
      %53 = arith.mulf %43, %25 : vector<8x64xf32>
      %54 = arith.addf %52, %53 : vector<8x64xf32>
      %c0_30 = arith.constant 0 : index
      %c0_31 = arith.constant 0 : index
      %55 = vector.load %arg5[%c0_30, %c0_31] : memref<64x192xf32, #tpu.memory_space<vmem>>, vector<64x192xf32>
      %cst_32 = arith.constant dense<0.000000e+00> : vector<8x192xf32>
      %56 = tpu.matmul %54, %55, %cst_32 {dimension_numbers = #tpu.dot_dimension_numbers<[1], [0], [0], [1], [0, 0, 1, 1], [], []>} : vector<8x64xf32>, vector<64x192xf32>, vector<8x192xf32> -> vector<8x192xf32>
      %57 = arith.addf %56, %15 : vector<8x192xf32>
      %c0_33 = arith.constant 0 : index
      %c0_34 = arith.constant 0 : index
      %58 = vector.load %arg12[%c0_33, %c0_34] : memref<8x64xf32, #tpu.memory_space<vmem>>, vector<8x64xf32>
      %c0_35 = arith.constant 0 : index
      %c0_36 = arith.constant 0 : index
      %59 = vector.load %arg7[%c0_35, %c0_36] : memref<64x192xf32, #tpu.memory_space<vmem>>, vector<64x192xf32>
      %cst_37 = arith.constant dense<0.000000e+00> : vector<8x192xf32>
      %60 = tpu.matmul %58, %59, %cst_37 {dimension_numbers = #tpu.dot_dimension_numbers<[1], [0], [0], [1], [0, 0, 1, 1], [], []>} : vector<8x64xf32>, vector<64x192xf32>, vector<8x192xf32> -> vector<8x192xf32>
      %61 = vector.extract_strided_slice %57 {offsets = [0, 0], sizes = [8, 64], strides = [1, 1]} : vector<8x192xf32> to vector<8x64xf32>
      %62 = vector.extract_strided_slice %60 {offsets = [0, 0], sizes = [8, 64], strides = [1, 1]} : vector<8x192xf32> to vector<8x64xf32>
      %63 = arith.addf %61, %62 : vector<8x64xf32>
      %64 = arith.negf %63 : vector<8x64xf32>
      %65 = math.exp %64 : vector<8x64xf32>
      %cst_38 = arith.constant 1.000000e+00 : f32
      %66 = vector.broadcast %cst_38 : f32 to vector<8x64xf32>
      %67 = arith.addf %66, %65 : vector<8x64xf32>
      %68 = arith.divf %66, %67 : vector<8x64xf32>
      %69 = vector.extract_strided_slice %57 {offsets = [0, 64], sizes = [8, 64], strides = [1, 1]} : vector<8x192xf32> to vector<8x64xf32>
      %70 = vector.extract_strided_slice %60 {offsets = [0, 64], sizes = [8, 64], strides = [1, 1]} : vector<8x192xf32> to vector<8x64xf32>
      %71 = arith.addf %69, %70 : vector<8x64xf32>
      %72 = arith.negf %71 : vector<8x64xf32>
      %73 = math.exp %72 : vector<8x64xf32>
      %cst_39 = arith.constant 1.000000e+00 : f32
      %74 = vector.broadcast %cst_39 : f32 to vector<8x64xf32>
      %75 = arith.addf %74, %73 : vector<8x64xf32>
      %76 = arith.divf %74, %75 : vector<8x64xf32>
      %77 = vector.extract_strided_slice %57 {offsets = [0, 128], sizes = [8, 64], strides = [1, 1]} : vector<8x192xf32> to vector<8x64xf32>
      %78 = vector.extract_strided_slice %60 {offsets = [0, 128], sizes = [8, 64], strides = [1, 1]} : vector<8x192xf32> to vector<8x64xf32>
      %79 = arith.addf %78, %12 : vector<8x64xf32>
      %80 = arith.mulf %68, %79 : vector<8x64xf32>
      %81 = arith.addf %77, %80 : vector<8x64xf32>
      %82 = math.tanh %81 : vector<8x64xf32>
      %cst_40 = arith.constant 1.000000e+00 : f32
      %83 = vector.broadcast %cst_40 : f32 to vector<8x64xf32>
      %84 = arith.subf %83, %76 : vector<8x64xf32>
      %85 = arith.mulf %84, %82 : vector<8x64xf32>
      %86 = arith.mulf %76, %58 : vector<8x64xf32>
      %87 = arith.addf %85, %86 : vector<8x64xf32>
      %c0_41 = arith.constant 0 : index
      %c0_42 = arith.constant 0 : index
      %88 = vector.load %arg11[%c0_41, %c0_42] : memref<8x64xf32, #tpu.memory_space<vmem>>, vector<8x64xf32>
      tpu.vector_store %arg11[%c0_41, %c0_42], %54 {strides = array<i32>} : memref<8x64xf32, #tpu.memory_space<vmem>>, vector<8x64xf32>,
      %c0_43 = arith.constant 0 : index
      %c0_44 = arith.constant 0 : index
      %89 = vector.load %arg12[%c0_43, %c0_44] : memref<8x64xf32, #tpu.memory_space<vmem>>, vector<8x64xf32>
      tpu.vector_store %arg12[%c0_43, %c0_44], %87 {strides = array<i32>} : memref<8x64xf32, #tpu.memory_space<vmem>>, vector<8x64xf32>,
      %90 = arith.index_cast %22 : i32 to index
      %c0_45 = arith.constant 0 : index
      %91 = vector.load %arg9[%90, %c0_45] : memref<64x64xf32, #tpu.memory_space<vmem>>, vector<8x64xf32>
      tpu.vector_store %arg9[%90, %c0_45], %87 {strides = array<i32>} : memref<64x64xf32, #tpu.memory_space<vmem>>, vector<8x64xf32>,
    }
    %c8_i32_19 = arith.constant 8 : i32
    return
  }
}

module attributes {stable_mosaic.version = 11 : i64} {
  func.func @_dual_encoder_kernel(%arg0: memref<64x16xf32, #tpu.memory_space<vmem>>, %arg1: memref<64x4xf32, #tpu.memory_space<vmem>>, %arg2: memref<16x384xf32, #tpu.memory_space<vmem>>, %arg3: memref<1x384xf32, #tpu.memory_space<vmem>>, %arg4: memref<128x384xf32, #tpu.memory_space<vmem>>, %arg5: memref<1x128xf32, #tpu.memory_space<vmem>>, %arg6: memref<4x24xf32, #tpu.memory_space<vmem>>, %arg7: memref<1x24xf32, #tpu.memory_space<vmem>>, %arg8: memref<8x24xf32, #tpu.memory_space<vmem>>, %arg9: memref<1x8xf32, #tpu.memory_space<vmem>>, %arg10: memref<128x128xf32, #tpu.memory_space<vmem>>, %arg11: memref<8x128xf32, #tpu.memory_space<vmem>>, %arg12: memref<1x128xf32, #tpu.memory_space<vmem>>, %arg13: memref<64x128xf32, #tpu.memory_space<vmem>>, %arg14: memref<64x384xf32, #tpu.memory_space<vmem>>, %arg15: memref<64x128xf32, #tpu.memory_space<vmem>>, %arg16: memref<8x128xf32, #tpu.memory_space<vmem>>, %arg17: memref<64x24xf32, #tpu.memory_space<vmem>>, %arg18: memref<64x8xf32, #tpu.memory_space<vmem>>, %arg19: memref<8x8xf32, #tpu.memory_space<vmem>>) attributes {dimension_semantics = [], scalar_prefetch = 0 : i64, scratch_operands = 6 : i64, tpu.core_type = #tpu.core_type<tc>} {
    %c0 = arith.constant 0 : index
    %c0_0 = arith.constant 0 : index
    %0 = vector.load %arg0[%c0, %c0_0] : memref<64x16xf32, #tpu.memory_space<vmem>>, vector<64x16xf32>
    %c0_1 = arith.constant 0 : index
    %c0_2 = arith.constant 0 : index
    %1 = vector.load %arg2[%c0_1, %c0_2] : memref<16x384xf32, #tpu.memory_space<vmem>>, vector<16x384xf32>
    %cst = arith.constant dense<0.000000e+00> : vector<64x384xf32>
    %2 = tpu.matmul %0, %1, %cst {dimension_numbers = #tpu.dot_dimension_numbers<[1], [0], [0], [1], [0, 0, 1, 1], [], []>} : vector<64x16xf32>, vector<16x384xf32>, vector<64x384xf32> -> vector<64x384xf32>
    %c0_3 = arith.constant 0 : index
    %c0_4 = arith.constant 0 : index
    %3 = vector.load %arg3[%c0_3, %c0_4] : memref<1x384xf32, #tpu.memory_space<vmem>>, vector<1x384xf32>
    %4 = vector.broadcast %3 : vector<1x384xf32> to vector<64x384xf32>
    %5 = arith.addf %2, %4 : vector<64x384xf32>
    %c0_5 = arith.constant 0 : index
    %c0_6 = arith.constant 0 : index
    %6 = vector.load %arg14[%c0_5, %c0_6] : memref<64x384xf32, #tpu.memory_space<vmem>>, vector<64x384xf32>
    tpu.vector_store %arg14[%c0_5, %c0_6], %5 {strides = array<i32>} : memref<64x384xf32, #tpu.memory_space<vmem>>, vector<64x384xf32>,
    %7 = tpu.iota {dimensions = array<i32: 1>} : vector<8x384xi32>
    %c128_i32 = arith.constant 128 : i32
    %c0_i32 = arith.constant 0 : i32
    %8 = arith.cmpi eq, %c128_i32, %c0_i32 : i32
    %c1_i32 = arith.constant 1 : i32
    %9 = arith.select %8, %c1_i32, %c128_i32 : i32
    %10 = vector.broadcast %9 : i32 to vector<8x384xi32>
    %11 = arith.remsi %7, %10 : vector<8x384xi32>
    %c0_i32_7 = arith.constant 0 : i32
    %12 = vector.broadcast %c0_i32_7 : i32 to vector<8x384xi32>
    %13 = arith.cmpi ne, %11, %12 : vector<8x384xi32>
    %c0_i32_8 = arith.constant 0 : i32
    %14 = vector.broadcast %c0_i32_8 : i32 to vector<8x384xi32>
    %15 = arith.cmpi slt, %11, %14 : vector<8x384xi32>
    %c0_i32_9 = arith.constant 0 : i32
    %16 = arith.cmpi slt, %9, %c0_i32_9 : i32
    %17 = vector.broadcast %16 : i1 to vector<8x384xi1>
    %18 = vector.broadcast %17 : vector<8x384xi1> to vector<8x384xi1>
    %19 = arith.xori %15, %18 : vector<8x384xi1>
    %20 = arith.andi %19, %13 : vector<8x384xi1>
    %21 = vector.broadcast %9 : i32 to vector<8x384xi32>
    %22 = arith.addi %11, %21 : vector<8x384xi32>
    %23 = arith.select %20, %22, %11 : vector<8x384xi1>, vector<8x384xi32>
    %c64_i32 = arith.constant 64 : i32
    %24 = vector.broadcast %c64_i32 : i32 to vector<8x384xi32>
    %25 = arith.cmpi slt, %23, %24 : vector<8x384xi32>
    %c0_i32_10 = arith.constant 0 : i32
    %c4_i32 = arith.constant 4 : i32
    %26 = arith.addi %c0_i32_10, %c4_i32 : i32
    %c1_i32_11 = arith.constant 1 : i32
    scf.for %arg20 = %c0_i32_10 to %26 step %c1_i32_11  : i32 {
      %c8_i32_60 = arith.constant 8 : i32
      %76 = arith.muli %arg20, %c8_i32_60 : i32
      %77 = tpu.assume_multiple %76, 8 : i32
      %c7_i32 = arith.constant 7 : i32
      %78 = arith.subi %c7_i32, %arg20 : i32
      %c8_i32_61 = arith.constant 8 : i32
      %79 = arith.muli %78, %c8_i32_61 : i32
      %80 = tpu.assume_multiple %79, 8 : i32
      %81 = arith.index_cast %77 : i32 to index
      %c0_62 = arith.constant 0 : index
      %82 = vector.load %arg14[%81, %c0_62] : memref<64x384xf32, #tpu.memory_space<vmem>>, vector<8x384xf32>
      %83 = arith.index_cast %80 : i32 to index
      %c0_63 = arith.constant 0 : index
      %84 = vector.load %arg14[%83, %c0_63] : memref<64x384xf32, #tpu.memory_space<vmem>>, vector<8x384xf32>
      %85 = arith.select %25, %82, %84 : vector<8x384xi1>, vector<8x384xf32>
      %86 = arith.index_cast %77 : i32 to index
      %c0_64 = arith.constant 0 : index
      %87 = vector.load %arg14[%86, %c0_64] : memref<64x384xf32, #tpu.memory_space<vmem>>, vector<8x384xf32>
      tpu.vector_store %arg14[%86, %c0_64], %85 {strides = array<i32>} : memref<64x384xf32, #tpu.memory_space<vmem>>, vector<8x384xf32>,
      %88 = arith.select %25, %84, %82 : vector<8x384xi1>, vector<8x384xf32>
      %89 = arith.index_cast %80 : i32 to index
      %c0_65 = arith.constant 0 : index
      %90 = vector.load %arg14[%89, %c0_65] : memref<64x384xf32, #tpu.memory_space<vmem>>, vector<8x384xf32>
      tpu.vector_store %arg14[%89, %c0_65], %88 {strides = array<i32>} : memref<64x384xf32, #tpu.memory_space<vmem>>, vector<8x384xf32>,
    }
    %c4_i32_12 = arith.constant 4 : i32
    %c0_13 = arith.constant 0 : index
    %c0_14 = arith.constant 0 : index
    %27 = vector.load %arg1[%c0_13, %c0_14] : memref<64x4xf32, #tpu.memory_space<vmem>>, vector<64x4xf32>
    %c0_15 = arith.constant 0 : index
    %c0_16 = arith.constant 0 : index
    %28 = vector.load %arg6[%c0_15, %c0_16] : memref<4x24xf32, #tpu.memory_space<vmem>>, vector<4x24xf32>
    %cst_17 = arith.constant dense<0.000000e+00> : vector<64x24xf32>
    %29 = tpu.matmul %27, %28, %cst_17 {dimension_numbers = #tpu.dot_dimension_numbers<[1], [0], [0], [1], [0, 0, 1, 1], [], []>} : vector<64x4xf32>, vector<4x24xf32>, vector<64x24xf32> -> vector<64x24xf32>
    %c0_18 = arith.constant 0 : index
    %c0_19 = arith.constant 0 : index
    %30 = vector.load %arg7[%c0_18, %c0_19] : memref<1x24xf32, #tpu.memory_space<vmem>>, vector<1x24xf32>
    %31 = vector.broadcast %30 : vector<1x24xf32> to vector<64x24xf32>
    %32 = arith.addf %29, %31 : vector<64x24xf32>
    %c0_20 = arith.constant 0 : index
    %c0_21 = arith.constant 0 : index
    %33 = vector.load %arg17[%c0_20, %c0_21] : memref<64x24xf32, #tpu.memory_space<vmem>>, vector<64x24xf32>
    tpu.vector_store %arg17[%c0_20, %c0_21], %32 {strides = array<i32>} : memref<64x24xf32, #tpu.memory_space<vmem>>, vector<64x24xf32>,
    %34 = tpu.iota {dimensions = array<i32: 1>} : vector<8x24xi32>
    %c8_i32 = arith.constant 8 : i32
    %c0_i32_22 = arith.constant 0 : i32
    %35 = arith.cmpi eq, %c8_i32, %c0_i32_22 : i32
    %c1_i32_23 = arith.constant 1 : i32
    %36 = arith.select %35, %c1_i32_23, %c8_i32 : i32
    %37 = vector.broadcast %36 : i32 to vector<8x24xi32>
    %38 = arith.remsi %34, %37 : vector<8x24xi32>
    %c0_i32_24 = arith.constant 0 : i32
    %39 = vector.broadcast %c0_i32_24 : i32 to vector<8x24xi32>
    %40 = arith.cmpi ne, %38, %39 : vector<8x24xi32>
    %c0_i32_25 = arith.constant 0 : i32
    %41 = vector.broadcast %c0_i32_25 : i32 to vector<8x24xi32>
    %42 = arith.cmpi slt, %38, %41 : vector<8x24xi32>
    %c0_i32_26 = arith.constant 0 : i32
    %43 = arith.cmpi slt, %36, %c0_i32_26 : i32
    %44 = vector.broadcast %43 : i1 to vector<8x24xi1>
    %45 = vector.broadcast %44 : vector<8x24xi1> to vector<8x24xi1>
    %46 = arith.xori %42, %45 : vector<8x24xi1>
    %47 = arith.andi %46, %40 : vector<8x24xi1>
    %48 = vector.broadcast %36 : i32 to vector<8x24xi32>
    %49 = arith.addi %38, %48 : vector<8x24xi32>
    %50 = arith.select %47, %49, %38 : vector<8x24xi1>, vector<8x24xi32>
    %c4_i32_27 = arith.constant 4 : i32
    %51 = vector.broadcast %c4_i32_27 : i32 to vector<8x24xi32>
    %52 = arith.cmpi slt, %50, %51 : vector<8x24xi32>
    %c0_i32_28 = arith.constant 0 : i32
    %c4_i32_29 = arith.constant 4 : i32
    %53 = arith.addi %c0_i32_28, %c4_i32_29 : i32
    %c1_i32_30 = arith.constant 1 : i32
    scf.for %arg20 = %c0_i32_28 to %53 step %c1_i32_30  : i32 {
      %c8_i32_60 = arith.constant 8 : i32
      %76 = arith.muli %arg20, %c8_i32_60 : i32
      %77 = tpu.assume_multiple %76, 8 : i32
      %c7_i32 = arith.constant 7 : i32
      %78 = arith.subi %c7_i32, %arg20 : i32
      %c8_i32_61 = arith.constant 8 : i32
      %79 = arith.muli %78, %c8_i32_61 : i32
      %80 = tpu.assume_multiple %79, 8 : i32
      %81 = arith.index_cast %77 : i32 to index
      %c0_62 = arith.constant 0 : index
      %82 = vector.load %arg17[%81, %c0_62] : memref<64x24xf32, #tpu.memory_space<vmem>>, vector<8x24xf32>
      %83 = arith.index_cast %80 : i32 to index
      %c0_63 = arith.constant 0 : index
      %84 = vector.load %arg17[%83, %c0_63] : memref<64x24xf32, #tpu.memory_space<vmem>>, vector<8x24xf32>
      %85 = arith.select %52, %82, %84 : vector<8x24xi1>, vector<8x24xf32>
      %86 = arith.index_cast %77 : i32 to index
      %c0_64 = arith.constant 0 : index
      %87 = vector.load %arg17[%86, %c0_64] : memref<64x24xf32, #tpu.memory_space<vmem>>, vector<8x24xf32>
      tpu.vector_store %arg17[%86, %c0_64], %85 {strides = array<i32>} : memref<64x24xf32, #tpu.memory_space<vmem>>, vector<8x24xf32>,
      %88 = arith.select %52, %84, %82 : vector<8x24xi1>, vector<8x24xf32>
      %89 = arith.index_cast %80 : i32 to index
      %c0_65 = arith.constant 0 : index
      %90 = vector.load %arg17[%89, %c0_65] : memref<64x24xf32, #tpu.memory_space<vmem>>, vector<8x24xf32>
      tpu.vector_store %arg17[%89, %c0_65], %88 {strides = array<i32>} : memref<64x24xf32, #tpu.memory_space<vmem>>, vector<8x24xf32>,
    }
    %c4_i32_31 = arith.constant 4 : i32
    %c0_32 = arith.constant 0 : index
    %c0_33 = arith.constant 0 : index
    %54 = vector.load %arg5[%c0_32, %c0_33] : memref<1x128xf32, #tpu.memory_space<vmem>>, vector<1x128xf32>
    %55 = vector.shape_cast %54 : vector<1x128xf32> to vector<1x128xf32>
    %56 = vector.broadcast %55 : vector<1x128xf32> to vector<8x128xf32>
    %cst_34 = arith.constant 0.000000e+00 : f32
    %57 = vector.broadcast %cst_34 : f32 to vector<8x128xf32>
    %c0_35 = arith.constant 0 : index
    %c0_36 = arith.constant 0 : index
    %58 = vector.load %arg16[%c0_35, %c0_36] : memref<8x128xf32, #tpu.memory_space<vmem>>, vector<8x128xf32>
    tpu.vector_store %arg16[%c0_35, %c0_36], %57 {strides = array<i32>} : memref<8x128xf32, #tpu.memory_space<vmem>>, vector<8x128xf32>,
    %c0_37 = arith.constant 0 : index
    %c0_38 = arith.constant 0 : index
    %59 = vector.load %arg9[%c0_37, %c0_38] : memref<1x8xf32, #tpu.memory_space<vmem>>, vector<1x8xf32>
    %60 = vector.shape_cast %59 : vector<1x8xf32> to vector<1x8xf32>
    %61 = vector.broadcast %60 : vector<1x8xf32> to vector<8x8xf32>
    %cst_39 = arith.constant 0.000000e+00 : f32
    %62 = vector.broadcast %cst_39 : f32 to vector<8x8xf32>
    %c0_40 = arith.constant 0 : index
    %c0_41 = arith.constant 0 : index
    %63 = vector.load %arg19[%c0_40, %c0_41] : memref<8x8xf32, #tpu.memory_space<vmem>>, vector<8x8xf32>
    tpu.vector_store %arg19[%c0_40, %c0_41], %62 {strides = array<i32>} : memref<8x8xf32, #tpu.memory_space<vmem>>, vector<8x8xf32>,
    %c0_i32_42 = arith.constant 0 : i32
    %c8_i32_43 = arith.constant 8 : i32
    %64 = arith.addi %c0_i32_42, %c8_i32_43 : i32
    %c1_i32_44 = arith.constant 1 : i32
    scf.for %arg20 = %c0_i32_42 to %64 step %c1_i32_44  : i32 {
      %c8_i32_60 = arith.constant 8 : i32
      %76 = arith.muli %arg20, %c8_i32_60 : i32
      %77 = tpu.assume_multiple %76, 8 : i32
      %c7_i32 = arith.constant 7 : i32
      %78 = arith.subi %c7_i32, %arg20 : i32
      %c8_i32_61 = arith.constant 8 : i32
      %79 = arith.muli %78, %c8_i32_61 : i32
      %80 = tpu.assume_multiple %79, 8 : i32
      %c0_62 = arith.constant 0 : index
      %c0_63 = arith.constant 0 : index
      %81 = vector.load %arg16[%c0_62, %c0_63] : memref<8x128xf32, #tpu.memory_space<vmem>>, vector<8x128xf32>
      %c0_64 = arith.constant 0 : index
      %c0_65 = arith.constant 0 : index
      %82 = vector.load %arg4[%c0_64, %c0_65] : memref<128x384xf32, #tpu.memory_space<vmem>>, vector<128x384xf32>
      %cst_66 = arith.constant dense<0.000000e+00> : vector<8x384xf32>
      %83 = tpu.matmul %81, %82, %cst_66 {dimension_numbers = #tpu.dot_dimension_numbers<[1], [0], [0], [1], [0, 0, 1, 1], [], []>} : vector<8x128xf32>, vector<128x384xf32>, vector<8x384xf32> -> vector<8x384xf32>
      %84 = arith.index_cast %77 : i32 to index
      %c0_67 = arith.constant 0 : index
      %85 = vector.load %arg14[%84, %c0_67] : memref<64x384xf32, #tpu.memory_space<vmem>>, vector<8x384xf32>
      %86 = vector.extract_strided_slice %85 {offsets = [0, 0], sizes = [8, 128], strides = [1, 1]} : vector<8x384xf32> to vector<8x128xf32>
      %87 = vector.extract_strided_slice %83 {offsets = [0, 0], sizes = [8, 128], strides = [1, 1]} : vector<8x384xf32> to vector<8x128xf32>
      %88 = arith.addf %86, %87 : vector<8x128xf32>
      %89 = arith.negf %88 : vector<8x128xf32>
      %90 = math.exp %89 : vector<8x128xf32>
      %cst_68 = arith.constant 1.000000e+00 : f32
      %91 = vector.broadcast %cst_68 : f32 to vector<8x128xf32>
      %92 = arith.addf %91, %90 : vector<8x128xf32>
      %93 = arith.divf %91, %92 : vector<8x128xf32>
      %94 = vector.extract_strided_slice %85 {offsets = [0, 128], sizes = [8, 128], strides = [1, 1]} : vector<8x384xf32> to vector<8x128xf32>
      %95 = vector.extract_strided_slice %83 {offsets = [0, 128], sizes = [8, 128], strides = [1, 1]} : vector<8x384xf32> to vector<8x128xf32>
      %96 = arith.addf %94, %95 : vector<8x128xf32>
      %97 = arith.negf %96 : vector<8x128xf32>
      %98 = math.exp %97 : vector<8x128xf32>
      %cst_69 = arith.constant 1.000000e+00 : f32
      %99 = vector.broadcast %cst_69 : f32 to vector<8x128xf32>
      %100 = arith.addf %99, %98 : vector<8x128xf32>
      %101 = arith.divf %99, %100 : vector<8x128xf32>
      %102 = vector.extract_strided_slice %85 {offsets = [0, 256], sizes = [8, 128], strides = [1, 1]} : vector<8x384xf32> to vector<8x128xf32>
      %103 = vector.extract_strided_slice %83 {offsets = [0, 256], sizes = [8, 128], strides = [1, 1]} : vector<8x384xf32> to vector<8x128xf32>
      %104 = arith.addf %103, %56 : vector<8x128xf32>
      %105 = arith.mulf %93, %104 : vector<8x128xf32>
      %106 = arith.addf %102, %105 : vector<8x128xf32>
      %107 = math.tanh %106 : vector<8x128xf32>
      %cst_70 = arith.constant 1.000000e+00 : f32
      %108 = vector.broadcast %cst_70 : f32 to vector<8x128xf32>
      %109 = arith.subf %108, %101 : vector<8x128xf32>
      %110 = arith.mulf %109, %107 : vector<8x128xf32>
      %111 = arith.mulf %101, %81 : vector<8x128xf32>
      %112 = arith.addf %110, %111 : vector<8x128xf32>
      %c0_71 = arith.constant 0 : index
      %c0_72 = arith.constant 0 : index
      %113 = vector.load %arg16[%c0_71, %c0_72] : memref<8x128xf32, #tpu.memory_space<vmem>>, vector<8x128xf32>
      tpu.vector_store %arg16[%c0_71, %c0_72], %112 {strides = array<i32>} : memref<8x128xf32, #tpu.memory_space<vmem>>, vector<8x128xf32>,
      %114 = vector.extract_strided_slice %112 {offsets = [0, 0], sizes = [8, 64], strides = [1, 1]} : vector<8x128xf32> to vector<8x64xf32>
      %115 = arith.index_cast %77 : i32 to index
      %c0_73 = arith.constant 0 : index
      %116 = vector.load %arg15[%115, %c0_73] : memref<64x128xf32, #tpu.memory_space<vmem>>, vector<8x64xf32>
      tpu.vector_store %arg15[%115, %c0_73], %114 {strides = array<i32>} : memref<64x128xf32, #tpu.memory_space<vmem>>, vector<8x64xf32>,
      %117 = vector.extract_strided_slice %112 {offsets = [0, 64], sizes = [8, 64], strides = [1, 1]} : vector<8x128xf32> to vector<8x64xf32>
      %118 = arith.index_cast %80 : i32 to index
      %c64 = arith.constant 64 : index
      %119 = vector.load %arg15[%118, %c64] : memref<64x128xf32, #tpu.memory_space<vmem>>, vector<8x64xf32>
      tpu.vector_store %arg15[%118, %c64], %117 {strides = array<i32>} : memref<64x128xf32, #tpu.memory_space<vmem>>, vector<8x64xf32>,
      %c8_i32_74 = arith.constant 8 : i32
      %120 = arith.muli %arg20, %c8_i32_74 : i32
      %121 = tpu.assume_multiple %120, 8 : i32
      %c7_i32_75 = arith.constant 7 : i32
      %122 = arith.subi %c7_i32_75, %arg20 : i32
      %c8_i32_76 = arith.constant 8 : i32
      %123 = arith.muli %122, %c8_i32_76 : i32
      %124 = tpu.assume_multiple %123, 8 : i32
      %c0_77 = arith.constant 0 : index
      %c0_78 = arith.constant 0 : index
      %125 = vector.load %arg19[%c0_77, %c0_78] : memref<8x8xf32, #tpu.memory_space<vmem>>, vector<8x8xf32>
      %c0_79 = arith.constant 0 : index
      %c0_80 = arith.constant 0 : index
      %126 = vector.load %arg8[%c0_79, %c0_80] : memref<8x24xf32, #tpu.memory_space<vmem>>, vector<8x24xf32>
      %cst_81 = arith.constant dense<0.000000e+00> : vector<8x24xf32>
      %127 = tpu.matmul %125, %126, %cst_81 {dimension_numbers = #tpu.dot_dimension_numbers<[1], [0], [0], [1], [0, 0, 1, 1], [], []>} : vector<8x8xf32>, vector<8x24xf32>, vector<8x24xf32> -> vector<8x24xf32>
      %128 = arith.index_cast %121 : i32 to index
      %c0_82 = arith.constant 0 : index
      %129 = vector.load %arg17[%128, %c0_82] : memref<64x24xf32, #tpu.memory_space<vmem>>, vector<8x24xf32>
      %130 = vector.extract_strided_slice %129 {offsets = [0, 0], sizes = [8, 8], strides = [1, 1]} : vector<8x24xf32> to vector<8x8xf32>
      %131 = vector.extract_strided_slice %127 {offsets = [0, 0], sizes = [8, 8], strides = [1, 1]} : vector<8x24xf32> to vector<8x8xf32>
      %132 = arith.addf %130, %131 : vector<8x8xf32>
      %133 = arith.negf %132 : vector<8x8xf32>
      %134 = math.exp %133 : vector<8x8xf32>
      %cst_83 = arith.constant 1.000000e+00 : f32
      %135 = vector.broadcast %cst_83 : f32 to vector<8x8xf32>
      %136 = arith.addf %135, %134 : vector<8x8xf32>
      %137 = arith.divf %135, %136 : vector<8x8xf32>
      %138 = vector.extract_strided_slice %129 {offsets = [0, 8], sizes = [8, 8], strides = [1, 1]} : vector<8x24xf32> to vector<8x8xf32>
      %139 = vector.extract_strided_slice %127 {offsets = [0, 8], sizes = [8, 8], strides = [1, 1]} : vector<8x24xf32> to vector<8x8xf32>
      %140 = arith.addf %138, %139 : vector<8x8xf32>
      %141 = arith.negf %140 : vector<8x8xf32>
      %142 = math.exp %141 : vector<8x8xf32>
      %cst_84 = arith.constant 1.000000e+00 : f32
      %143 = vector.broadcast %cst_84 : f32 to vector<8x8xf32>
      %144 = arith.addf %143, %142 : vector<8x8xf32>
      %145 = arith.divf %143, %144 : vector<8x8xf32>
      %146 = vector.extract_strided_slice %129 {offsets = [0, 16], sizes = [8, 8], strides = [1, 1]} : vector<8x24xf32> to vector<8x8xf32>
      %147 = vector.extract_strided_slice %127 {offsets = [0, 16], sizes = [8, 8], strides = [1, 1]} : vector<8x24xf32> to vector<8x8xf32>
      %148 = arith.addf %147, %61 : vector<8x8xf32>
      %149 = arith.mulf %137, %148 : vector<8x8xf32>
      %150 = arith.addf %146, %149 : vector<8x8xf32>
      %151 = math.tanh %150 : vector<8x8xf32>
      %cst_85 = arith.constant 1.000000e+00 : f32
      %152 = vector.broadcast %cst_85 : f32 to vector<8x8xf32>
      %153 = arith.subf %152, %145 : vector<8x8xf32>
      %154 = arith.mulf %153, %151 : vector<8x8xf32>
      %155 = arith.mulf %145, %125 : vector<8x8xf32>
      %156 = arith.addf %154, %155 : vector<8x8xf32>
      %c0_86 = arith.constant 0 : index
      %c0_87 = arith.constant 0 : index
      %157 = vector.load %arg19[%c0_86, %c0_87] : memref<8x8xf32, #tpu.memory_space<vmem>>, vector<8x8xf32>
      tpu.vector_store %arg19[%c0_86, %c0_87], %156 {strides = array<i32>} : memref<8x8xf32, #tpu.memory_space<vmem>>, vector<8x8xf32>,
      %158 = vector.extract_strided_slice %156 {offsets = [0, 0], sizes = [8, 4], strides = [1, 1]} : vector<8x8xf32> to vector<8x4xf32>
      %159 = arith.index_cast %121 : i32 to index
      %c0_88 = arith.constant 0 : index
      %160 = vector.load %arg18[%159, %c0_88] : memref<64x8xf32, #tpu.memory_space<vmem>>, vector<8x4xf32>
      tpu.vector_store %arg18[%159, %c0_88], %158 {strides = array<i32>} : memref<64x8xf32, #tpu.memory_space<vmem>>, vector<8x4xf32>,
      %161 = vector.extract_strided_slice %156 {offsets = [0, 4], sizes = [8, 4], strides = [1, 1]} : vector<8x8xf32> to vector<8x4xf32>
      %162 = arith.index_cast %124 : i32 to index
      %c4 = arith.constant 4 : index
      %163 = vector.load %arg18[%162, %c4] : memref<64x8xf32, #tpu.memory_space<vmem>>, vector<8x4xf32>
      tpu.vector_store %arg18[%162, %c4], %161 {strides = array<i32>} : memref<64x8xf32, #tpu.memory_space<vmem>>, vector<8x4xf32>,
    }
    %c8_i32_45 = arith.constant 8 : i32
    %c0_46 = arith.constant 0 : index
    %c0_47 = arith.constant 0 : index
    %65 = vector.load %arg15[%c0_46, %c0_47] : memref<64x128xf32, #tpu.memory_space<vmem>>, vector<64x128xf32>
    %c0_48 = arith.constant 0 : index
    %c0_49 = arith.constant 0 : index
    %66 = vector.load %arg10[%c0_48, %c0_49] : memref<128x128xf32, #tpu.memory_space<vmem>>, vector<128x128xf32>
    %cst_50 = arith.constant dense<0.000000e+00> : vector<64x128xf32>
    %67 = tpu.matmul %65, %66, %cst_50 {dimension_numbers = #tpu.dot_dimension_numbers<[1], [0], [0], [1], [0, 0, 1, 1], [], []>} : vector<64x128xf32>, vector<128x128xf32>, vector<64x128xf32> -> vector<64x128xf32>
    %c0_51 = arith.constant 0 : index
    %c0_52 = arith.constant 0 : index
    %68 = vector.load %arg18[%c0_51, %c0_52] : memref<64x8xf32, #tpu.memory_space<vmem>>, vector<64x8xf32>
    %c0_53 = arith.constant 0 : index
    %c0_54 = arith.constant 0 : index
    %69 = vector.load %arg11[%c0_53, %c0_54] : memref<8x128xf32, #tpu.memory_space<vmem>>, vector<8x128xf32>
    %cst_55 = arith.constant dense<0.000000e+00> : vector<64x128xf32>
    %70 = tpu.matmul %68, %69, %cst_55 {dimension_numbers = #tpu.dot_dimension_numbers<[1], [0], [0], [1], [0, 0, 1, 1], [], []>} : vector<64x8xf32>, vector<8x128xf32>, vector<64x128xf32> -> vector<64x128xf32>
    %71 = arith.addf %67, %70 : vector<64x128xf32>
    %c0_56 = arith.constant 0 : index
    %c0_57 = arith.constant 0 : index
    %72 = vector.load %arg12[%c0_56, %c0_57] : memref<1x128xf32, #tpu.memory_space<vmem>>, vector<1x128xf32>
    %73 = vector.broadcast %72 : vector<1x128xf32> to vector<64x128xf32>
    %74 = arith.addf %71, %73 : vector<64x128xf32>
    %c0_58 = arith.constant 0 : index
    %c0_59 = arith.constant 0 : index
    %75 = vector.load %arg13[%c0_58, %c0_59] : memref<64x128xf32, #tpu.memory_space<vmem>>, vector<64x128xf32>
    tpu.vector_store %arg13[%c0_58, %c0_59], %74 {strides = array<i32>} : memref<64x128xf32, #tpu.memory_space<vmem>>, vector<64x128xf32>,
    return
  }
}

module attributes {stable_mosaic.version = 11 : i64} {
  func.func @_bigru_stack_kernel(%arg0: memref<64x128xf32, #tpu.memory_space<vmem>>, %arg1: memref<128x384xf32, #tpu.memory_space<vmem>>, %arg2: memref<1x384xf32, #tpu.memory_space<vmem>>, %arg3: memref<128x384xf32, #tpu.memory_space<vmem>>, %arg4: memref<1x128xf32, #tpu.memory_space<vmem>>, %arg5: memref<128x384xf32, #tpu.memory_space<vmem>>, %arg6: memref<1x384xf32, #tpu.memory_space<vmem>>, %arg7: memref<128x384xf32, #tpu.memory_space<vmem>>, %arg8: memref<1x128xf32, #tpu.memory_space<vmem>>, %arg9: memref<128x64xf32, #tpu.memory_space<vmem>>, %arg10: memref<1x64xf32, #tpu.memory_space<vmem>>, %arg11: memref<64x64xf32, #tpu.memory_space<vmem>>, %arg12: memref<64x384xf32, #tpu.memory_space<vmem>>, %arg13: memref<64x128xf32, #tpu.memory_space<vmem>>, %arg14: memref<8x128xf32, #tpu.memory_space<vmem>>, %arg15: memref<64x384xf32, #tpu.memory_space<vmem>>, %arg16: memref<64x128xf32, #tpu.memory_space<vmem>>, %arg17: memref<8x128xf32, #tpu.memory_space<vmem>>) attributes {dimension_semantics = [], scalar_prefetch = 0 : i64, scratch_operands = 6 : i64, tpu.core_type = #tpu.core_type<tc>} {
    %c0 = arith.constant 0 : index
    %c0_0 = arith.constant 0 : index
    %0 = vector.load %arg0[%c0, %c0_0] : memref<64x128xf32, #tpu.memory_space<vmem>>, vector<64x128xf32>
    %c0_1 = arith.constant 0 : index
    %c0_2 = arith.constant 0 : index
    %1 = vector.load %arg1[%c0_1, %c0_2] : memref<128x384xf32, #tpu.memory_space<vmem>>, vector<128x384xf32>
    %cst = arith.constant dense<0.000000e+00> : vector<64x384xf32>
    %2 = tpu.matmul %0, %1, %cst {dimension_numbers = #tpu.dot_dimension_numbers<[1], [0], [0], [1], [0, 0, 1, 1], [], []>} : vector<64x128xf32>, vector<128x384xf32>, vector<64x384xf32> -> vector<64x384xf32>
    %c0_3 = arith.constant 0 : index
    %c0_4 = arith.constant 0 : index
    %3 = vector.load %arg2[%c0_3, %c0_4] : memref<1x384xf32, #tpu.memory_space<vmem>>, vector<1x384xf32>
    %4 = vector.broadcast %3 : vector<1x384xf32> to vector<64x384xf32>
    %5 = arith.addf %2, %4 : vector<64x384xf32>
    %c0_5 = arith.constant 0 : index
    %c0_6 = arith.constant 0 : index
    %6 = vector.load %arg12[%c0_5, %c0_6] : memref<64x384xf32, #tpu.memory_space<vmem>>, vector<64x384xf32>
    tpu.vector_store %arg12[%c0_5, %c0_6], %5 {strides = array<i32>} : memref<64x384xf32, #tpu.memory_space<vmem>>, vector<64x384xf32>,
    %7 = tpu.iota {dimensions = array<i32: 1>} : vector<8x384xi32>
    %c128_i32 = arith.constant 128 : i32
    %c0_i32 = arith.constant 0 : i32
    %8 = arith.cmpi eq, %c128_i32, %c0_i32 : i32
    %c1_i32 = arith.constant 1 : i32
    %9 = arith.select %8, %c1_i32, %c128_i32 : i32
    %10 = vector.broadcast %9 : i32 to vector<8x384xi32>
    %11 = arith.remsi %7, %10 : vector<8x384xi32>
    %c0_i32_7 = arith.constant 0 : i32
    %12 = vector.broadcast %c0_i32_7 : i32 to vector<8x384xi32>
    %13 = arith.cmpi ne, %11, %12 : vector<8x384xi32>
    %c0_i32_8 = arith.constant 0 : i32
    %14 = vector.broadcast %c0_i32_8 : i32 to vector<8x384xi32>
    %15 = arith.cmpi slt, %11, %14 : vector<8x384xi32>
    %c0_i32_9 = arith.constant 0 : i32
    %16 = arith.cmpi slt, %9, %c0_i32_9 : i32
    %17 = vector.broadcast %16 : i1 to vector<8x384xi1>
    %18 = vector.broadcast %17 : vector<8x384xi1> to vector<8x384xi1>
    %19 = arith.xori %15, %18 : vector<8x384xi1>
    %20 = arith.andi %19, %13 : vector<8x384xi1>
    %21 = vector.broadcast %9 : i32 to vector<8x384xi32>
    %22 = arith.addi %11, %21 : vector<8x384xi32>
    %23 = arith.select %20, %22, %11 : vector<8x384xi1>, vector<8x384xi32>
    %c64_i32 = arith.constant 64 : i32
    %24 = vector.broadcast %c64_i32 : i32 to vector<8x384xi32>
    %25 = arith.cmpi slt, %23, %24 : vector<8x384xi32>
    %c0_i32_10 = arith.constant 0 : i32
    %c4_i32 = arith.constant 4 : i32
    %26 = arith.addi %c0_i32_10, %c4_i32 : i32
    %c1_i32_11 = arith.constant 1 : i32
    scf.for %arg18 = %c0_i32_10 to %26 step %c1_i32_11  : i32 {
      %c8_i32_59 = arith.constant 8 : i32
      %73 = arith.muli %arg18, %c8_i32_59 : i32
      %74 = tpu.assume_multiple %73, 8 : i32
      %c7_i32 = arith.constant 7 : i32
      %75 = arith.subi %c7_i32, %arg18 : i32
      %c8_i32_60 = arith.constant 8 : i32
      %76 = arith.muli %75, %c8_i32_60 : i32
      %77 = tpu.assume_multiple %76, 8 : i32
      %78 = arith.index_cast %74 : i32 to index
      %c0_61 = arith.constant 0 : index
      %79 = vector.load %arg12[%78, %c0_61] : memref<64x384xf32, #tpu.memory_space<vmem>>, vector<8x384xf32>
      %80 = arith.index_cast %77 : i32 to index
      %c0_62 = arith.constant 0 : index
      %81 = vector.load %arg12[%80, %c0_62] : memref<64x384xf32, #tpu.memory_space<vmem>>, vector<8x384xf32>
      %82 = arith.select %25, %79, %81 : vector<8x384xi1>, vector<8x384xf32>
      %83 = arith.index_cast %74 : i32 to index
      %c0_63 = arith.constant 0 : index
      %84 = vector.load %arg12[%83, %c0_63] : memref<64x384xf32, #tpu.memory_space<vmem>>, vector<8x384xf32>
      tpu.vector_store %arg12[%83, %c0_63], %82 {strides = array<i32>} : memref<64x384xf32, #tpu.memory_space<vmem>>, vector<8x384xf32>,
      %85 = arith.select %25, %81, %79 : vector<8x384xi1>, vector<8x384xf32>
      %86 = arith.index_cast %77 : i32 to index
      %c0_64 = arith.constant 0 : index
      %87 = vector.load %arg12[%86, %c0_64] : memref<64x384xf32, #tpu.memory_space<vmem>>, vector<8x384xf32>
      tpu.vector_store %arg12[%86, %c0_64], %85 {strides = array<i32>} : memref<64x384xf32, #tpu.memory_space<vmem>>, vector<8x384xf32>,
    }
    %c4_i32_12 = arith.constant 4 : i32
    %c0_13 = arith.constant 0 : index
    %c0_14 = arith.constant 0 : index
    %27 = vector.load %arg4[%c0_13, %c0_14] : memref<1x128xf32, #tpu.memory_space<vmem>>, vector<1x128xf32>
    %28 = vector.shape_cast %27 : vector<1x128xf32> to vector<1x128xf32>
    %29 = vector.broadcast %28 : vector<1x128xf32> to vector<8x128xf32>
    %cst_15 = arith.constant 0.000000e+00 : f32
    %30 = vector.broadcast %cst_15 : f32 to vector<8x128xf32>
    %c0_16 = arith.constant 0 : index
    %c0_17 = arith.constant 0 : index
    %31 = vector.load %arg14[%c0_16, %c0_17] : memref<8x128xf32, #tpu.memory_space<vmem>>, vector<8x128xf32>
    tpu.vector_store %arg14[%c0_16, %c0_17], %30 {strides = array<i32>} : memref<8x128xf32, #tpu.memory_space<vmem>>, vector<8x128xf32>,
    %c0_i32_18 = arith.constant 0 : i32
    %c8_i32 = arith.constant 8 : i32
    %32 = arith.addi %c0_i32_18, %c8_i32 : i32
    %c1_i32_19 = arith.constant 1 : i32
    scf.for %arg18 = %c0_i32_18 to %32 step %c1_i32_19  : i32 {
      %c8_i32_59 = arith.constant 8 : i32
      %73 = arith.muli %arg18, %c8_i32_59 : i32
      %74 = tpu.assume_multiple %73, 8 : i32
      %c7_i32 = arith.constant 7 : i32
      %75 = arith.subi %c7_i32, %arg18 : i32
      %c8_i32_60 = arith.constant 8 : i32
      %76 = arith.muli %75, %c8_i32_60 : i32
      %77 = tpu.assume_multiple %76, 8 : i32
      %c0_61 = arith.constant 0 : index
      %c0_62 = arith.constant 0 : index
      %78 = vector.load %arg14[%c0_61, %c0_62] : memref<8x128xf32, #tpu.memory_space<vmem>>, vector<8x128xf32>
      %c0_63 = arith.constant 0 : index
      %c0_64 = arith.constant 0 : index
      %79 = vector.load %arg3[%c0_63, %c0_64] : memref<128x384xf32, #tpu.memory_space<vmem>>, vector<128x384xf32>
      %cst_65 = arith.constant dense<0.000000e+00> : vector<8x384xf32>
      %80 = tpu.matmul %78, %79, %cst_65 {dimension_numbers = #tpu.dot_dimension_numbers<[1], [0], [0], [1], [0, 0, 1, 1], [], []>} : vector<8x128xf32>, vector<128x384xf32>, vector<8x384xf32> -> vector<8x384xf32>
      %81 = arith.index_cast %74 : i32 to index
      %c0_66 = arith.constant 0 : index
      %82 = vector.load %arg12[%81, %c0_66] : memref<64x384xf32, #tpu.memory_space<vmem>>, vector<8x384xf32>
      %83 = vector.extract_strided_slice %82 {offsets = [0, 0], sizes = [8, 128], strides = [1, 1]} : vector<8x384xf32> to vector<8x128xf32>
      %84 = vector.extract_strided_slice %80 {offsets = [0, 0], sizes = [8, 128], strides = [1, 1]} : vector<8x384xf32> to vector<8x128xf32>
      %85 = arith.addf %83, %84 : vector<8x128xf32>
      %86 = arith.negf %85 : vector<8x128xf32>
      %87 = math.exp %86 : vector<8x128xf32>
      %cst_67 = arith.constant 1.000000e+00 : f32
      %88 = vector.broadcast %cst_67 : f32 to vector<8x128xf32>
      %89 = arith.addf %88, %87 : vector<8x128xf32>
      %90 = arith.divf %88, %89 : vector<8x128xf32>
      %91 = vector.extract_strided_slice %82 {offsets = [0, 128], sizes = [8, 128], strides = [1, 1]} : vector<8x384xf32> to vector<8x128xf32>
      %92 = vector.extract_strided_slice %80 {offsets = [0, 128], sizes = [8, 128], strides = [1, 1]} : vector<8x384xf32> to vector<8x128xf32>
      %93 = arith.addf %91, %92 : vector<8x128xf32>
      %94 = arith.negf %93 : vector<8x128xf32>
      %95 = math.exp %94 : vector<8x128xf32>
      %cst_68 = arith.constant 1.000000e+00 : f32
      %96 = vector.broadcast %cst_68 : f32 to vector<8x128xf32>
      %97 = arith.addf %96, %95 : vector<8x128xf32>
      %98 = arith.divf %96, %97 : vector<8x128xf32>
      %99 = vector.extract_strided_slice %82 {offsets = [0, 256], sizes = [8, 128], strides = [1, 1]} : vector<8x384xf32> to vector<8x128xf32>
      %100 = vector.extract_strided_slice %80 {offsets = [0, 256], sizes = [8, 128], strides = [1, 1]} : vector<8x384xf32> to vector<8x128xf32>
      %101 = arith.addf %100, %29 : vector<8x128xf32>
      %102 = arith.mulf %90, %101 : vector<8x128xf32>
      %103 = arith.addf %99, %102 : vector<8x128xf32>
      %104 = math.tanh %103 : vector<8x128xf32>
      %cst_69 = arith.constant 1.000000e+00 : f32
      %105 = vector.broadcast %cst_69 : f32 to vector<8x128xf32>
      %106 = arith.subf %105, %98 : vector<8x128xf32>
      %107 = arith.mulf %106, %104 : vector<8x128xf32>
      %108 = arith.mulf %98, %78 : vector<8x128xf32>
      %109 = arith.addf %107, %108 : vector<8x128xf32>
      %c0_70 = arith.constant 0 : index
      %c0_71 = arith.constant 0 : index
      %110 = vector.load %arg14[%c0_70, %c0_71] : memref<8x128xf32, #tpu.memory_space<vmem>>, vector<8x128xf32>
      tpu.vector_store %arg14[%c0_70, %c0_71], %109 {strides = array<i32>} : memref<8x128xf32, #tpu.memory_space<vmem>>, vector<8x128xf32>,
      %111 = vector.extract_strided_slice %109 {offsets = [0, 0], sizes = [8, 64], strides = [1, 1]} : vector<8x128xf32> to vector<8x64xf32>
      %112 = arith.index_cast %74 : i32 to index
      %c0_72 = arith.constant 0 : index
      %113 = vector.load %arg13[%112, %c0_72] : memref<64x128xf32, #tpu.memory_space<vmem>>, vector<8x64xf32>
      tpu.vector_store %arg13[%112, %c0_72], %111 {strides = array<i32>} : memref<64x128xf32, #tpu.memory_space<vmem>>, vector<8x64xf32>,
      %114 = vector.extract_strided_slice %109 {offsets = [0, 64], sizes = [8, 64], strides = [1, 1]} : vector<8x128xf32> to vector<8x64xf32>
      %115 = arith.index_cast %77 : i32 to index
      %c64 = arith.constant 64 : index
      %116 = vector.load %arg13[%115, %c64] : memref<64x128xf32, #tpu.memory_space<vmem>>, vector<8x64xf32>
      tpu.vector_store %arg13[%115, %c64], %114 {strides = array<i32>} : memref<64x128xf32, #tpu.memory_space<vmem>>, vector<8x64xf32>,
    }
    %c8_i32_20 = arith.constant 8 : i32
    %c0_21 = arith.constant 0 : index
    %c0_22 = arith.constant 0 : index
    %33 = vector.load %arg13[%c0_21, %c0_22] : memref<64x128xf32, #tpu.memory_space<vmem>>, vector<64x128xf32>
    %c0_23 = arith.constant 0 : index
    %c0_24 = arith.constant 0 : index
    %34 = vector.load %arg5[%c0_23, %c0_24] : memref<128x384xf32, #tpu.memory_space<vmem>>, vector<128x384xf32>
    %cst_25 = arith.constant dense<0.000000e+00> : vector<64x384xf32>
    %35 = tpu.matmul %33, %34, %cst_25 {dimension_numbers = #tpu.dot_dimension_numbers<[1], [0], [0], [1], [0, 0, 1, 1], [], []>} : vector<64x128xf32>, vector<128x384xf32>, vector<64x384xf32> -> vector<64x384xf32>
    %c0_26 = arith.constant 0 : index
    %c0_27 = arith.constant 0 : index
    %36 = vector.load %arg6[%c0_26, %c0_27] : memref<1x384xf32, #tpu.memory_space<vmem>>, vector<1x384xf32>
    %37 = vector.broadcast %36 : vector<1x384xf32> to vector<64x384xf32>
    %38 = arith.addf %35, %37 : vector<64x384xf32>
    %c0_28 = arith.constant 0 : index
    %c0_29 = arith.constant 0 : index
    %39 = vector.load %arg15[%c0_28, %c0_29] : memref<64x384xf32, #tpu.memory_space<vmem>>, vector<64x384xf32>
    tpu.vector_store %arg15[%c0_28, %c0_29], %38 {strides = array<i32>} : memref<64x384xf32, #tpu.memory_space<vmem>>, vector<64x384xf32>,
    %40 = tpu.iota {dimensions = array<i32: 1>} : vector<8x384xi32>
    %c128_i32_30 = arith.constant 128 : i32
    %c0_i32_31 = arith.constant 0 : i32
    %41 = arith.cmpi eq, %c128_i32_30, %c0_i32_31 : i32
    %c1_i32_32 = arith.constant 1 : i32
    %42 = arith.select %41, %c1_i32_32, %c128_i32_30 : i32
    %43 = vector.broadcast %42 : i32 to vector<8x384xi32>
    %44 = arith.remsi %40, %43 : vector<8x384xi32>
    %c0_i32_33 = arith.constant 0 : i32
    %45 = vector.broadcast %c0_i32_33 : i32 to vector<8x384xi32>
    %46 = arith.cmpi ne, %44, %45 : vector<8x384xi32>
    %c0_i32_34 = arith.constant 0 : i32
    %47 = vector.broadcast %c0_i32_34 : i32 to vector<8x384xi32>
    %48 = arith.cmpi slt, %44, %47 : vector<8x384xi32>
    %c0_i32_35 = arith.constant 0 : i32
    %49 = arith.cmpi slt, %42, %c0_i32_35 : i32
    %50 = vector.broadcast %49 : i1 to vector<8x384xi1>
    %51 = vector.broadcast %50 : vector<8x384xi1> to vector<8x384xi1>
    %52 = arith.xori %48, %51 : vector<8x384xi1>
    %53 = arith.andi %52, %46 : vector<8x384xi1>
    %54 = vector.broadcast %42 : i32 to vector<8x384xi32>
    %55 = arith.addi %44, %54 : vector<8x384xi32>
    %56 = arith.select %53, %55, %44 : vector<8x384xi1>, vector<8x384xi32>
    %c64_i32_36 = arith.constant 64 : i32
    %57 = vector.broadcast %c64_i32_36 : i32 to vector<8x384xi32>
    %58 = arith.cmpi slt, %56, %57 : vector<8x384xi32>
    %c0_i32_37 = arith.constant 0 : i32
    %c4_i32_38 = arith.constant 4 : i32
    %59 = arith.addi %c0_i32_37, %c4_i32_38 : i32
    %c1_i32_39 = arith.constant 1 : i32
    scf.for %arg18 = %c0_i32_37 to %59 step %c1_i32_39  : i32 {
      %c8_i32_59 = arith.constant 8 : i32
      %73 = arith.muli %arg18, %c8_i32_59 : i32
      %74 = tpu.assume_multiple %73, 8 : i32
      %c7_i32 = arith.constant 7 : i32
      %75 = arith.subi %c7_i32, %arg18 : i32
      %c8_i32_60 = arith.constant 8 : i32
      %76 = arith.muli %75, %c8_i32_60 : i32
      %77 = tpu.assume_multiple %76, 8 : i32
      %78 = arith.index_cast %74 : i32 to index
      %c0_61 = arith.constant 0 : index
      %79 = vector.load %arg15[%78, %c0_61] : memref<64x384xf32, #tpu.memory_space<vmem>>, vector<8x384xf32>
      %80 = arith.index_cast %77 : i32 to index
      %c0_62 = arith.constant 0 : index
      %81 = vector.load %arg15[%80, %c0_62] : memref<64x384xf32, #tpu.memory_space<vmem>>, vector<8x384xf32>
      %82 = arith.select %58, %79, %81 : vector<8x384xi1>, vector<8x384xf32>
      %83 = arith.index_cast %74 : i32 to index
      %c0_63 = arith.constant 0 : index
      %84 = vector.load %arg15[%83, %c0_63] : memref<64x384xf32, #tpu.memory_space<vmem>>, vector<8x384xf32>
      tpu.vector_store %arg15[%83, %c0_63], %82 {strides = array<i32>} : memref<64x384xf32, #tpu.memory_space<vmem>>, vector<8x384xf32>,
      %85 = arith.select %58, %81, %79 : vector<8x384xi1>, vector<8x384xf32>
      %86 = arith.index_cast %77 : i32 to index
      %c0_64 = arith.constant 0 : index
      %87 = vector.load %arg15[%86, %c0_64] : memref<64x384xf32, #tpu.memory_space<vmem>>, vector<8x384xf32>
      tpu.vector_store %arg15[%86, %c0_64], %85 {strides = array<i32>} : memref<64x384xf32, #tpu.memory_space<vmem>>, vector<8x384xf32>,
    }
    %c4_i32_40 = arith.constant 4 : i32
    %c0_41 = arith.constant 0 : index
    %c0_42 = arith.constant 0 : index
    %60 = vector.load %arg8[%c0_41, %c0_42] : memref<1x128xf32, #tpu.memory_space<vmem>>, vector<1x128xf32>
    %61 = vector.shape_cast %60 : vector<1x128xf32> to vector<1x128xf32>
    %62 = vector.broadcast %61 : vector<1x128xf32> to vector<8x128xf32>
    %cst_43 = arith.constant 0.000000e+00 : f32
    %63 = vector.broadcast %cst_43 : f32 to vector<8x128xf32>
    %c0_44 = arith.constant 0 : index
    %c0_45 = arith.constant 0 : index
    %64 = vector.load %arg17[%c0_44, %c0_45] : memref<8x128xf32, #tpu.memory_space<vmem>>, vector<8x128xf32>
    tpu.vector_store %arg17[%c0_44, %c0_45], %63 {strides = array<i32>} : memref<8x128xf32, #tpu.memory_space<vmem>>, vector<8x128xf32>,
    %c0_i32_46 = arith.constant 0 : i32
    %c8_i32_47 = arith.constant 8 : i32
    %65 = arith.addi %c0_i32_46, %c8_i32_47 : i32
    %c1_i32_48 = arith.constant 1 : i32
    scf.for %arg18 = %c0_i32_46 to %65 step %c1_i32_48  : i32 {
      %c8_i32_59 = arith.constant 8 : i32
      %73 = arith.muli %arg18, %c8_i32_59 : i32
      %74 = tpu.assume_multiple %73, 8 : i32
      %c7_i32 = arith.constant 7 : i32
      %75 = arith.subi %c7_i32, %arg18 : i32
      %c8_i32_60 = arith.constant 8 : i32
      %76 = arith.muli %75, %c8_i32_60 : i32
      %77 = tpu.assume_multiple %76, 8 : i32
      %c0_61 = arith.constant 0 : index
      %c0_62 = arith.constant 0 : index
      %78 = vector.load %arg17[%c0_61, %c0_62] : memref<8x128xf32, #tpu.memory_space<vmem>>, vector<8x128xf32>
      %c0_63 = arith.constant 0 : index
      %c0_64 = arith.constant 0 : index
      %79 = vector.load %arg7[%c0_63, %c0_64] : memref<128x384xf32, #tpu.memory_space<vmem>>, vector<128x384xf32>
      %cst_65 = arith.constant dense<0.000000e+00> : vector<8x384xf32>
      %80 = tpu.matmul %78, %79, %cst_65 {dimension_numbers = #tpu.dot_dimension_numbers<[1], [0], [0], [1], [0, 0, 1, 1], [], []>} : vector<8x128xf32>, vector<128x384xf32>, vector<8x384xf32> -> vector<8x384xf32>
      %81 = arith.index_cast %74 : i32 to index
      %c0_66 = arith.constant 0 : index
      %82 = vector.load %arg15[%81, %c0_66] : memref<64x384xf32, #tpu.memory_space<vmem>>, vector<8x384xf32>
      %83 = vector.extract_strided_slice %82 {offsets = [0, 0], sizes = [8, 128], strides = [1, 1]} : vector<8x384xf32> to vector<8x128xf32>
      %84 = vector.extract_strided_slice %80 {offsets = [0, 0], sizes = [8, 128], strides = [1, 1]} : vector<8x384xf32> to vector<8x128xf32>
      %85 = arith.addf %83, %84 : vector<8x128xf32>
      %86 = arith.negf %85 : vector<8x128xf32>
      %87 = math.exp %86 : vector<8x128xf32>
      %cst_67 = arith.constant 1.000000e+00 : f32
      %88 = vector.broadcast %cst_67 : f32 to vector<8x128xf32>
      %89 = arith.addf %88, %87 : vector<8x128xf32>
      %90 = arith.divf %88, %89 : vector<8x128xf32>
      %91 = vector.extract_strided_slice %82 {offsets = [0, 128], sizes = [8, 128], strides = [1, 1]} : vector<8x384xf32> to vector<8x128xf32>
      %92 = vector.extract_strided_slice %80 {offsets = [0, 128], sizes = [8, 128], strides = [1, 1]} : vector<8x384xf32> to vector<8x128xf32>
      %93 = arith.addf %91, %92 : vector<8x128xf32>
      %94 = arith.negf %93 : vector<8x128xf32>
      %95 = math.exp %94 : vector<8x128xf32>
      %cst_68 = arith.constant 1.000000e+00 : f32
      %96 = vector.broadcast %cst_68 : f32 to vector<8x128xf32>
      %97 = arith.addf %96, %95 : vector<8x128xf32>
      %98 = arith.divf %96, %97 : vector<8x128xf32>
      %99 = vector.extract_strided_slice %82 {offsets = [0, 256], sizes = [8, 128], strides = [1, 1]} : vector<8x384xf32> to vector<8x128xf32>
      %100 = vector.extract_strided_slice %80 {offsets = [0, 256], sizes = [8, 128], strides = [1, 1]} : vector<8x384xf32> to vector<8x128xf32>
      %101 = arith.addf %100, %62 : vector<8x128xf32>
      %102 = arith.mulf %90, %101 : vector<8x128xf32>
      %103 = arith.addf %99, %102 : vector<8x128xf32>
      %104 = math.tanh %103 : vector<8x128xf32>
      %cst_69 = arith.constant 1.000000e+00 : f32
      %105 = vector.broadcast %cst_69 : f32 to vector<8x128xf32>
      %106 = arith.subf %105, %98 : vector<8x128xf32>
      %107 = arith.mulf %106, %104 : vector<8x128xf32>
      %108 = arith.mulf %98, %78 : vector<8x128xf32>
      %109 = arith.addf %107, %108 : vector<8x128xf32>
      %c0_70 = arith.constant 0 : index
      %c0_71 = arith.constant 0 : index
      %110 = vector.load %arg17[%c0_70, %c0_71] : memref<8x128xf32, #tpu.memory_space<vmem>>, vector<8x128xf32>
      tpu.vector_store %arg17[%c0_70, %c0_71], %109 {strides = array<i32>} : memref<8x128xf32, #tpu.memory_space<vmem>>, vector<8x128xf32>,
      %111 = vector.extract_strided_slice %109 {offsets = [0, 0], sizes = [8, 64], strides = [1, 1]} : vector<8x128xf32> to vector<8x64xf32>
      %112 = arith.index_cast %74 : i32 to index
      %c0_72 = arith.constant 0 : index
      %113 = vector.load %arg16[%112, %c0_72] : memref<64x128xf32, #tpu.memory_space<vmem>>, vector<8x64xf32>
      tpu.vector_store %arg16[%112, %c0_72], %111 {strides = array<i32>} : memref<64x128xf32, #tpu.memory_space<vmem>>, vector<8x64xf32>,
      %114 = vector.extract_strided_slice %109 {offsets = [0, 64], sizes = [8, 64], strides = [1, 1]} : vector<8x128xf32> to vector<8x64xf32>
      %115 = arith.index_cast %77 : i32 to index
      %c64 = arith.constant 64 : index
      %116 = vector.load %arg16[%115, %c64] : memref<64x128xf32, #tpu.memory_space<vmem>>, vector<8x64xf32>
      tpu.vector_store %arg16[%115, %c64], %114 {strides = array<i32>} : memref<64x128xf32, #tpu.memory_space<vmem>>, vector<8x64xf32>,
    }
    %c8_i32_49 = arith.constant 8 : i32
    %c0_50 = arith.constant 0 : index
    %c0_51 = arith.constant 0 : index
    %66 = vector.load %arg16[%c0_50, %c0_51] : memref<64x128xf32, #tpu.memory_space<vmem>>, vector<64x128xf32>
    %c0_52 = arith.constant 0 : index
    %c0_53 = arith.constant 0 : index
    %67 = vector.load %arg9[%c0_52, %c0_53] : memref<128x64xf32, #tpu.memory_space<vmem>>, vector<128x64xf32>
    %cst_54 = arith.constant dense<0.000000e+00> : vector<64x64xf32>
    %68 = tpu.matmul %66, %67, %cst_54 {dimension_numbers = #tpu.dot_dimension_numbers<[1], [0], [0], [1], [0, 0, 1, 1], [], []>} : vector<64x128xf32>, vector<128x64xf32>, vector<64x64xf32> -> vector<64x64xf32>
    %c0_55 = arith.constant 0 : index
    %c0_56 = arith.constant 0 : index
    %69 = vector.load %arg10[%c0_55, %c0_56] : memref<1x64xf32, #tpu.memory_space<vmem>>, vector<1x64xf32>
    %70 = vector.broadcast %69 : vector<1x64xf32> to vector<64x64xf32>
    %71 = arith.addf %68, %70 : vector<64x64xf32>
    %c0_57 = arith.constant 0 : index
    %c0_58 = arith.constant 0 : index
    %72 = vector.load %arg11[%c0_57, %c0_58] : memref<64x64xf32, #tpu.memory_space<vmem>>, vector<64x64xf32>
    tpu.vector_store %arg11[%c0_57, %c0_58], %71 {strides = array<i32>} : memref<64x64xf32, #tpu.memory_space<vmem>>, vector<64x64xf32>,
    return
  }
}

module attributes {stable_mosaic.version = 11 : i64} {
  func.func @_attn_kernel(%arg0: memref<64x128xf32, #tpu.memory_space<vmem>>, %arg1: memref<128x384xf32, #tpu.memory_space<vmem>>, %arg2: memref<1x384xf32, #tpu.memory_space<vmem>>, %arg3: memref<128x128xf32, #tpu.memory_space<vmem>>, %arg4: memref<1x128xf32, #tpu.memory_space<vmem>>, %arg5: memref<64x128xf32, #tpu.memory_space<vmem>>) attributes {dimension_semantics = [], scalar_prefetch = 0 : i64, scratch_operands = 0 : i64, tpu.core_type = #tpu.core_type<tc>} {
    %c0 = arith.constant 0 : index
    %c0_0 = arith.constant 0 : index
    %0 = vector.load %arg0[%c0, %c0_0] : memref<64x128xf32, #tpu.memory_space<vmem>>, vector<64x128xf32>
    %c0_1 = arith.constant 0 : index
    %c0_2 = arith.constant 0 : index
    %1 = vector.load %arg1[%c0_1, %c0_2] : memref<128x384xf32, #tpu.memory_space<vmem>>, vector<128x384xf32>
    %cst = arith.constant dense<0.000000e+00> : vector<64x384xf32>
    %2 = tpu.matmul %0, %1, %cst {dimension_numbers = #tpu.dot_dimension_numbers<[1], [0], [0], [1], [0, 0, 1, 1], [], []>} : vector<64x128xf32>, vector<128x384xf32>, vector<64x384xf32> -> vector<64x384xf32>
    %c0_3 = arith.constant 0 : index
    %c0_4 = arith.constant 0 : index
    %3 = vector.load %arg2[%c0_3, %c0_4] : memref<1x384xf32, #tpu.memory_space<vmem>>, vector<1x384xf32>
    %4 = vector.broadcast %3 : vector<1x384xf32> to vector<64x384xf32>
    %5 = arith.addf %2, %4 : vector<64x384xf32>
    %6 = vector.extract_strided_slice %5 {offsets = [0, 0], sizes = [64, 128], strides = [1, 1]} : vector<64x384xf32> to vector<64x128xf32>
    %7 = vector.shape_cast %6 : vector<64x128xf32> to vector<8x8x128xf32>
    %8 = tpu.transpose %7, [1, 0, 2] : vector<8x8x128xf32> -> vector<8x8x128xf32>
    %9 = vector.extract_strided_slice %5 {offsets = [0, 128], sizes = [64, 128], strides = [1, 1]} : vector<64x384xf32> to vector<64x128xf32>
    %10 = vector.shape_cast %9 : vector<64x128xf32> to vector<8x8x128xf32>
    %11 = tpu.transpose %10, [1, 0, 2] : vector<8x8x128xf32> -> vector<8x8x128xf32>
    %12 = vector.extract_strided_slice %5 {offsets = [0, 256], sizes = [64, 128], strides = [1, 1]} : vector<64x384xf32> to vector<64x128xf32>
    %13 = vector.shape_cast %12 : vector<64x128xf32> to vector<8x8x128xf32>
    %14 = tpu.transpose %13, [1, 0, 2] : vector<8x8x128xf32> -> vector<8x8x128xf32>
    "tpu.trace_start"() <{level = 10 : i32, message = "bqe,bke->bqk"}> : () -> ()
    %cst_5 = arith.constant dense<0.000000e+00> : vector<8x8x8xf32>
    %15 = tpu.matmul %8, %11, %cst_5 {dimension_numbers = #tpu.dot_dimension_numbers<[2], [2], [1], [1], [0, 0, 0, 1, 1, 1], [0], [0]>} : vector<8x8x128xf32>, vector<8x8x128xf32>, vector<8x8x8xf32> -> vector<8x8x8xf32>
    "tpu.trace_stop"() : () -> ()
    %cst_6 = arith.constant 0.12126781 : f32
    %16 = vector.broadcast %cst_6 : f32 to vector<8x8x8xf32>
    %17 = arith.mulf %15, %16 : vector<8x8x8xf32>
    %cst_7 = arith.constant dense<0xFF800000> : vector<8x8xf32>
    %18 = vector.multi_reduction <maximumf>, %17, %cst_7 [2] : vector<8x8x8xf32> to vector<8x8xf32>
    %19 = vector.shape_cast %18 : vector<8x8xf32> to vector<8x8x1xf32>
    %20 = vector.broadcast %19 : vector<8x8x1xf32> to vector<8x8x8xf32>
    %21 = arith.subf %17, %20 : vector<8x8x8xf32>
    %22 = math.exp %21 : vector<8x8x8xf32>
    %cst_8 = arith.constant dense<0.000000e+00> : vector<8x8xf32>
    %23 = vector.multi_reduction <add>, %22, %cst_8 [2] : vector<8x8x8xf32> to vector<8x8xf32>
    %24 = vector.shape_cast %23 : vector<8x8xf32> to vector<8x8x1xf32>
    %25 = tpu.reciprocal %24 {approx = true} : vector<8x8x1xf32> -> vector<8x8x1xf32>
    %26 = vector.broadcast %25 : vector<8x8x1xf32> to vector<8x8x8xf32>
    %27 = arith.mulf %22, %26 : vector<8x8x8xf32>
    "tpu.trace_start"() <{level = 10 : i32, message = "bqk,bke->bqe"}> : () -> ()
    %cst_9 = arith.constant dense<0.000000e+00> : vector<8x8x128xf32>
    %28 = tpu.matmul %27, %14, %cst_9 {dimension_numbers = #tpu.dot_dimension_numbers<[2], [1], [1], [2], [0, 0, 0, 1, 1, 2], [0], [0]>} : vector<8x8x8xf32>, vector<8x8x128xf32>, vector<8x8x128xf32> -> vector<8x8x128xf32>
    "tpu.trace_stop"() : () -> ()
    %29 = tpu.transpose %28, [1, 0, 2] : vector<8x8x128xf32> -> vector<8x8x128xf32>
    %30 = vector.shape_cast %29 : vector<8x8x128xf32> to vector<64x128xf32>
    %c0_10 = arith.constant 0 : index
    %c0_11 = arith.constant 0 : index
    %31 = vector.load %arg3[%c0_10, %c0_11] : memref<128x128xf32, #tpu.memory_space<vmem>>, vector<128x128xf32>
    %cst_12 = arith.constant dense<0.000000e+00> : vector<64x128xf32>
    %32 = tpu.matmul %30, %31, %cst_12 {dimension_numbers = #tpu.dot_dimension_numbers<[1], [0], [0], [1], [0, 0, 1, 1], [], []>} : vector<64x128xf32>, vector<128x128xf32>, vector<64x128xf32> -> vector<64x128xf32>
    %c0_13 = arith.constant 0 : index
    %c0_14 = arith.constant 0 : index
    %33 = vector.load %arg4[%c0_13, %c0_14] : memref<1x128xf32, #tpu.memory_space<vmem>>, vector<1x128xf32>
    %34 = vector.broadcast %33 : vector<1x128xf32> to vector<64x128xf32>
    %35 = arith.addf %32, %34 : vector<64x128xf32>
    %c0_15 = arith.constant 0 : index
    %c0_16 = arith.constant 0 : index
    %36 = vector.load %arg5[%c0_15, %c0_16] : memref<64x128xf32, #tpu.memory_space<vmem>>, vector<64x128xf32>
    tpu.vector_store %arg5[%c0_15, %c0_16], %35 {strides = array<i32>} : memref<64x128xf32, #tpu.memory_space<vmem>>, vector<64x128xf32>,
    return
  }
}

module attributes {stable_mosaic.version = 11 : i64} {
  func.func @_head_loss_kernel(%arg0: memref<64x64xf32, #tpu.memory_space<vmem>>, %arg1: memref<64x16xf32, #tpu.memory_space<vmem>>, %arg2: memref<64x64xf32, #tpu.memory_space<vmem>>, %arg3: memref<1x64xf32, #tpu.memory_space<vmem>>, %arg4: memref<64x32xf32, #tpu.memory_space<vmem>>, %arg5: memref<1x32xf32, #tpu.memory_space<vmem>>, %arg6: memref<32x64xf32, #tpu.memory_space<vmem>>, %arg7: memref<1x64xf32, #tpu.memory_space<vmem>>, %arg8: memref<64x128xf32, #tpu.memory_space<vmem>>, %arg9: memref<1x128xf32, #tpu.memory_space<vmem>>, %arg10: memref<64x128xf32, #tpu.memory_space<vmem>>, %arg11: memref<1x1xf32, #tpu.memory_space<vmem>>) attributes {dimension_semantics = [], scalar_prefetch = 0 : i64, scratch_operands = 0 : i64, tpu.core_type = #tpu.core_type<tc>} {
    %c0 = arith.constant 0 : index
    %c0_0 = arith.constant 0 : index
    %0 = vector.load %arg0[%c0, %c0_0] : memref<64x64xf32, #tpu.memory_space<vmem>>, vector<64x64xf32>
    %c0_1 = arith.constant 0 : index
    %c0_2 = arith.constant 0 : index
    %1 = vector.load %arg2[%c0_1, %c0_2] : memref<64x64xf32, #tpu.memory_space<vmem>>, vector<64x64xf32>
    %cst = arith.constant dense<0.000000e+00> : vector<64x64xf32>
    %2 = tpu.matmul %0, %1, %cst {dimension_numbers = #tpu.dot_dimension_numbers<[1], [0], [0], [1], [0, 0, 1, 1], [], []>} : vector<64x64xf32>, vector<64x64xf32>, vector<64x64xf32> -> vector<64x64xf32>
    %c0_3 = arith.constant 0 : index
    %c0_4 = arith.constant 0 : index
    %3 = vector.load %arg3[%c0_3, %c0_4] : memref<1x64xf32, #tpu.memory_space<vmem>>, vector<1x64xf32>
    %4 = vector.broadcast %3 : vector<1x64xf32> to vector<64x64xf32>
    %5 = arith.addf %2, %4 : vector<64x64xf32>
    %c0_5 = arith.constant 0 : index
    %c0_6 = arith.constant 0 : index
    %6 = vector.load %arg4[%c0_5, %c0_6] : memref<64x32xf32, #tpu.memory_space<vmem>>, vector<64x32xf32>
    %cst_7 = arith.constant dense<0.000000e+00> : vector<64x32xf32>
    %7 = tpu.matmul %5, %6, %cst_7 {dimension_numbers = #tpu.dot_dimension_numbers<[1], [0], [0], [1], [0, 0, 1, 1], [], []>} : vector<64x64xf32>, vector<64x32xf32>, vector<64x32xf32> -> vector<64x32xf32>
    %c0_8 = arith.constant 0 : index
    %c0_9 = arith.constant 0 : index
    %8 = vector.load %arg5[%c0_8, %c0_9] : memref<1x32xf32, #tpu.memory_space<vmem>>, vector<1x32xf32>
    %9 = vector.broadcast %8 : vector<1x32xf32> to vector<64x32xf32>
    %10 = arith.addf %7, %9 : vector<64x32xf32>
    %c0_10 = arith.constant 0 : index
    %c0_11 = arith.constant 0 : index
    %11 = vector.load %arg6[%c0_10, %c0_11] : memref<32x64xf32, #tpu.memory_space<vmem>>, vector<32x64xf32>
    %cst_12 = arith.constant dense<0.000000e+00> : vector<64x64xf32>
    %12 = tpu.matmul %10, %11, %cst_12 {dimension_numbers = #tpu.dot_dimension_numbers<[1], [0], [0], [1], [0, 0, 1, 1], [], []>} : vector<64x32xf32>, vector<32x64xf32>, vector<64x64xf32> -> vector<64x64xf32>
    %c0_13 = arith.constant 0 : index
    %c0_14 = arith.constant 0 : index
    %13 = vector.load %arg7[%c0_13, %c0_14] : memref<1x64xf32, #tpu.memory_space<vmem>>, vector<1x64xf32>
    %14 = vector.broadcast %13 : vector<1x64xf32> to vector<64x64xf32>
    %15 = arith.addf %12, %14 : vector<64x64xf32>
    %cst_15 = arith.constant 0.000000e+00 : f32
    %16 = vector.broadcast %cst_15 : f32 to vector<64x64xf32>
    %17 = arith.maximumf %15, %16 : vector<64x64xf32>
    %c0_16 = arith.constant 0 : index
    %c0_17 = arith.constant 0 : index
    %18 = vector.load %arg8[%c0_16, %c0_17] : memref<64x128xf32, #tpu.memory_space<vmem>>, vector<64x128xf32>
    %cst_18 = arith.constant dense<0.000000e+00> : vector<64x128xf32>
    %19 = tpu.matmul %17, %18, %cst_18 {dimension_numbers = #tpu.dot_dimension_numbers<[1], [0], [0], [1], [0, 0, 1, 1], [], []>} : vector<64x64xf32>, vector<64x128xf32>, vector<64x128xf32> -> vector<64x128xf32>
    %c0_19 = arith.constant 0 : index
    %c0_20 = arith.constant 0 : index
    %20 = vector.load %arg9[%c0_19, %c0_20] : memref<1x128xf32, #tpu.memory_space<vmem>>, vector<1x128xf32>
    %21 = vector.broadcast %20 : vector<1x128xf32> to vector<64x128xf32>
    %22 = arith.addf %19, %21 : vector<64x128xf32>
    %c0_21 = arith.constant 0 : index
    %c0_22 = arith.constant 0 : index
    %23 = vector.load %arg10[%c0_21, %c0_22] : memref<64x128xf32, #tpu.memory_space<vmem>>, vector<64x128xf32>
    tpu.vector_store %arg10[%c0_21, %c0_22], %22 {strides = array<i32>} : memref<64x128xf32, #tpu.memory_space<vmem>>, vector<64x128xf32>,
    %24 = vector.extract_strided_slice %22 {offsets = [0, 0], sizes = [64, 16], strides = [1, 1]} : vector<64x128xf32> to vector<64x16xf32>
    %c0_23 = arith.constant 0 : index
    %c0_24 = arith.constant 0 : index
    %25 = vector.load %arg1[%c0_23, %c0_24] : memref<64x16xf32, #tpu.memory_space<vmem>>, vector<64x16xf32>
    %cst_25 = arith.constant -1.000000e+02 : f32
    %26 = vector.broadcast %cst_25 : f32 to vector<64x16xf32>
    %27 = arith.cmpf one, %25, %26 : vector<64x16xf32>
    %28 = arith.extui %27 : vector<64x16xi1> to vector<64x16xi32>
    %29 = arith.sitofp %28 : vector<64x16xi32> to vector<64x16xf32>
    %30 = math.exp %24 : vector<64x16xf32>
    %31 = arith.mulf %25, %24 : vector<64x16xf32>
    %32 = arith.subf %30, %31 : vector<64x16xf32>
    %33 = arith.mulf %32, %29 : vector<64x16xf32>
    %cst_26 = arith.constant dense<0.000000e+00> : vector<64xf32>
    %34 = vector.multi_reduction <add>, %33, %cst_26 [1] : vector<64x16xf32> to vector<64xf32>
    %35 = vector.shape_cast %34 : vector<64xf32> to vector<64x1xf32>
    %cst_27 = arith.constant dense<0.000000e+00> : vector<1xf32>
    %36 = vector.multi_reduction <add>, %35, %cst_27 [0] : vector<64x1xf32> to vector<1xf32>
    %37 = vector.shape_cast %36 : vector<1xf32> to vector<1x1xf32>
    %cst_28 = arith.constant dense<0.000000e+00> : vector<64xf32>
    %38 = vector.multi_reduction <add>, %29, %cst_28 [1] : vector<64x16xf32> to vector<64xf32>
    %39 = vector.shape_cast %38 : vector<64xf32> to vector<64x1xf32>
    %cst_29 = arith.constant dense<0.000000e+00> : vector<1xf32>
    %40 = vector.multi_reduction <add>, %39, %cst_29 [0] : vector<64x1xf32> to vector<1xf32>
    %41 = vector.shape_cast %40 : vector<1xf32> to vector<1x1xf32>
    %cst_30 = arith.constant 1.000000e+00 : f32
    %42 = vector.broadcast %cst_30 : f32 to vector<1x1xf32>
    %43 = arith.maximumf %41, %42 : vector<1x1xf32>
    %44 = arith.divf %37, %43 : vector<1x1xf32>
    %c0_31 = arith.constant 0 : index
    %c0_32 = arith.constant 0 : index
    %45 = vector.load %arg11[%c0_31, %c0_32] : memref<1x1xf32, #tpu.memory_space<vmem>>, vector<1x1xf32>
    tpu.vector_store %arg11[%c0_31, %c0_32], %44 {strides = array<i32>} : memref<1x1xf32, #tpu.memory_space<vmem>>, vector<1x1xf32>,
    return
  }
}

</mosaic_0001>

<llo_original>
// kernel: lfads_teacher_forward.8
$region0: #{lfads_teacher_forward.8}
  #allocation0 [shape = 'u32[]', space=smem, size = 0x4, offset = 0x4, fixed_abs, tag = 'smem constant byte address 0x4 - core index']
  #allocation1 [shape = 'u32[72,128]{1,0:T(1,128)}', space=vmem, size = 0x9000, scoped, tag = 'internal scratch']
  #allocation2 [shape = 'f32[64,192]{1,0:T(8,128)}', space=vmem, size = 0x10000, scoped, tag = 'scratch operand']
  #allocation3 [shape = 'f32[8,64]{1,0:T(8,128)}', space=vmem, size = 0x1000, scoped, tag = 'scratch operand']
  #allocation4 [shape = 'f32[8,64]{1,0:T(8,128)}', space=vmem, size = 0x1000, scoped, tag = 'scratch operand']
  %s0 = inlined_call_operand.vmem [shape: f32[64,64], index: 0, kind: input, shape index: {}]
  %s1 = inlined_call_operand.vmem [shape: f32[64,192], index: 1, kind: input, shape index: {}]
  %s2 = inlined_call_operand.vmem [shape: f32[1,192], index: 2, kind: input, shape index: {}]
  %s3 = inlined_call_operand.hbm [shape: f32[64,192], index: 3, kind: input, shape index: {}]
  %s4 = inlined_call_operand.vmem [shape: f32[1,64], index: 4, kind: input, shape index: {}]
  %s5 = inlined_call_operand.hbm [shape: f32[64,192], index: 5, kind: input, shape index: {}]
  %s6 = inlined_call_operand.vmem [shape: f32[1,192], index: 6, kind: input, shape index: {}]
  %s7 = inlined_call_operand.hbm [shape: f32[64,192], index: 7, kind: input, shape index: {}]
  %s8 = inlined_call_operand.vmem [shape: f32[1,64], index: 8, kind: input, shape index: {}]
  %s9 = inlined_call_operand.vmem [shape: f32[64,64], index: 9, kind: output, shape index: {}]
  %s10 = sld [smem:[#allocation0]]
  $region65: #{lfads_teacher_forward.8} parent=0
    _
  %s12 = ssub.s32 1, %s10
  %s13 = scalar_select 0, %s12, %s10
  $region1: #{lfads_teacher_forward.8} parent=0
    #allocation5 [shape = 'u8[65536]{0}', space=vmem, size = 0x10000, scoped, tag = 'input window, operand 3, single buffered']
    #allocation6 [shape = 's32[1]{0}', space=sflag, size = 0x4, scoped, tag = 'scoped memory for lfads_teacher_forward.8']
    #allocation7 [shape = 'u8[65536]{0}', space=vmem, size = 0x10000, scoped, tag = 'input window, operand 5, single buffered']
    #allocation8 [shape = 's32[1]{0}', space=sflag, size = 0x4, scoped, tag = 'scoped memory for lfads_teacher_forward.8']
    #allocation9 [shape = 'u8[65536]{0}', space=vmem, size = 0x10000, scoped, tag = 'input window, operand 7, single buffered']
    %14 = vsyncpa [#allocation6], 0
    %15 = vsyncpa [#allocation8], 0
    // Predicated region
    $region2: #{lfads_teacher_forward.8} parent=1 // pred_check
      _
    $region3: #{lfads_teacher_forward.8} parent=1 // pred_check_branch
      %17 = sbr.rel (0) target = $region5
    $region4: #{lfads_teacher_forward.8} parent=1 // pred_region
      _
    $region5: #{lfads_teacher_forward.8} parent=1 // pred_fallthru
      _
    // Predicated region
    $region6: #{lfads_teacher_forward.8} parent=1 // pred_check
      _
    $region7: #{lfads_teacher_forward.8} parent=1 // pred_check_branch
      %19 = sbr.rel (0) target = $region9
    $region8: #{lfads_teacher_forward.8} parent=1 // pred_region
      _
    $region9: #{lfads_teacher_forward.8} parent=1 // pred_fallthru
      _
    // Predicated region
    $region10: #{lfads_teacher_forward.8} parent=1 // pred_check
      _
    $region11: #{lfads_teacher_forward.8} parent=1 // pred_check_branch
      %21 = sbr.rel (0) target = $region13
    $region12: #{lfads_teacher_forward.8} parent=1 // pred_region
      _
    $region13: #{lfads_teacher_forward.8} parent=1 // pred_fallthru
      _
    // Predicated region
    $region14: #{lfads_teacher_forward.8} parent=1 // pred_check
      _
    $region15: #{lfads_teacher_forward.8} parent=1 // pred_check_branch
      %23 = sbr.rel (0) target = $region17
    $region16: #{lfads_teacher_forward.8} parent=1 // pred_region
      %25 = vsyncadd [#allocation6], 0
      %s26 = sshll.u32 %s3, 4
      %s27 = int_to_ptr.hbm [resolvable:$true] %s26
      %s28 = sshll.u32 [#allocation5], 4
      %s29 = int_to_ptr.vmem [resolvable:$true] %s28
      %34 = dma.hbm_to_vmem [thread:$0]  %s27, 2048, %s29, [#allocation6], 256, 256, 16
    $region17: #{lfads_teacher_forward.8} parent=1 // pred_fallthru
      _
    // Predicated region
    $region18: #{lfads_teacher_forward.8} parent=1 // pred_check
      _
    $region19: #{lfads_teacher_forward.8} parent=1 // pred_check_branch
      %36 = sbr.rel (0) target = $region21
    $region20: #{lfads_teacher_forward.8} parent=1 // pred_region
      _
    $region21: #{lfads_teacher_forward.8} parent=1 // pred_fallthru
      _
    // Predicated region
    $region22: #{lfads_teacher_forward.8} parent=1 // pred_check
      _
    $region23: #{lfads_teacher_forward.8} parent=1 // pred_check_branch
      %38 = sbr.rel (0) target = $region25
    $region24: #{lfads_teacher_forward.8} parent=1 // pred_region
      %40 = vsyncadd [#allocation8], 0
      %s41 = sshll.u32 %s5, 4
      %s42 = int_to_ptr.hbm [resolvable:$true] %s41
      %s43 = sshll.u32 [#allocation7], 4
      %s44 = int_to_ptr.vmem [resolvable:$true] %s43
      %49 = dma.hbm_to_vmem [thread:$0]  %s42, 2048, %s44, [#allocation8], 256, 256, 16
    $region25: #{lfads_teacher_forward.8} parent=1 // pred_fallthru
      _
    // Predicated region
    $region26: #{lfads_teacher_forward.8} parent=1 // pred_check
      _
    $region27: #{lfads_teacher_forward.8} parent=1 // pred_check_branch
      %51 = sbr.rel (0) target = $region29
    $region28: #{lfads_teacher_forward.8} parent=1 // pred_region
      _
    $region29: #{lfads_teacher_forward.8} parent=1 // pred_fallthru
      _
    // Predicated region
    $region30: #{lfads_teacher_forward.8} parent=1 // pred_check
      _
    $region31: #{lfads_teacher_forward.8} parent=1 // pred_check_branch
      %53 = sbr.rel (0) target = $region33
    $region32: #{lfads_teacher_forward.8} parent=1 // pred_region
      %55 = vsyncadd [#allocation8], 0
      %s56 = sshll.u32 %s7, 4
      %s57 = int_to_ptr.hbm [resolvable:$true] %s56
      %s58 = sshll.u32 [#allocation9], 4
      %s59 = int_to_ptr.vmem [resolvable:$true] %s58
      %64 = dma.hbm_to_vmem [thread:$0]  %s57, 2048, %s59, [#allocation8], 256, 256, 16
    $region33: #{lfads_teacher_forward.8} parent=1 // pred_fallthru
      _
    // Predicated region
    $region34: #{lfads_teacher_forward.8} parent=1 // pred_check
      _
    $region35: #{lfads_teacher_forward.8} parent=1 // pred_check_branch
      %66 = sbr.rel (0) target = $region37
    $region36: #{lfads_teacher_forward.8} parent=1 // pred_region
      _
    $region37: #{lfads_teacher_forward.8} parent=1 // pred_fallthru
      _
    // Predicated region
    $region38: #{lfads_teacher_forward.8} parent=1 // pred_check
      _
    $region39: #{lfads_teacher_forward.8} parent=1 // pred_check_branch
      %68 = sbr.rel (0) target = $region41
    $region40: #{lfads_teacher_forward.8} parent=1 // pred_region
      %70 = dma.done [#allocation6], 2048
    $region41: #{lfads_teacher_forward.8} parent=1 // pred_fallthru
      _
    // Predicated region
    $region42: #{lfads_teacher_forward.8} parent=1 // pred_check
      _
    $region43: #{lfads_teacher_forward.8} parent=1 // pred_check_branch
      %72 = sbr.rel (0) target = $region45
    $region44: #{lfads_teacher_forward.8} parent=1 // pred_region
      %74 = dma.done [#allocation8], 2048
    $region45: #{lfads_teacher_forward.8} parent=1 // pred_fallthru
      _
    // Predicated region
    $region46: #{lfads_teacher_forward.8} parent=1 // pred_check
      _
    $region47: #{lfads_teacher_forward.8} parent=1 // pred_check_branch
      %76 = sbr.rel (0) target = $region49
    $region48: #{lfads_teacher_forward.8} parent=1 // pred_region
      %78 = dma.done [#allocation8], 2048
    $region49: #{lfads_teacher_forward.8} parent=1 // pred_fallthru
      _
    %v79 = vld [vmem:[%s0] sm:$0xff]
    %v80 = vld [vmem:[%s0 + $0x8] sm:$0xff]
    %v81 = vld [vmem:[%s0 + $0x10] sm:$0xff]
    %v82 = vld [vmem:[%s0 + $0x18] sm:$0xff]
    %v83 = vld [vmem:[%s0 + $0x20] sm:$0xff]
    %v84 = vld [vmem:[%s0 + $0x28] sm:$0xff]
    %v85 = vld [vmem:[%s0 + $0x30] sm:$0xff]
    %v86 = vld [vmem:[%s0 + $0x38] sm:$0xff]
    %v87 = vld [vmem:[%s1] sm:$0xff]
    %v88 = vld [vmem:[%s1 + $0x8] sm:$0xff]
    %v89 = vld [vmem:[%s1 + $0x10] sm:$0xff]
    %v90 = vld [vmem:[%s1 + $0x18] sm:$0xff]
    %v91 = vld [vmem:[%s1 + $0x20] sm:$0xff]
    %v92 = vld [vmem:[%s1 + $0x28] sm:$0xff]
    %v93 = vld [vmem:[%s1 + $0x30] sm:$0xff]
    %v94 = vld [vmem:[%s1 + $0x38] sm:$0xff]
    %v95 = vld [vmem:[%s1 + $0x40] sm:$0xff]
    %v96 = vld [vmem:[%s1 + $0x48] sm:$0xff]
    %v97 = vld [vmem:[%s1 + $0x50] sm:$0xff]
    %v98 = vld [vmem:[%s1 + $0x58] sm:$0xff]
    %v99 = vld [vmem:[%s1 + $0x60] sm:$0xff]
    %v100 = vld [vmem:[%s1 + $0x68] sm:$0xff]
    %v101 = vld [vmem:[%s1 + $0x70] sm:$0xff]
    %v102 = vld [vmem:[%s1 + $0x78] sm:$0xff]
    %v103 = vld [vmem:[%s2] sm:$0x3]
    %v105 = vperm.slane %v103, 0
    %v106 = vperm.slane %v103, 1
    %vm109 = vcmask 523264
    %v111 = vsel %vm109, %v79, 0
    %v114 = vsel %vm109, %v80, 0
    %v117 = vsel %vm109, %v81, 0
    %v120 = vsel %vm109, %v82, 0
    %v123 = vsel %vm109, %v83, 0
    %v126 = vsel %vm109, %v84, 0
    %v129 = vsel %vm109, %v85, 0
    %v132 = vsel %vm109, %v86, 0
    %134 = vmatpush.msra.mxu0 0.0
    %135 = vmatpush.msra.mxu0 0.0
    %136 = vmatpush.msra.mxu0 0.0
    %137 = vmatpush.msra.mxu0 0.0
    %138 = vmatpush.msra.mxu0 0.0
    %139 = vmatpush.msra.mxu0 0.0
    %140 = vmatpush.msra.mxu0 0.0
    %141 = vmatpush.msra.mxu0 0.0
    %142 = vmatpush.msra.mxu0 %v101
    %143 = vmatpush.msra.mxu0 %v99
    %144 = vmatpush.msra.mxu0 %v97
    %145 = vmatpush.msra.mxu0 %v95
    %146 = vmatpush.msra.mxu0 %v93
    %147 = vmatpush.msra.mxu0 %v91
    %148 = vmatpush.msra.mxu0 %v89
    %149 = vmatpush.msra.mxu0 %v87
    %150 = vmatmul.f32.gmra.mxu0 %v111
    %v151 = vpop.f32.mrf.mxu0
    %v152 = vadd.f32 %v105, %v151
    %153 = vmatmul.f32.gmra.mxu0 %v114
    %v154 = vpop.f32.mrf.mxu0
    %v155 = vadd.f32 %v105, %v154
    %156 = vmatmul.f32.gmra.mxu0 %v117
    %v157 = vpop.f32.mrf.mxu0
    %v158 = vadd.f32 %v105, %v157
    %159 = vmatmul.f32.gmra.mxu0 %v120
    %v160 = vpop.f32.mrf.mxu0
    %v161 = vadd.f32 %v105, %v160
    %162 = vmatmul.f32.gmra.mxu0 %v123
    %v163 = vpop.f32.mrf.mxu0
    %v164 = vadd.f32 %v105, %v163
    %165 = vmatmul.f32.gmra.mxu0 %v126
    %v166 = vpop.f32.mrf.mxu0
    %v167 = vadd.f32 %v105, %v166
    %168 = vmatmul.f32.gmra.mxu0 %v129
    %v169 = vpop.f32.mrf.mxu0
    %v170 = vadd.f32 %v105, %v169
    %171 = vmatmul.f32.gmra.mxu0 %v132
    %v172 = vpop.f32.mrf.mxu0
    %v173 = vadd.f32 %v105, %v172
    %174 = vdwg.mxu0
    %175 = vmatpush.msra.mxu0 0.0
    %176 = vmatpush.msra.mxu0 0.0
    %177 = vmatpush.msra.mxu0 0.0
    %178 = vmatpush.msra.mxu0 0.0
    %179 = vmatpush.msra.mxu0 0.0
    %180 = vmatpush.msra.mxu0 0.0
    %181 = vmatpush.msra.mxu0 0.0
    %182 = vmatpush.msra.mxu0 0.0
    %183 = vmatpush.msra.mxu0 %v102
    %184 = vmatpush.msra.mxu0 %v100
    %185 = vmatpush.msra.mxu0 %v98
    %186 = vmatpush.msra.mxu0 %v96
    %187 = vmatpush.msra.mxu0 %v94
    %188 = vmatpush.msra.mxu0 %v92
    %189 = vmatpush.msra.mxu0 %v90
    %190 = vmatpush.msra.mxu0 %v88
    %191 = vmatmul.f32.gmra.mxu0 %v111
    %v192 = vpop.f32.mrf.mxu0
    %v193 = vadd.f32 %v106, %v192
    %194 = vmatmul.f32.gmra.mxu0 %v114
    %v195 = vpop.f32.mrf.mxu0
    %v196 = vadd.f32 %v106, %v195
    %197 = vmatmul.f32.gmra.mxu0 %v117
    %v198 = vpop.f32.mrf.mxu0
    %v199 = vadd.f32 %v106, %v198
    %200 = vmatmul.f32.gmra.mxu0 %v120
    %v201 = vpop.f32.mrf.mxu0
    %v202 = vadd.f32 %v106, %v201
    %203 = vmatmul.f32.gmra.mxu0 %v123
    %v204 = vpop.f32.mrf.mxu0
    %v205 = vadd.f32 %v106, %v204
    %206 = vmatmul.f32.gmra.mxu0 %v126
    %v207 = vpop.f32.mrf.mxu0
    %v208 = vadd.f32 %v106, %v207
    %209 = vmatmul.f32.gmra.mxu0 %v129
    %v210 = vpop.f32.mrf.mxu0
    %v211 = vadd.f32 %v106, %v210
    %212 = vmatmul.f32.gmra.mxu0 %v132
    %v213 = vpop.f32.mrf.mxu0
    %v214 = vadd.f32 %v106, %v213
    %215 = vdwg.mxu0
    %216 = vst [vmem:[#allocation2] sm:$0xff] %v152
    %217 = vst.msk [vmem:[#allocation2 + $0x8] sm:$0xff] %vm109, %v193
    %218 = vst [vmem:[#allocation2 + $0x10] sm:$0xff] %v155
    %219 = vst.msk [vmem:[#allocation2 + $0x18] sm:$0xff] %vm109, %v196
    %220 = vst [vmem:[#allocation2 + $0x20] sm:$0xff] %v158
    %221 = vst.msk [vmem:[#allocation2 + $0x28] sm:$0xff] %vm109, %v199
    %222 = vst [vmem:[#allocation2 + $0x30] sm:$0xff] %v161
    %223 = vst.msk [vmem:[#allocation2 + $0x38] sm:$0xff] %vm109, %v202
    %224 = vst [vmem:[#allocation2 + $0x40] sm:$0xff] %v164
    %225 = vst.msk [vmem:[#allocation2 + $0x48] sm:$0xff] %vm109, %v205
    %226 = vst [vmem:[#allocation2 + $0x50] sm:$0xff] %v167
    %227 = vst.msk [vmem:[#allocation2 + $0x58] sm:$0xff] %vm109, %v208
    %228 = vst [vmem:[#allocation2 + $0x60] sm:$0xff] %v170
    %229 = vst.msk [vmem:[#allocation2 + $0x68] sm:$0xff] %vm109, %v211
    %230 = vst [vmem:[#allocation2 + $0x70] sm:$0xff] %v173
    %231 = vst.msk [vmem:[#allocation2 + $0x78] sm:$0xff] %vm109, %v214
    %v232 = vld [vmem:[%s4] sm:$0x1]
    %v234 = vperm.slane %v232, 0
    %v236 = vld [vmem:[%s8] sm:$0x1]
    %v238 = vperm.slane %v236, 0
    %v240 = vld [vmem:[%s6] sm:$0x3]
    %v242 = vperm.slane %v240, 0
    %v243 = vperm.slane %v240, 1
    %246 = vst.msk [vmem:[#allocation3] sm:$0xff] %vm109, 0.0
    %247 = vst.msk [vmem:[#allocation4] sm:$0xff] %vm109, 0.0
    loop: start=0, step=1, limit=8
    $region50: #{lfads_teacher_forward.8} parent=1 // loop_pre_header
      _
    $region51: #{lfads_teacher_forward.8} parent=1 // loop_header
      %s249 = sphi 0, %s253
      %p250 = scmp.ge.s32.totalorder %s249, 8
    $region52: #{lfads_teacher_forward.8} parent=1 // loop_header_branch
      %252 = sbr.rel (%p250) target = $region56
    $region53: #{lfads_teacher_forward.8} parent=1 // loop_body
      %s254 = smul.u32 %s249, 8
      %s255 = sshra.s32 %s254, 3
      %s256 = sand.u32 %s254, 7
      %s257 = smul.u32 %s255, 2
      %s258 = smul.addr %s257, 8
      %s259 = scalar_lea.vmem [#allocation2], %s258
      %v260 = vld [vmem:[%s259] sm:$0xff]
      %v261 = vld [vmem:[%s259 + $0x8] sm:$0xff]
      %v262 = vld [vmem:[#allocation3] sm:$0xff]
      %v263 = vld [vmem:[#allocation5] sm:$0xff]
      %v264 = vld [vmem:[#allocation5 + $0x8] sm:$0xff]
      %v265 = vld [vmem:[#allocation5 + $0x10] sm:$0xff]
      %v266 = vld [vmem:[#allocation5 + $0x18] sm:$0xff]
      %v267 = vld [vmem:[#allocation5 + $0x20] sm:$0xff]
      %v268 = vld [vmem:[#allocation5 + $0x28] sm:$0xff]
      %v269 = vld [vmem:[#allocation5 + $0x30] sm:$0xff]
      %v270 = vld [vmem:[#allocation5 + $0x38] sm:$0xff]
      %v271 = vld [vmem:[#allocation5 + $0x40] sm:$0xff]
      %v272 = vld [vmem:[#allocation5 + $0x48] sm:$0xff]
      %v273 = vld [vmem:[#allocation5 + $0x50] sm:$0xff]
      %v274 = vld [vmem:[#allocation5 + $0x58] sm:$0xff]
      %v275 = vld [vmem:[#allocation5 + $0x60] sm:$0xff]
      %v276 = vld [vmem:[#allocation5 + $0x68] sm:$0xff]
      %v277 = vld [vmem:[#allocation5 + $0x70] sm:$0xff]
      %v278 = vld [vmem:[#allocation5 + $0x78] sm:$0xff]
      %v280 = vsel %vm109, %v262, 0
      %282 = vmatpush.msra.mxu0 0.0
      %283 = vmatpush.msra.mxu0 0.0
      %284 = vmatpush.msra.mxu0 0.0
      %285 = vmatpush.msra.mxu0 0.0
      %286 = vmatpush.msra.mxu0 0.0
      %287 = vmatpush.msra.mxu0 0.0
      %288 = vmatpush.msra.mxu0 0.0
      %289 = vmatpush.msra.mxu0 0.0
      %290 = vmatpush.msra.mxu0 %v277
      %291 = vmatpush.msra.mxu0 %v275
      %292 = vmatpush.msra.mxu0 %v273
      %293 = vmatpush.msra.mxu0 %v271
      %294 = vmatpush.msra.mxu0 %v269
      %295 = vmatpush.msra.mxu0 %v267
      %296 = vmatpush.msra.mxu0 %v265
      %297 = vmatpush.msra.mxu0 %v263
      %298 = vmatmul.f32.gmra.mxu0 %v280
      %v299 = vpop.f32.mrf.mxu0
      %v300 = vadd.f32 0.0, %v299
      %301 = vdwg.mxu0
      %302 = vmatpush.msra.mxu0 0.0
      %303 = vmatpush.msra.mxu0 0.0
      %304 = vmatpush.msra.mxu0 0.0
      %305 = vmatpush.msra.mxu0 0.0
      %306 = vmatpush.msra.mxu0 0.0
      %307 = vmatpush.msra.mxu0 0.0
      %308 = vmatpush.msra.mxu0 0.0
      %309 = vmatpush.msra.mxu0 0.0
      %310 = vmatpush.msra.mxu0 %v278
      %311 = vmatpush.msra.mxu0 %v276
      %312 = vmatpush.msra.mxu0 %v274
      %313 = vmatpush.msra.mxu0 %v272
      %314 = vmatpush.msra.mxu0 %v270
      %315 = vmatpush.msra.mxu0 %v268
      %316 = vmatpush.msra.mxu0 %v266
      %317 = vmatpush.msra.mxu0 %v264
      %318 = vmatmul.f32.gmra.mxu0 %v280
      %v319 = vpop.f32.mrf.mxu0
      %v320 = vadd.f32 0.0, %v319
      %321 = vdwg.mxu0
      %v322 = vadd.f32 %v260, %v300
      %v323 = vxor.u32 %v322, 2147483648
      %v324 = vmul.f32 %v323, 1.442695
      %v325 = vpow.pop %v324
      %v326 = vadd.f32 %v325, 1.0
      %v327 = vrcp.pop %v326
      %v328 = vmul.f32 %v326, %v327
      %v329 = vsub.f32 1.0, %v328
      %v330 = vmul.f32 %v327, %v329
      %v331 = vadd.f32 %v327, %v330
      %vm332 = vweird.f32 %v326
      %vm333 = vweird.f32 %v327
      %vm334 = vmor %vm332, %vm333
      %v335 = vsel %vm334, %v327, %v331
      %v336 = vand.u32 2147483647, %v326
      %vm337 = vcmp.eq.f32.partialorder %v336, 8.507059e+37
      %v338 = vand.u32 %v326, 2147483648
      %v339 = vor.u32 1.1754944e-38, %v338
      %v340 = vsel %vm337, %v339, %v335
      %v341 = vmul.f32 1.0, %v340
      %v342 = vadd.f32 %v320, %v234
      %v343 = vmul.f32 %v341, %v342
      %v344 = vadd.f32 %v261, %v343
      %v345 = vtanh.pop %v344
      %v346 = vsub.f32 1.0, %v341
      %348 = vrot.lane.b32.xlu0 %v345, 64
      %v349 = vpop.permute.xlu0 %348
      %v351 = vmul.f32 %v346, %v349
      %352 = vrot.lane.b32.xlu0 %v262, 64
      %v353 = vpop.permute.xlu0 %352
      %v355 = vmul.f32 %v341, %v353
      %v356 = vadd.f32 %v351, %v355
      %v357 = vld [vmem:[#allocation7] sm:$0xff]
      %v358 = vld [vmem:[#allocation7 + $0x8] sm:$0xff]
      %v359 = vld [vmem:[#allocation7 + $0x10] sm:$0xff]
      %v360 = vld [vmem:[#allocation7 + $0x18] sm:$0xff]
      %v361 = vld [vmem:[#allocation7 + $0x20] sm:$0xff]
      %v362 = vld [vmem:[#allocation7 + $0x28] sm:$0xff]
      %v363 = vld [vmem:[#allocation7 + $0x30] sm:$0xff]
      %v364 = vld [vmem:[#allocation7 + $0x38] sm:$0xff]
      %v365 = vld [vmem:[#allocation7 + $0x40] sm:$0xff]
      %v366 = vld [vmem:[#allocation7 + $0x48] sm:$0xff]
      %v367 = vld [vmem:[#allocation7 + $0x50] sm:$0xff]
      %v368 = vld [vmem:[#allocation7 + $0x58] sm:$0xff]
      %v369 = vld [vmem:[#allocation7 + $0x60] sm:$0xff]
      %v370 = vld [vmem:[#allocation7 + $0x68] sm:$0xff]
      %v371 = vld [vmem:[#allocation7 + $0x70] sm:$0xff]
      %v372 = vld [vmem:[#allocation7 + $0x78] sm:$0xff]
      %374 = vrot.lane.b32.xlu0 %v356, 64
      %v375 = vpop.permute.xlu0 %374
      %v376 = vsel %vm109, %v375, 0
      %378 = vmatpush.msra.mxu0 0.0
      %379 = vmatpush.msra.mxu0 0.0
      %380 = vmatpush.msra.mxu0 0.0
      %381 = vmatpush.msra.mxu0 0.0
      %382 = vmatpush.msra.mxu0 0.0
      %383 = vmatpush.msra.mxu0 0.0
      %384 = vmatpush.msra.mxu0 0.0
      %385 = vmatpush.msra.mxu0 0.0
      %386 = vmatpush.msra.mxu0 %v371
      %387 = vmatpush.msra.mxu0 %v369
      %388 = vmatpush.msra.mxu0 %v367
      %389 = vmatpush.msra.mxu0 %v365
      %390 = vmatpush.msra.mxu0 %v363
      %391 = vmatpush.msra.mxu0 %v361
      %392 = vmatpush.msra.mxu0 %v359
      %393 = vmatpush.msra.mxu0 %v357
      %394 = vmatmul.f32.gmra.mxu0 %v376
      %v395 = vpop.f32.mrf.mxu0
      %v396 = vadd.f32 %v242, %v395
      %397 = vdwg.mxu0
      %398 = vmatpush.msra.mxu0 0.0
      %399 = vmatpush.msra.mxu0 0.0
      %400 = vmatpush.msra.mxu0 0.0
      %401 = vmatpush.msra.mxu0 0.0
      %402 = vmatpush.msra.mxu0 0.0
      %403 = vmatpush.msra.mxu0 0.0
      %404 = vmatpush.msra.mxu0 0.0
      %405 = vmatpush.msra.mxu0 0.0
      %406 = vmatpush.msra.mxu0 %v372
      %407 = vmatpush.msra.mxu0 %v370
      %408 = vmatpush.msra.mxu0 %v368
      %409 = vmatpush.msra.mxu0 %v366
      %410 = vmatpush.msra.mxu0 %v364
      %411 = vmatpush.msra.mxu0 %v362
      %412 = vmatpush.msra.mxu0 %v360
      %413 = vmatpush.msra.mxu0 %v358
      %414 = vmatmul.f32.gmra.mxu0 %v376
      %v415 = vpop.f32.mrf.mxu0
      %v416 = vadd.f32 %v243, %v415
      %417 = vdwg.mxu0
      %v418 = vld [vmem:[#allocation4] sm:$0xff]
      %v419 = vld [vmem:[#allocation9] sm:$0xff]
      %v420 = vld [vmem:[#allocation9 + $0x8] sm:$0xff]
      %v421 = vld [vmem:[#allocation9 + $0x10] sm:$0xff]
      %v422 = vld [vmem:[#allocation9 + $0x18] sm:$0xff]
      %v423 = vld [vmem:[#allocation9 + $0x20] sm:$0xff]
      %v424 = vld [vmem:[#allocation9 + $0x28] sm:$0xff]
      %v425 = vld [vmem:[#allocation9 + $0x30] sm:$0xff]
      %v426 = vld [vmem:[#allocation9 + $0x38] sm:$0xff]
      %v427 = vld [vmem:[#allocation9 + $0x40] sm:$0xff]
      %v428 = vld [vmem:[#allocation9 + $0x48] sm:$0xff]
      %v429 = vld [vmem:[#allocation9 + $0x50] sm:$0xff]
      %v430 = vld [vmem:[#allocation9 + $0x58] sm:$0xff]
      %v431 = vld [vmem:[#allocation9 + $0x60] sm:$0xff]
      %v432 = vld [vmem:[#allocation9 + $0x68] sm:$0xff]
      %v433 = vld [vmem:[#allocation9 + $0x70] sm:$0xff]
      %v434 = vld [vmem:[#allocation9 + $0x78] sm:$0xff]
      %v436 = vsel %vm109, %v418, 0
      %438 = vmatpush.msra.mxu0 0.0
      %439 = vmatpush.msra.mxu0 0.0
      %440 = vmatpush.msra.mxu0 0.0
      %441 = vmatpush.msra.mxu0 0.0
      %442 = vmatpush.msra.mxu0 0.0
      %443 = vmatpush.msra.mxu0 0.0
      %444 = vmatpush.msra.mxu0 0.0
      %445 = vmatpush.msra.mxu0 0.0
      %446 = vmatpush.msra.mxu0 %v433
      %447 = vmatpush.msra.mxu0 %v431
      %448 = vmatpush.msra.mxu0 %v429
      %449 = vmatpush.msra.mxu0 %v427
      %450 = vmatpush.msra.mxu0 %v425
      %451 = vmatpush.msra.mxu0 %v423
      %452 = vmatpush.msra.mxu0 %v421
      %453 = vmatpush.msra.mxu0 %v419
      %454 = vmatmul.f32.gmra.mxu0 %v436
      %v455 = vpop.f32.mrf.mxu0
      %v456 = vadd.f32 0.0, %v455
      %457 = vdwg.mxu0
      %458 = vmatpush.msra.mxu0 0.0
      %459 = vmatpush.msra.mxu0 0.0
      %460 = vmatpush.msra.mxu0 0.0
      %461 = vmatpush.msra.mxu0 0.0
      %462 = vmatpush.msra.mxu0 0.0
      %463 = vmatpush.msra.mxu0 0.0
      %464 = vmatpush.msra.mxu0 0.0
      %465 = vmatpush.msra.mxu0 0.0
      %466 = vmatpush.msra.mxu0 %v434
      %467 = vmatpush.msra.mxu0 %v432
      %468 = vmatpush.msra.mxu0 %v430
      %469 = vmatpush.msra.mxu0 %v428
      %470 = vmatpush.msra.mxu0 %v426
      %471 = vmatpush.msra.mxu0 %v424
      %472 = vmatpush.msra.mxu0 %v422
      %473 = vmatpush.msra.mxu0 %v420
      %474 = vmatmul.f32.gmra.mxu0 %v436
      %v475 = vpop.f32.mrf.mxu0
      %v476 = vadd.f32 0.0, %v475
      %477 = vdwg.mxu0
      %v478 = vadd.f32 %v396, %v456
      %v479 = vxor.u32 %v478, 2147483648
      %v480 = vmul.f32 %v479, 1.442695
      %v481 = vpow.pop %v480
      %v482 = vadd.f32 %v481, 1.0
      %v483 = vrcp.pop %v482
      %v484 = vmul.f32 %v482, %v483
      %v485 = vsub.f32 1.0, %v484
      %v486 = vmul.f32 %v483, %v485
      %v487 = vadd.f32 %v483, %v486
      %vm488 = vweird.f32 %v482
      %vm489 = vweird.f32 %v483
      %vm490 = vmor %vm488, %vm489
      %v491 = vsel %vm490, %v483, %v487
      %v492 = vand.u32 2147483647, %v482
      %vm493 = vcmp.eq.f32.partialorder %v492, 8.507059e+37
      %v494 = vand.u32 %v482, 2147483648
      %v495 = vor.u32 1.1754944e-38, %v494
      %v496 = vsel %vm493, %v495, %v491
      %v497 = vmul.f32 1.0, %v496
      %v498 = vadd.f32 %v476, %v238
      %v499 = vmul.f32 %v497, %v498
      %v500 = vadd.f32 %v416, %v499
      %v501 = vtanh.pop %v500
      %v502 = vsub.f32 1.0, %v497
      %504 = vrot.lane.b32.xlu0 %v501, 64
      %v505 = vpop.permute.xlu0 %504
      %v507 = vmul.f32 %v502, %v505
      %508 = vrot.lane.b32.xlu0 %v418, 64
      %v509 = vpop.permute.xlu0 %508
      %v511 = vmul.f32 %v497, %v509
      %v512 = vadd.f32 %v507, %v511
      %514 = vst.msk [vmem:[#allocation3] sm:$0xff] %vm109, %v375
      %516 = vrot.lane.b32.xlu0 %v512, 64
      %v517 = vpop.permute.xlu0 %516
      %519 = vst.msk [vmem:[#allocation4] sm:$0xff] %vm109, %v517
      %s520 = scalar_lea.vmem %s9, %s254
      %521 = vst.msk [vmem:[%s520] sm:$0xff] %vm109, %v517
    $region54: #{lfads_teacher_forward.8} parent=1 // loop_footer
      %s253 = sadd.s32 1, %s249
    $region55: #{lfads_teacher_forward.8} parent=1 // loop_footer_branch
      %248 = sbr.rel target = $region51
    $region56: #{lfads_teacher_forward.8} parent=1 // loop_exit
      _
    // Predicated region
    $region57: #{lfads_teacher_forward.8} parent=1 // pred_check
      _
    $region58: #{lfads_teacher_forward.8} parent=1 // pred_check_branch
      %523 = sbr.rel (0) target = $region60
    $region59: #{lfads_teacher_forward.8} parent=1 // pred_region
      _
    $region60: #{lfads_teacher_forward.8} parent=1 // pred_fallthru
      _
    // Predicated region
    $region61: #{lfads_teacher_forward.8} parent=1 // pred_check
      _
    $region62: #{lfads_teacher_forward.8} parent=1 // pred_check_branch
      %525 = sbr.rel (0) target = $region64
    $region63: #{lfads_teacher_forward.8} parent=1 // pred_region
      _
    $region64: #{lfads_teacher_forward.8} parent=1 // pred_fallthru
      _
    %526 = vsyncpa [#allocation6], 1
    %527 = vsyncpa [#allocation8], 1

// kernel: lfads_teacher_forward.5
$region0: #{lfads_teacher_forward.5}
  #allocation0 [shape = 'u32[]', space=smem, size = 0x4, offset = 0x4, fixed_abs, tag = 'smem constant byte address 0x4 - core index']
  #allocation1 [shape = 'u32[72,128]{1,0:T(1,128)}', space=vmem, size = 0x9000, scoped, tag = 'internal scratch']
  #allocation2 [shape = 'f32[64,384]{1,0:T(8,128)}', space=vmem, size = 0x18000, scoped, tag = 'scratch operand']
  #allocation3 [shape = 'f32[64,128]{1,0:T(8,128)}', space=vmem, size = 0x8000, scoped, tag = 'scratch operand']
  #allocation4 [shape = 'f32[8,128]{1,0:T(8,128)}', space=vmem, size = 0x1000, scoped, tag = 'scratch operand']
  #allocation5 [shape = 'f32[64,24]{1,0:T(8,128)}', space=vmem, size = 0x8000, scoped, tag = 'scratch operand']
  #allocation6 [shape = 'f32[64,8]{1,0:T(8,128)}', space=vmem, size = 0x8000, scoped, tag = 'scratch operand']
  #allocation7 [shape = 'f32[8,8]{1,0:T(8,128)}', space=vmem, size = 0x1000, scoped, tag = 'scratch operand']
  %s0 = inlined_call_operand.vmem [shape: f32[64,16], index: 0, kind: input, shape index: {}]
  %s1 = inlined_call_operand.vmem [shape: f32[64,4], index: 1, kind: input, shape index: {}]
  %s2 = inlined_call_operand.vmem [shape: f32[16,384], index: 2, kind: input, shape index: {}]
  %s3 = inlined_call_operand.vmem [shape: f32[1,384], index: 3, kind: input, shape index: {}]
  %s4 = inlined_call_operand.hbm [shape: f32[128,384], index: 4, kind: input, shape index: {}]
  %s5 = inlined_call_operand.vmem [shape: f32[1,128], index: 5, kind: input, shape index: {}]
  %s6 = inlined_call_operand.vmem [shape: f32[4,24], index: 6, kind: input, shape index: {}]
  %s7 = inlined_call_operand.vmem [shape: f32[1,24], index: 7, kind: input, shape index: {}]
  %s8 = inlined_call_operand.vmem [shape: f32[8,24], index: 8, kind: input, shape index: {}]
  %s9 = inlined_call_operand.vmem [shape: f32[1,8], index: 9, kind: input, shape index: {}]
  %s10 = inlined_call_operand.vmem [shape: f32[128,128], index: 10, kind: input, shape index: {}]
  %s11 = inlined_call_operand.vmem [shape: f32[8,128], index: 11, kind: input, shape index: {}]
  %s12 = inlined_call_operand.vmem [shape: f32[1,128], index: 12, kind: input, shape index: {}]
  %s13 = inlined_call_operand.vmem [shape: f32[64,128], index: 13, kind: output, shape index: {}]
  %s14 = sld [smem:[#allocation0]]
  $region87: #{lfads_teacher_forward.5} parent=0
    _
  %s16 = ssub.s32 1, %s14
  %s17 = scalar_select 0, %s16, %s14
  $region1: #{lfads_teacher_forward.5} parent=0
    #allocation8 [shape = 'u8[196608]{0}', space=vmem, size = 0x30000, scoped, tag = 'input window, operand 4, single buffered']
    #allocation9 [shape = 's32[1]{0}', space=sflag, size = 0x4, scoped, tag = 'scoped memory for lfads_teacher_forward.5']
    %18 = vsyncpa [#allocation9], 0
    // Predicated region
    $region2: #{lfads_teacher_forward.5} parent=1 // pred_check
      _
    $region3: #{lfads_teacher_forward.5} parent=1 // pred_check_branch
      %20 = sbr.rel (0) target = $region5
    $region4: #{lfads_teacher_forward.5} parent=1 // pred_region
      _
    $region5: #{lfads_teacher_forward.5} parent=1 // pred_fallthru
      _
    // Predicated region
    $region6: #{lfads_teacher_forward.5} parent=1 // pred_check
      _
    $region7: #{lfads_teacher_forward.5} parent=1 // pred_check_branch
      %22 = sbr.rel (0) target = $region9
    $region8: #{lfads_teacher_forward.5} parent=1 // pred_region
      _
    $region9: #{lfads_teacher_forward.5} parent=1 // pred_fallthru
      _
    // Predicated region
    $region10: #{lfads_teacher_forward.5} parent=1 // pred_check
      _
    $region11: #{lfads_teacher_forward.5} parent=1 // pred_check_branch
      %24 = sbr.rel (0) target = $region13
    $region12: #{lfads_teacher_forward.5} parent=1 // pred_region
      _
    $region13: #{lfads_teacher_forward.5} parent=1 // pred_fallthru
      _
    // Predicated region
    $region14: #{lfads_teacher_forward.5} parent=1 // pred_check
      _
    $region15: #{lfads_teacher_forward.5} parent=1 // pred_check_branch
      %26 = sbr.rel (0) target = $region17
    $region16: #{lfads_teacher_forward.5} parent=1 // pred_region
      _
    $region17: #{lfads_teacher_forward.5} parent=1 // pred_fallthru
      _
    // Predicated region
    $region18: #{lfads_teacher_forward.5} parent=1 // pred_check
      _
    $region19: #{lfads_teacher_forward.5} parent=1 // pred_check_branch
      %28 = sbr.rel (0) target = $region21
    $region20: #{lfads_teacher_forward.5} parent=1 // pred_region
      %30 = vsyncadd [#allocation9], 0
      %s31 = sshll.u32 %s4, 4
      %s32 = int_to_ptr.hbm [resolvable:$true] %s31
      %s33 = sshll.u32 [#allocation8], 4
      %s34 = int_to_ptr.vmem [resolvable:$true] %s33
      %39 = dma.hbm_to_vmem [thread:$0]  %s32, 6144, %s34, [#allocation9], 384, 384, 24
    $region21: #{lfads_teacher_forward.5} parent=1 // pred_fallthru
      _
    // Predicated region
    $region22: #{lfads_teacher_forward.5} parent=1 // pred_check
      _
    $region23: #{lfads_teacher_forward.5} parent=1 // pred_check_branch
      %41 = sbr.rel (0) target = $region25
    $region24: #{lfads_teacher_forward.5} parent=1 // pred_region
      _
    $region25: #{lfads_teacher_forward.5} parent=1 // pred_fallthru
      _
    // Predicated region
    $region26: #{lfads_teacher_forward.5} parent=1 // pred_check
      _
    $region27: #{lfads_teacher_forward.5} parent=1 // pred_check_branch
      %43 = sbr.rel (0) target = $region29
    $region28: #{lfads_teacher_forward.5} parent=1 // pred_region
      _
    $region29: #{lfads_teacher_forward.5} parent=1 // pred_fallthru
      _
    // Predicated region
    $region30: #{lfads_teacher_forward.5} parent=1 // pred_check
      _
    $region31: #{lfads_teacher_forward.5} parent=1 // pred_check_branch
      %45 = sbr.rel (0) target = $region33
    $region32: #{lfads_teacher_forward.5} parent=1 // pred_region
      _
    $region33: #{lfads_teacher_forward.5} parent=1 // pred_fallthru
      _
    // Predicated region
    $region34: #{lfads_teacher_forward.5} parent=1 // pred_check
      _
    $region35: #{lfads_teacher_forward.5} parent=1 // pred_check_branch
      %47 = sbr.rel (0) target = $region37
    $region36: #{lfads_teacher_forward.5} parent=1 // pred_region
      _
    $region37: #{lfads_teacher_forward.5} parent=1 // pred_fallthru
      _
    // Predicated region
    $region38: #{lfads_teacher_forward.5} parent=1 // pred_check
      _
    $region39: #{lfads_teacher_forward.5} parent=1 // pred_check_branch
      %49 = sbr.rel (0) target = $region41
    $region40: #{lfads_teacher_forward.5} parent=1 // pred_region
      _
    $region41: #{lfads_teacher_forward.5} parent=1 // pred_fallthru
      _
    // Predicated region
    $region42: #{lfads_teacher_forward.5} parent=1 // pred_check
      _
    $region43: #{lfads_teacher_forward.5} parent=1 // pred_check_branch
      %51 = sbr.rel (0) target = $region45
    $region44: #{lfads_teacher_forward.5} parent=1 // pred_region
      _
    $region45: #{lfads_teacher_forward.5} parent=1 // pred_fallthru
      _
    // Predicated region
    $region46: #{lfads_teacher_forward.5} parent=1 // pred_check
      _
    $region47: #{lfads_teacher_forward.5} parent=1 // pred_check_branch
      %53 = sbr.rel (0) target = $region49
    $region48: #{lfads_teacher_forward.5} parent=1 // pred_region
      _
    $region49: #{lfads_teacher_forward.5} parent=1 // pred_fallthru
      _
    // Predicated region
    $region50: #{lfads_teacher_forward.5} parent=1 // pred_check
      _
    $region51: #{lfads_teacher_forward.5} parent=1 // pred_check_branch
      %55 = sbr.rel (0) target = $region53
    $region52: #{lfads_teacher_forward.5} parent=1 // pred_region
      _
    $region53: #{lfads_teacher_forward.5} parent=1 // pred_fallthru
      _
    // Predicated region
    $region54: #{lfads_teacher_forward.5} parent=1 // pred_check
      _
    $region55: #{lfads_teacher_forward.5} parent=1 // pred_check_branch
      %57 = sbr.rel (0) target = $region57
    $region56: #{lfads_teacher_forward.5} parent=1 // pred_region
      %59 = dma.done [#allocation9], 6144
    $region57: #{lfads_teacher_forward.5} parent=1 // pred_fallthru
      _
    %v60 = vld [vmem:[%s0] sm:$0xff]
    %v61 = vld [vmem:[%s0 + $0x8] sm:$0xff]
    %v62 = vld [vmem:[%s0 + $0x10] sm:$0xff]
    %v63 = vld [vmem:[%s0 + $0x18] sm:$0xff]
    %v64 = vld [vmem:[%s0 + $0x20] sm:$0xff]
    %v65 = vld [vmem:[%s0 + $0x28] sm:$0xff]
    %v66 = vld [vmem:[%s0 + $0x30] sm:$0xff]
    %v67 = vld [vmem:[%s0 + $0x38] sm:$0xff]
    %v68 = vld [vmem:[%s2] sm:$0xff]
    %v69 = vld [vmem:[%s2 + $0x8] sm:$0xff]
    %v70 = vld [vmem:[%s2 + $0x10] sm:$0xff]
    %v71 = vld [vmem:[%s2 + $0x18] sm:$0xff]
    %v72 = vld [vmem:[%s2 + $0x20] sm:$0xff]
    %v73 = vld [vmem:[%s2 + $0x28] sm:$0xff]
    %v74 = vld [vmem:[%s3] sm:$0x7]
    %v76 = vperm.slane %v74, 0
    %v77 = vperm.slane %v74, 1
    %v78 = vperm.slane %v74, 2
    %vm82 = vcmask 130048
    %v84 = vsel %vm82, %v60, 0
    %v87 = vsel %vm82, %v61, 0
    %v90 = vsel %vm82, %v62, 0
    %v93 = vsel %vm82, %v63, 0
    %v96 = vsel %vm82, %v64, 0
    %v99 = vsel %vm82, %v65, 0
    %v102 = vsel %vm82, %v66, 0
    %v105 = vsel %vm82, %v67, 0
    %107 = vmatpush.msra.mxu0 0.0
    %108 = vmatpush.msra.mxu0 0.0
    %109 = vmatpush.msra.mxu0 0.0
    %110 = vmatpush.msra.mxu0 0.0
    %111 = vmatpush.msra.mxu0 0.0
    %112 = vmatpush.msra.mxu0 0.0
    %113 = vmatpush.msra.mxu0 0.0
    %114 = vmatpush.msra.mxu0 0.0
    %115 = vmatpush.msra.mxu0 0.0
    %116 = vmatpush.msra.mxu0 0.0
    %117 = vmatpush.msra.mxu0 0.0
    %118 = vmatpush.msra.mxu0 0.0
    %119 = vmatpush.msra.mxu0 0.0
    %120 = vmatpush.msra.mxu0 0.0
    %121 = vmatpush.msra.mxu0 %v71
    %122 = vmatpush.msra.mxu0 %v68
    %123 = vmatmul.f32.gmra.mxu0 %v84
    %v124 = vpop.f32.mrf.mxu0
    %v125 = vadd.f32 %v76, %v124
    %126 = vmatmul.f32.gmra.mxu0 %v87
    %v127 = vpop.f32.mrf.mxu0
    %v128 = vadd.f32 %v76, %v127
    %129 = vmatmul.f32.gmra.mxu0 %v90
    %v130 = vpop.f32.mrf.mxu0
    %v131 = vadd.f32 %v76, %v130
    %132 = vmatmul.f32.gmra.mxu0 %v93
    %v133 = vpop.f32.mrf.mxu0
    %v134 = vadd.f32 %v76, %v133
    %135 = vmatmul.f32.gmra.mxu0 %v96
    %v136 = vpop.f32.mrf.mxu0
    %v137 = vadd.f32 %v76, %v136
    %138 = vmatmul.f32.gmra.mxu0 %v99
    %v139 = vpop.f32.mrf.mxu0
    %v140 = vadd.f32 %v76, %v139
    %141 = vmatmul.f32.gmra.mxu0 %v102
    %v142 = vpop.f32.mrf.mxu0
    %v143 = vadd.f32 %v76, %v142
    %144 = vmatmul.f32.gmra.mxu0 %v105
    %v145 = vpop.f32.mrf.mxu0
    %v146 = vadd.f32 %v76, %v145
    %147 = vdwg.mxu0
    %148 = vmatpush.msra.mxu0 0.0
    %149 = vmatpush.msra.mxu0 0.0
    %150 = vmatpush.msra.mxu0 0.0
    %151 = vmatpush.msra.mxu0 0.0
    %152 = vmatpush.msra.mxu0 0.0
    %153 = vmatpush.msra.mxu0 0.0
    %154 = vmatpush.msra.mxu0 0.0
    %155 = vmatpush.msra.mxu0 0.0
    %156 = vmatpush.msra.mxu0 0.0
    %157 = vmatpush.msra.mxu0 0.0
    %158 = vmatpush.msra.mxu0 0.0
    %159 = vmatpush.msra.mxu0 0.0
    %160 = vmatpush.msra.mxu0 0.0
    %161 = vmatpush.msra.mxu0 0.0
    %162 = vmatpush.msra.mxu0 %v72
    %163 = vmatpush.msra.mxu0 %v69
    %164 = vmatmul.f32.gmra.mxu0 %v84
    %v165 = vpop.f32.mrf.mxu0
    %v166 = vadd.f32 %v77, %v165
    %167 = vmatmul.f32.gmra.mxu0 %v87
    %v168 = vpop.f32.mrf.mxu0
    %v169 = vadd.f32 %v77, %v168
    %170 = vmatmul.f32.gmra.mxu0 %v90
    %v171 = vpop.f32.mrf.mxu0
    %v172 = vadd.f32 %v77, %v171
    %173 = vmatmul.f32.gmra.mxu0 %v93
    %v174 = vpop.f32.mrf.mxu0
    %v175 = vadd.f32 %v77, %v174
    %176 = vmatmul.f32.gmra.mxu0 %v96
    %v177 = vpop.f32.mrf.mxu0
    %v178 = vadd.f32 %v77, %v177
    %179 = vmatmul.f32.gmra.mxu0 %v99
    %v180 = vpop.f32.mrf.mxu0
    %v181 = vadd.f32 %v77, %v180
    %182 = vmatmul.f32.gmra.mxu0 %v102
    %v183 = vpop.f32.mrf.mxu0
    %v184 = vadd.f32 %v77, %v183
    %185 = vmatmul.f32.gmra.mxu0 %v105
    %v186 = vpop.f32.mrf.mxu0
    %v187 = vadd.f32 %v77, %v186
    %188 = vdwg.mxu0
    %189 = vmatpush.msra.mxu0 0.0
    %190 = vmatpush.msra.mxu0 0.0
    %191 = vmatpush.msra.mxu0 0.0
    %192 = vmatpush.msra.mxu0 0.0
    %193 = vmatpush.msra.mxu0 0.0
    %194 = vmatpush.msra.mxu0 0.0
    %195 = vmatpush.msra.mxu0 0.0
    %196 = vmatpush.msra.mxu0 0.0
    %197 = vmatpush.msra.mxu0 0.0
    %198 = vmatpush.msra.mxu0 0.0
    %199 = vmatpush.msra.mxu0 0.0
    %200 = vmatpush.msra.mxu0 0.0
    %201 = vmatpush.msra.mxu0 0.0
    %202 = vmatpush.msra.mxu0 0.0
    %203 = vmatpush.msra.mxu0 %v73
    %204 = vmatpush.msra.mxu0 %v70
    %205 = vmatmul.f32.gmra.mxu0 %v84
    %v206 = vpop.f32.mrf.mxu0
    %v207 = vadd.f32 %v78, %v206
    %208 = vmatmul.f32.gmra.mxu0 %v87
    %v209 = vpop.f32.mrf.mxu0
    %v210 = vadd.f32 %v78, %v209
    %211 = vmatmul.f32.gmra.mxu0 %v90
    %v212 = vpop.f32.mrf.mxu0
    %v213 = vadd.f32 %v78, %v212
    %214 = vmatmul.f32.gmra.mxu0 %v93
    %v215 = vpop.f32.mrf.mxu0
    %v216 = vadd.f32 %v78, %v215
    %217 = vmatmul.f32.gmra.mxu0 %v96
    %v218 = vpop.f32.mrf.mxu0
    %v219 = vadd.f32 %v78, %v218
    %220 = vmatmul.f32.gmra.mxu0 %v99
    %v221 = vpop.f32.mrf.mxu0
    %v222 = vadd.f32 %v78, %v221
    %223 = vmatmul.f32.gmra.mxu0 %v102
    %v224 = vpop.f32.mrf.mxu0
    %v225 = vadd.f32 %v78, %v224
    %226 = vmatmul.f32.gmra.mxu0 %v105
    %v227 = vpop.f32.mrf.mxu0
    %v228 = vadd.f32 %v78, %v227
    %229 = vdwg.mxu0
    %230 = vst [vmem:[#allocation2] sm:$0xff] %v125
    %231 = vst [vmem:[#allocation2 + $0x8] sm:$0xff] %v166
    %232 = vst [vmem:[#allocation2 + $0x10] sm:$0xff] %v207
    %233 = vst [vmem:[#allocation2 + $0x18] sm:$0xff] %v128
    %234 = vst [vmem:[#allocation2 + $0x20] sm:$0xff] %v169
    %235 = vst [vmem:[#allocation2 + $0x28] sm:$0xff] %v210
    %236 = vst [vmem:[#allocation2 + $0x30] sm:$0xff] %v131
    %237 = vst [vmem:[#allocation2 + $0x38] sm:$0xff] %v172
    %238 = vst [vmem:[#allocation2 + $0x40] sm:$0xff] %v213
    %239 = vst [vmem:[#allocation2 + $0x48] sm:$0xff] %v134
    %240 = vst [vmem:[#allocation2 + $0x50] sm:$0xff] %v175
    %241 = vst [vmem:[#allocation2 + $0x58] sm:$0xff] %v216
    %242 = vst [vmem:[#allocation2 + $0x60] sm:$0xff] %v137
    %243 = vst [vmem:[#allocation2 + $0x68] sm:$0xff] %v178
    %244 = vst [vmem:[#allocation2 + $0x70] sm:$0xff] %v219
    %245 = vst [vmem:[#allocation2 + $0x78] sm:$0xff] %v140
    %246 = vst [vmem:[#allocation2 + $0x80] sm:$0xff] %v181
    %247 = vst [vmem:[#allocation2 + $0x88] sm:$0xff] %v222
    %248 = vst [vmem:[#allocation2 + $0x90] sm:$0xff] %v143
    %249 = vst [vmem:[#allocation2 + $0x98] sm:$0xff] %v184
    %250 = vst [vmem:[#allocation2 + $0xa0] sm:$0xff] %v225
    %251 = vst [vmem:[#allocation2 + $0xa8] sm:$0xff] %v146
    %252 = vst [vmem:[#allocation2 + $0xb0] sm:$0xff] %v187
    %253 = vst [vmem:[#allocation2 + $0xb8] sm:$0xff] %v228
    %v254 = vlaneseq
    %v255 = vand.u32 %v254, 127
    %v256 = vadd.s32 %v255, 128
    %v257 = vadd.s32 %v255, 256
    %vm258 = vcmp.lt.s32.totalorder %v255, 0
    %v259 = vsub.s32 0, %v255
    %v260 = vsel %vm258, %v259, %v255
    %v261 = vshrl.u32 %v260, 7
    %v262 = vand.u32 %v260, 127
    %v263 = vsub.s32 0, %v262
    %v264 = vsel %vm258, %v263, %v262
    %vm265 = vcmp.lt.s32.totalorder %v256, 0
    %v266 = vsub.s32 0, %v256
    %v267 = vsel %vm265, %v266, %v256
    %v268 = vshrl.u32 %v267, 7
    %v269 = vand.u32 %v267, 127
    %v270 = vsub.s32 0, %v269
    %v271 = vsel %vm265, %v270, %v269
    %vm272 = vcmp.lt.s32.totalorder %v257, 0
    %v273 = vsub.s32 0, %v257
    %v274 = vsel %vm272, %v273, %v257
    %v275 = vshrl.u32 %v274, 7
    %v276 = vand.u32 %v274, 127
    %v277 = vsub.s32 0, %v276
    %v278 = vsel %vm272, %v277, %v276
    %vm279 = vcmp.ne.s32.totalorder %v264, 0
    %vm280 = vcmp.ne.s32.totalorder %v271, 0
    %vm281 = vcmp.ne.s32.totalorder %v278, 0
    %vm282 = vcmp.lt.s32.totalorder %v264, 0
    %vm283 = vcmp.lt.s32.totalorder %v271, 0
    %vm284 = vcmp.lt.s32.totalorder %v278, 0
    %vm285 = vmand %vm282, %vm279
    %vm286 = vmand %vm283, %vm280
    %vm287 = vmand %vm284, %vm281
    %v288 = vadd.s32 %v264, 128
    %v289 = vadd.s32 %v271, 128
    %v290 = vadd.s32 %v278, 128
    %v291 = vsel %vm285, %v288, %v264
    %v292 = vsel %vm286, %v289, %v271
    %v293 = vsel %vm287, %v290, %v278
    %vm294 = vcmp.lt.s32.totalorder %v291, 64
    %vm295 = vcmp.lt.s32.totalorder %v292, 64
    %vm296 = vcmp.lt.s32.totalorder %v293, 64
    loop: start=0, step=1, limit=4
    $region58: #{lfads_teacher_forward.5} parent=1 // loop_pre_header
      _
    $region59: #{lfads_teacher_forward.5} parent=1 // loop_header
      %s298 = sphi 0, %s302
      %p299 = scmp.ge.s32.totalorder %s298, 4
    $region60: #{lfads_teacher_forward.5} parent=1 // loop_header_branch
      %301 = sbr.rel (%p299) target = $region64
    $region61: #{lfads_teacher_forward.5} parent=1 // loop_body
      %s303 = smul.u32 %s298, 8
      %s304 = ssub.s32 7, %s298
      %s305 = smul.u32 %s304, 8
      %s306 = sshra.s32 %s303, 3
      %s307 = sand.u32 %s303, 7
      %s308 = smul.u32 %s306, 3
      %s309 = smul.addr %s308, 8
      %s310 = scalar_lea.vmem [#allocation2], %s309
      %v311 = vld [vmem:[%s310] sm:$0xff]
      %v312 = vld [vmem:[%s310 + $0x8] sm:$0xff]
      %v313 = vld [vmem:[%s310 + $0x10] sm:$0xff]
      %s314 = sshra.s32 %s305, 3
      %s315 = sand.u32 %s305, 7
      %s316 = smul.u32 %s314, 3
      %s317 = smul.addr %s316, 8
      %s318 = scalar_lea.vmem [#allocation2], %s317
      %v319 = vld [vmem:[%s318] sm:$0xff]
      %v320 = vld [vmem:[%s318 + $0x8] sm:$0xff]
      %v321 = vld [vmem:[%s318 + $0x10] sm:$0xff]
      %v322 = vsel %vm294, %v311, %v319
      %v323 = vsel %vm295, %v312, %v320
      %v324 = vsel %vm296, %v313, %v321
      %325 = vst [vmem:[%s310] sm:$0xff] %v322
      %326 = vst [vmem:[%s310 + $0x8] sm:$0xff] %v323
      %327 = vst [vmem:[%s310 + $0x10] sm:$0xff] %v324
      %v328 = vsel %vm294, %v319, %v311
      %v329 = vsel %vm295, %v320, %v312
      %v330 = vsel %vm296, %v321, %v313
      %331 = vst [vmem:[%s318] sm:$0xff] %v328
      %332 = vst [vmem:[%s318 + $0x8] sm:$0xff] %v329
      %333 = vst [vmem:[%s318 + $0x10] sm:$0xff] %v330
    $region62: #{lfads_teacher_forward.5} parent=1 // loop_footer
      %s302 = sadd.s32 1, %s298
    $region63: #{lfads_teacher_forward.5} parent=1 // loop_footer_branch
      %297 = sbr.rel target = $region59
    $region64: #{lfads_teacher_forward.5} parent=1 // loop_exit
      _
    %v334 = vld [vmem:[%s1] sm:$0xff]
    %v335 = vld [vmem:[%s1 + $0x8] sm:$0xff]
    %v336 = vld [vmem:[%s1 + $0x10] sm:$0xff]
    %v337 = vld [vmem:[%s1 + $0x18] sm:$0xff]
    %v338 = vld [vmem:[%s1 + $0x20] sm:$0xff]
    %v339 = vld [vmem:[%s1 + $0x28] sm:$0xff]
    %v340 = vld [vmem:[%s1 + $0x30] sm:$0xff]
    %v341 = vld [vmem:[%s1 + $0x38] sm:$0xff]
    %v342 = vld [vmem:[%s6] sm:$0xf]
    %v343 = vld [vmem:[%s7] sm:$0x1]
    %v345 = vperm.slane %v343, 0
    %vm347 = vcmask 31744
    %v349 = vsel %vm347, %v334, 0
    %v352 = vsel %vm347, %v335, 0
    %v355 = vsel %vm347, %v336, 0
    %v358 = vsel %vm347, %v337, 0
    %v361 = vsel %vm347, %v338, 0
    %v364 = vsel %vm347, %v339, 0
    %v367 = vsel %vm347, %v340, 0
    %v370 = vsel %vm347, %v341, 0
    %vm372 = vcmask 1043456
    %v374 = vsel %vm372, %v342, 0
    %376 = vmatpush.msra.mxu0 0.0
    %377 = vmatpush.msra.mxu0 0.0
    %378 = vmatpush.msra.mxu0 0.0
    %379 = vmatpush.msra.mxu0 0.0
    %380 = vmatpush.msra.mxu0 0.0
    %381 = vmatpush.msra.mxu0 0.0
    %382 = vmatpush.msra.mxu0 0.0
    %383 = vmatpush.msra.mxu0 0.0
    %384 = vmatpush.msra.mxu0 0.0
    %385 = vmatpush.msra.mxu0 0.0
    %386 = vmatpush.msra.mxu0 0.0
    %387 = vmatpush.msra.mxu0 0.0
    %388 = vmatpush.msra.mxu0 0.0
    %389 = vmatpush.msra.mxu0 0.0
    %390 = vmatpush.msra.mxu0 0.0
    %391 = vmatpush.msra.mxu0 %v374
    %392 = vmatmul.f32.gmra.mxu0 %v349
    %v393 = vpop.f32.mrf.mxu0
    %v394 = vadd.f32 %v345, %v393
    %395 = vmatmul.f32.gmra.mxu0 %v352
    %v396 = vpop.f32.mrf.mxu0
    %v397 = vadd.f32 %v345, %v396
    %398 = vmatmul.f32.gmra.mxu0 %v355
    %v399 = vpop.f32.mrf.mxu0
    %v400 = vadd.f32 %v345, %v399
    %401 = vmatmul.f32.gmra.mxu0 %v358
    %v402 = vpop.f32.mrf.mxu0
    %v403 = vadd.f32 %v345, %v402
    %404 = vmatmul.f32.gmra.mxu0 %v361
    %v405 = vpop.f32.mrf.mxu0
    %v406 = vadd.f32 %v345, %v405
    %407 = vmatmul.f32.gmra.mxu0 %v364
    %v408 = vpop.f32.mrf.mxu0
    %v409 = vadd.f32 %v345, %v408
    %410 = vmatmul.f32.gmra.mxu0 %v367
    %v411 = vpop.f32.mrf.mxu0
    %v412 = vadd.f32 %v345, %v411
    %413 = vmatmul.f32.gmra.mxu0 %v370
    %v414 = vpop.f32.mrf.mxu0
    %v415 = vadd.f32 %v345, %v414
    %416 = vdwg.mxu0
    %vm417 = vcmask 195584
    %418 = vst.msk [vmem:[#allocation5] sm:$0xff] %vm417, %v394
    %419 = vst.msk [vmem:[#allocation5 + $0x8] sm:$0xff] %vm417, %v397
    %420 = vst.msk [vmem:[#allocation5 + $0x10] sm:$0xff] %vm417, %v400
    %421 = vst.msk [vmem:[#allocation5 + $0x18] sm:$0xff] %vm417, %v403
    %422 = vst.msk [vmem:[#allocation5 + $0x20] sm:$0xff] %vm417, %v406
    %423 = vst.msk [vmem:[#allocation5 + $0x28] sm:$0xff] %vm417, %v409
    %424 = vst.msk [vmem:[#allocation5 + $0x30] sm:$0xff] %vm417, %v412
    %425 = vst.msk [vmem:[#allocation5 + $0x38] sm:$0xff] %vm417, %v415
    %vm426 = vcmp.lt.s32.totalorder %v255, 0
    %v427 = vsub.s32 0, %v255
    %v428 = vsel %vm426, %v427, %v255
    %v429 = vshrl.u32 %v428, 3
    %v430 = vand.u32 %v428, 7
    %v431 = vsub.s32 0, %v430
    %v432 = vsel %vm426, %v431, %v430
    %vm433 = vcmp.ne.s32.totalorder %v432, 0
    %vm434 = vcmp.lt.s32.totalorder %v432, 0
    %vm435 = vmand %vm434, %vm433
    %v436 = vadd.s32 %v432, 8
    %v437 = vsel %vm435, %v436, %v432
    %vm438 = vcmp.lt.s32.totalorder %v437, 4
    loop: start=0, step=1, limit=4
    $region65: #{lfads_teacher_forward.5} parent=1 // loop_pre_header
      _
    $region66: #{lfads_teacher_forward.5} parent=1 // loop_header
      %s440 = sphi 0, %s444
      %p441 = scmp.ge.s32.totalorder %s440, 4
    $region67: #{lfads_teacher_forward.5} parent=1 // loop_header_branch
      %443 = sbr.rel (%p441) target = $region71
    $region68: #{lfads_teacher_forward.5} parent=1 // loop_body
      %s445 = smul.u32 %s440, 8
      %s446 = ssub.s32 7, %s440
      %s447 = smul.u32 %s446, 8
      %s448 = scalar_lea.vmem [#allocation5], %s445
      %v449 = vld [vmem:[%s448] sm:$0xff]
      %s450 = scalar_lea.vmem [#allocation5], %s447
      %v451 = vld [vmem:[%s450] sm:$0xff]
      %v452 = vsel %vm438, %v449, %v451
      %453 = vst.msk [vmem:[%s448] sm:$0xff] %vm417, %v452
      %v454 = vsel %vm438, %v451, %v449
      %455 = vst.msk [vmem:[%s450] sm:$0xff] %vm417, %v454
    $region69: #{lfads_teacher_forward.5} parent=1 // loop_footer
      %s444 = sadd.s32 1, %s440
    $region70: #{lfads_teacher_forward.5} parent=1 // loop_footer_branch
      %439 = sbr.rel target = $region66
    $region71: #{lfads_teacher_forward.5} parent=1 // loop_exit
      _
    %v456 = vld [vmem:[%s5] sm:$0x1]
    %v458 = vperm.slane %v456, 0
    %460 = vst [vmem:[#allocation4] sm:$0xff] 0.0
    %v461 = vld [vmem:[%s9] sm:$0x1]
    %v463 = vperm.slane %v461, 0
    %vm464 = vcmask 64512
    %465 = vst.msk [vmem:[#allocation7] sm:$0xff] %vm464, 0.0
    loop: start=0, step=1, limit=8
    $region72: #{lfads_teacher_forward.5} parent=1 // loop_pre_header
      _
    $region73: #{lfads_teacher_forward.5} parent=1 // loop_header
      %s467 = sphi 0, %s471
      %p468 = scmp.ge.s32.totalorder %s467, 8
    $region74: #{lfads_teacher_forward.5} parent=1 // loop_header_branch
      %470 = sbr.rel (%p468) target = $region78
    $region75: #{lfads_teacher_forward.5} parent=1 // loop_body
      %s472 = smul.u32 %s467, 8
      %s473 = ssub.s32 7, %s467
      %s474 = smul.u32 %s473, 8
      %v475 = vld [vmem:[#allocation4] sm:$0xff]
      %v476 = vld [vmem:[#allocation8] sm:$0xff]
      %v477 = vld [vmem:[#allocation8 + $0x8] sm:$0xff]
      %v478 = vld [vmem:[#allocation8 + $0x10] sm:$0xff]
      %v479 = vld [vmem:[#allocation8 + $0x18] sm:$0xff]
      %v480 = vld [vmem:[#allocation8 + $0x20] sm:$0xff]
      %v481 = vld [vmem:[#allocation8 + $0x28] sm:$0xff]
      %v482 = vld [vmem:[#allocation8 + $0x30] sm:$0xff]
      %v483 = vld [vmem:[#allocation8 + $0x38] sm:$0xff]
      %v484 = vld [vmem:[#allocation8 + $0x40] sm:$0xff]
      %v485 = vld [vmem:[#allocation8 + $0x48] sm:$0xff]
      %v486 = vld [vmem:[#allocation8 + $0x50] sm:$0xff]
      %v487 = vld [vmem:[#allocation8 + $0x58] sm:$0xff]
      %v488 = vld [vmem:[#allocation8 + $0x60] sm:$0xff]
      %v489 = vld [vmem:[#allocation8 + $0x68] sm:$0xff]
      %v490 = vld [vmem:[#allocation8 + $0x70] sm:$0xff]
      %v491 = vld [vmem:[#allocation8 + $0x78] sm:$0xff]
      %v492 = vld [vmem:[#allocation8 + $0x80] sm:$0xff]
      %v493 = vld [vmem:[#allocation8 + $0x88] sm:$0xff]
      %v494 = vld [vmem:[#allocation8 + $0x90] sm:$0xff]
      %v495 = vld [vmem:[#allocation8 + $0x98] sm:$0xff]
      %v496 = vld [vmem:[#allocation8 + $0xa0] sm:$0xff]
      %v497 = vld [vmem:[#allocation8 + $0xa8] sm:$0xff]
      %v498 = vld [vmem:[#allocation8 + $0xb0] sm:$0xff]
      %v499 = vld [vmem:[#allocation8 + $0xb8] sm:$0xff]
      %v500 = vld [vmem:[#allocation8 + $0xc0] sm:$0xff]
      %v501 = vld [vmem:[#allocation8 + $0xc8] sm:$0xff]
      %v502 = vld [vmem:[#allocation8 + $0xd0] sm:$0xff]
      %v503 = vld [vmem:[#allocation8 + $0xd8] sm:$0xff]
      %v504 = vld [vmem:[#allocation8 + $0xe0] sm:$0xff]
      %v505 = vld [vmem:[#allocation8 + $0xe8] sm:$0xff]
      %v506 = vld [vmem:[#allocation8 + $0xf0] sm:$0xff]
      %v507 = vld [vmem:[#allocation8 + $0xf8] sm:$0xff]
      %v508 = vld [vmem:[#allocation8 + $0x100] sm:$0xff]
      %v509 = vld [vmem:[#allocation8 + $0x108] sm:$0xff]
      %v510 = vld [vmem:[#allocation8 + $0x110] sm:$0xff]
      %v511 = vld [vmem:[#allocation8 + $0x118] sm:$0xff]
      %v512 = vld [vmem:[#allocation8 + $0x120] sm:$0xff]
      %v513 = vld [vmem:[#allocation8 + $0x128] sm:$0xff]
      %v514 = vld [vmem:[#allocation8 + $0x130] sm:$0xff]
      %v515 = vld [vmem:[#allocation8 + $0x138] sm:$0xff]
      %v516 = vld [vmem:[#allocation8 + $0x140] sm:$0xff]
      %v517 = vld [vmem:[#allocation8 + $0x148] sm:$0xff]
      %v518 = vld [vmem:[#allocation8 + $0x150] sm:$0xff]
      %v519 = vld [vmem:[#allocation8 + $0x158] sm:$0xff]
      %v520 = vld [vmem:[#allocation8 + $0x160] sm:$0xff]
      %v521 = vld [vmem:[#allocation8 + $0x168] sm:$0xff]
      %v522 = vld [vmem:[#allocation8 + $0x170] sm:$0xff]
      %v523 = vld [vmem:[#allocation8 + $0x178] sm:$0xff]
      %524 = vmatpush.msra.mxu0 %v521
      %525 = vmatpush.msra.mxu0 %v518
      %526 = vmatpush.msra.mxu0 %v515
      %527 = vmatpush.msra.mxu0 %v512
      %528 = vmatpush.msra.mxu0 %v509
      %529 = vmatpush.msra.mxu0 %v506
      %530 = vmatpush.msra.mxu0 %v503
      %531 = vmatpush.msra.mxu0 %v500
      %532 = vmatpush.msra.mxu0 %v497
      %533 = vmatpush.msra.mxu0 %v494
      %534 = vmatpush.msra.mxu0 %v491
      %535 = vmatpush.msra.mxu0 %v488
      %536 = vmatpush.msra.mxu0 %v485
      %537 = vmatpush.msra.mxu0 %v482
      %538 = vmatpush.msra.mxu0 %v479
      %539 = vmatpush.msra.mxu0 %v476
      %540 = vmatmul.f32.gmra.mxu0 %v475
      %v541 = vpop.f32.mrf.mxu0
      %v542 = vadd.f32 0.0, %v541
      %543 = vdwg.mxu0
      %544 = vmatpush.msra.mxu0 %v522
      %545 = vmatpush.msra.mxu0 %v519
      %546 = vmatpush.msra.mxu0 %v516
      %547 = vmatpush.msra.mxu0 %v513
      %548 = vmatpush.msra.mxu0 %v510
      %549 = vmatpush.msra.mxu0 %v507
      %550 = vmatpush.msra.mxu0 %v504
      %551 = vmatpush.msra.mxu0 %v501
      %552 = vmatpush.msra.mxu0 %v498
      %553 = vmatpush.msra.mxu0 %v495
      %554 = vmatpush.msra.mxu0 %v492
      %555 = vmatpush.msra.mxu0 %v489
      %556 = vmatpush.msra.mxu0 %v486
      %557 = vmatpush.msra.mxu0 %v483
      %558 = vmatpush.msra.mxu0 %v480
      %559 = vmatpush.msra.mxu0 %v477
      %560 = vmatmul.f32.gmra.mxu0 %v475
      %v561 = vpop.f32.mrf.mxu0
      %v562 = vadd.f32 0.0, %v561
      %563 = vdwg.mxu0
      %564 = vmatpush.msra.mxu0 %v523
      %565 = vmatpush.msra.mxu0 %v520
      %566 = vmatpush.msra.mxu0 %v517
      %567 = vmatpush.msra.mxu0 %v514
      %568 = vmatpush.msra.mxu0 %v511
      %569 = vmatpush.msra.mxu0 %v508
      %570 = vmatpush.msra.mxu0 %v505
      %571 = vmatpush.msra.mxu0 %v502
      %572 = vmatpush.msra.mxu0 %v499
      %573 = vmatpush.msra.mxu0 %v496
      %574 = vmatpush.msra.mxu0 %v493
      %575 = vmatpush.msra.mxu0 %v490
      %576 = vmatpush.msra.mxu0 %v487
      %577 = vmatpush.msra.mxu0 %v484
      %578 = vmatpush.msra.mxu0 %v481
      %579 = vmatpush.msra.mxu0 %v478
      %580 = vmatmul.f32.gmra.mxu0 %v475
      %v581 = vpop.f32.mrf.mxu0
      %v582 = vadd.f32 0.0, %v581
      %583 = vdwg.mxu0
      %s584 = sshra.s32 %s472, 3
      %s585 = sand.u32 %s472, 7
      %s586 = smul.u32 %s584, 3
      %s587 = smul.addr %s586, 8
      %s588 = scalar_lea.vmem [#allocation2], %s587
      %v589 = vld [vmem:[%s588] sm:$0xff]
      %v590 = vld [vmem:[%s588 + $0x8] sm:$0xff]
      %v591 = vld [vmem:[%s588 + $0x10] sm:$0xff]
      %v592 = vadd.f32 %v589, %v542
      %v593 = vxor.u32 %v592, 2147483648
      %v594 = vmul.f32 %v593, 1.442695
      %v595 = vpow.pop %v594
      %v596 = vadd.f32 %v595, 1.0
      %v597 = vrcp.pop %v596
      %v598 = vmul.f32 %v596, %v597
      %v599 = vsub.f32 1.0, %v598
      %v600 = vmul.f32 %v597, %v599
      %v601 = vadd.f32 %v597, %v600
      %vm602 = vweird.f32 %v596
      %vm603 = vweird.f32 %v597
      %vm604 = vmor %vm602, %vm603
      %v605 = vsel %vm604, %v597, %v601
      %v606 = vand.u32 2147483647, %v596
      %vm607 = vcmp.eq.f32.partialorder %v606, 8.507059e+37
      %v608 = vand.u32 %v596, 2147483648
      %v609 = vor.u32 1.1754944e-38, %v608
      %v610 = vsel %vm607, %v609, %v605
      %v611 = vmul.f32 1.0, %v610
      %v612 = vadd.f32 %v590, %v562
      %v613 = vxor.u32 %v612, 2147483648
      %v614 = vmul.f32 %v613, 1.442695
      %v615 = vpow.pop %v614
      %v616 = vadd.f32 %v615, 1.0
      %v617 = vrcp.pop %v616
      %v618 = vmul.f32 %v616, %v617
      %v619 = vsub.f32 1.0, %v618
      %v620 = vmul.f32 %v617, %v619
      %v621 = vadd.f32 %v617, %v620
      %vm622 = vweird.f32 %v616
      %vm623 = vweird.f32 %v617
      %vm624 = vmor %vm622, %vm623
      %v625 = vsel %vm624, %v617, %v621
      %v626 = vand.u32 2147483647, %v616
      %vm627 = vcmp.eq.f32.partialorder %v626, 8.507059e+37
      %v628 = vand.u32 %v616, 2147483648
      %v629 = vor.u32 1.1754944e-38, %v628
      %v630 = vsel %vm627, %v629, %v625
      %v631 = vmul.f32 1.0, %v630
      %v632 = vadd.f32 %v582, %v458
      %v633 = vmul.f32 %v611, %v632
      %v634 = vadd.f32 %v591, %v633
      %v635 = vtanh.pop %v634
      %v636 = vsub.f32 1.0, %v631
      %v637 = vmul.f32 %v636, %v635
      %v638 = vmul.f32 %v631, %v475
      %v639 = vadd.f32 %v637, %v638
      %640 = vst [vmem:[#allocation4] sm:$0xff] %v639
      %s641 = scalar_lea.vmem [#allocation3], %s472
      %vm642 = vcmask 523264
      %643 = vst.msk [vmem:[%s641] sm:$0xff] %vm642, %v639
      %s644 = scalar_lea.vmem [#allocation3], %s474
      %vm645 = vcmask 1048064
      %646 = vst.msk [vmem:[%s644] sm:$0xff] %vm645, %v639
      %v647 = vld [vmem:[#allocation7] sm:$0xff]
      %v648 = vld [vmem:[%s8] sm:$0xff]
      %v650 = vsel %vm464, %v647, 0
      %652 = vmatpush.msra.mxu0 0.0
      %653 = vmatpush.msra.mxu0 0.0
      %654 = vmatpush.msra.mxu0 0.0
      %655 = vmatpush.msra.mxu0 0.0
      %656 = vmatpush.msra.mxu0 0.0
      %657 = vmatpush.msra.mxu0 0.0
      %658 = vmatpush.msra.mxu0 0.0
      %659 = vmatpush.msra.mxu0 0.0
      %660 = vmatpush.msra.mxu0 0.0
      %661 = vmatpush.msra.mxu0 0.0
      %662 = vmatpush.msra.mxu0 0.0
      %663 = vmatpush.msra.mxu0 0.0
      %664 = vmatpush.msra.mxu0 0.0
      %665 = vmatpush.msra.mxu0 0.0
      %666 = vmatpush.msra.mxu0 0.0
      %667 = vmatpush.msra.mxu0 %v648
      %668 = vmatmul.f32.gmra.mxu0 %v650
      %v669 = vpop.f32.mrf.mxu0
      %v670 = vadd.f32 0.0, %v669
      %671 = vdwg.mxu0
      %s672 = scalar_lea.vmem [#allocation5], %s472
      %v673 = vld [vmem:[%s672] sm:$0xff]
      %v674 = vadd.f32 %v673, %v670
      %v675 = vxor.u32 %v674, 2147483648
      %v676 = vmul.f32 %v675, 1.442695
      %v677 = vpow.pop %v676
      %v678 = vadd.f32 %v677, 1.0
      %v679 = vrcp.pop %v678
      %v680 = vmul.f32 %v678, %v679
      %v681 = vsub.f32 1.0, %v680
      %v682 = vmul.f32 %v679, %v681
      %v683 = vadd.f32 %v679, %v682
      %vm684 = vweird.f32 %v678
      %vm685 = vweird.f32 %v679
      %vm686 = vmor %vm684, %vm685
      %v687 = vsel %vm686, %v679, %v683
      %v688 = vand.u32 2147483647, %v678
      %vm689 = vcmp.eq.f32.partialorder %v688, 8.507059e+37
      %v690 = vand.u32 %v678, 2147483648
      %v691 = vor.u32 1.1754944e-38, %v690
      %v692 = vsel %vm689, %v691, %v687
      %v693 = vmul.f32 1.0, %v692
      %694 = vrot.lane.b32.xlu0 %v463, 16
      %v695 = vpop.permute.xlu0 %694
      %v697 = vadd.f32 %v670, %v695
      %699 = vrot.lane.b32.xlu0 %v697, 112
      %v700 = vpop.permute.xlu0 %699
      %v702 = vmul.f32 %v693, %v700
      %704 = vrot.lane.b32.xlu0 %v702, 16
      %v705 = vpop.permute.xlu0 %704
      %v707 = vadd.f32 %v673, %v705
      %v708 = vtanh.pop %v707
      %v709 = vsub.f32 1.0, %v693
      %711 = vrot.lane.b32.xlu0 %v708, 120
      %v712 = vpop.permute.xlu0 %711
      %v714 = vmul.f32 %v709, %v712
      %715 = vrot.lane.b32.xlu0 %v647, 8
      %v716 = vpop.permute.xlu0 %715
      %v718 = vmul.f32 %v693, %v716
      %v719 = vadd.f32 %v714, %v718
      %721 = vrot.lane.b32.xlu0 %v719, 120
      %v722 = vpop.permute.xlu0 %721
      %724 = vst.msk [vmem:[#allocation7] sm:$0xff] %vm464, %v722
      %s725 = scalar_lea.vmem [#allocation6], %s472
      %726 = vst.msk [vmem:[%s725] sm:$0xff] %vm347, %v722
      %s727 = scalar_lea.vmem [#allocation6], %s474
      %vm728 = vcmask 64544
      %729 = vst.msk [vmem:[%s727] sm:$0xff] %vm728, %v722
    $region76: #{lfads_teacher_forward.5} parent=1 // loop_footer
      %s471 = sadd.s32 1, %s467
    $region77: #{lfads_teacher_forward.5} parent=1 // loop_footer_branch
      %466 = sbr.rel target = $region73
    $region78: #{lfads_teacher_forward.5} parent=1 // loop_exit
      _
    %v730 = vld [vmem:[#allocation3] sm:$0xff]
    %v731 = vld [vmem:[#allocation3 + $0x8] sm:$0xff]
    %v732 = vld [vmem:[#allocation3 + $0x10] sm:$0xff]
    %v733 = vld [vmem:[#allocation3 + $0x18] sm:$0xff]
    %v734 = vld [vmem:[#allocation3 + $0x20] sm:$0xff]
    %v735 = vld [vmem:[#allocation3 + $0x28] sm:$0xff]
    %v736 = vld [vmem:[#allocation3 + $0x30] sm:$0xff]
    %v737 = vld [vmem:[#allocation3 + $0x38] sm:$0xff]
    %v738 = vld [vmem:[%s10] sm:$0xff]
    %v739 = vld [vmem:[%s10 + $0x8] sm:$0xff]
    %v740 = vld [vmem:[%s10 + $0x10] sm:$0xff]
    %v741 = vld [vmem:[%s10 + $0x18] sm:$0xff]
    %v742 = vld [vmem:[%s10 + $0x20] sm:$0xff]
    %v743 = vld [vmem:[%s10 + $0x28] sm:$0xff]
    %v744 = vld [vmem:[%s10 + $0x30] sm:$0xff]
    %v745 = vld [vmem:[%s10 + $0x38] sm:$0xff]
    %v746 = vld [vmem:[%s10 + $0x40] sm:$0xff]
    %v747 = vld [vmem:[%s10 + $0x48] sm:$0xff]
    %v748 = vld [vmem:[%s10 + $0x50] sm:$0xff]
    %v749 = vld [vmem:[%s10 + $0x58] sm:$0xff]
    %v750 = vld [vmem:[%s10 + $0x60] sm:$0xff]
    %v751 = vld [vmem:[%s10 + $0x68] sm:$0xff]
    %v752 = vld [vmem:[%s10 + $0x70] sm:$0xff]
    %v753 = vld [vmem:[%s10 + $0x78] sm:$0xff]
    %v754 = vld [vmem:[#allocation6] sm:$0xff]
    %v755 = vld [vmem:[#allocation6 + $0x8] sm:$0xff]
    %v756 = vld [vmem:[#allocation6 + $0x10] sm:$0xff]
    %v757 = vld [vmem:[#allocation6 + $0x18] sm:$0xff]
    %v758 = vld [vmem:[#allocation6 + $0x20] sm:$0xff]
    %v759 = vld [vmem:[#allocation6 + $0x28] sm:$0xff]
    %v760 = vld [vmem:[#allocation6 + $0x30] sm:$0xff]
    %v761 = vld [vmem:[#allocation6 + $0x38] sm:$0xff]
    %v762 = vld [vmem:[%s11] sm:$0xff]
    %v764 = vsel %vm464, %v754, 0
    %v767 = vsel %vm464, %v755, 0
    %v770 = vsel %vm464, %v756, 0
    %v773 = vsel %vm464, %v757, 0
    %v776 = vsel %vm464, %v758, 0
    %v779 = vsel %vm464, %v759, 0
    %v782 = vsel %vm464, %v760, 0
    %v785 = vsel %vm464, %v761, 0
    %787 = vmatpush.msra.mxu0 0.0
    %788 = vmatpush.msra.mxu0 0.0
    %789 = vmatpush.msra.mxu0 0.0
    %790 = vmatpush.msra.mxu0 0.0
    %791 = vmatpush.msra.mxu0 0.0
    %792 = vmatpush.msra.mxu0 0.0
    %793 = vmatpush.msra.mxu0 0.0
    %794 = vmatpush.msra.mxu0 0.0
    %795 = vmatpush.msra.mxu0 0.0
    %796 = vmatpush.msra.mxu0 0.0
    %797 = vmatpush.msra.mxu0 0.0
    %798 = vmatpush.msra.mxu0 0.0
    %799 = vmatpush.msra.mxu0 0.0
    %800 = vmatpush.msra.mxu0 0.0
    %801 = vmatpush.msra.mxu0 0.0
    %802 = vmatpush.msra.mxu0 %v762
    %803 = vmatmul.f32.gmra.mxu0 %v764
    %v804 = vpop.f32.mrf.mxu0
    %v805 = vadd.f32 0.0, %v804
    %806 = vmatmul.f32.gmra.mxu0 %v767
    %v807 = vpop.f32.mrf.mxu0
    %v808 = vadd.f32 0.0, %v807
    %809 = vmatmul.f32.gmra.mxu0 %v770
    %v810 = vpop.f32.mrf.mxu0
    %v811 = vadd.f32 0.0, %v810
    %812 = vmatmul.f32.gmra.mxu0 %v773
    %v813 = vpop.f32.mrf.mxu0
    %v814 = vadd.f32 0.0, %v813
    %815 = vmatmul.f32.gmra.mxu0 %v776
    %v816 = vpop.f32.mrf.mxu0
    %v817 = vadd.f32 0.0, %v816
    %818 = vmatmul.f32.gmra.mxu0 %v779
    %v819 = vpop.f32.mrf.mxu0
    %v820 = vadd.f32 0.0, %v819
    %821 = vmatmul.f32.gmra.mxu0 %v782
    %v822 = vpop.f32.mrf.mxu0
    %v823 = vadd.f32 0.0, %v822
    %824 = vmatmul.f32.gmra.mxu0 %v785
    %v825 = vpop.f32.mrf.mxu0
    %v826 = vadd.f32 0.0, %v825
    %827 = vdwg.mxu0
    %828 = vmatpush.msra.mxu0 %v753
    %829 = vmatpush.msra.mxu0 %v752
    %830 = vmatpush.msra.mxu0 %v751
    %831 = vmatpush.msra.mxu0 %v750
    %832 = vmatpush.msra.mxu0 %v749
    %833 = vmatpush.msra.mxu0 %v748
    %834 = vmatpush.msra.mxu0 %v747
    %835 = vmatpush.msra.mxu0 %v746
    %836 = vmatpush.msra.mxu0 %v745
    %837 = vmatpush.msra.mxu0 %v744
    %838 = vmatpush.msra.mxu0 %v743
    %839 = vmatpush.msra.mxu0 %v742
    %840 = vmatpush.msra.mxu0 %v741
    %841 = vmatpush.msra.mxu0 %v740
    %842 = vmatpush.msra.mxu0 %v739
    %843 = vmatpush.msra.mxu0 %v738
    %844 = vmatmul.f32.gmra.mxu0 %v730
    %v845 = vpop.f32.mrf.mxu0
    %v846 = vadd.f32 %v805, %v845
    %847 = vmatmul.f32.gmra.mxu0 %v731
    %v848 = vpop.f32.mrf.mxu0
    %v849 = vadd.f32 %v808, %v848
    %850 = vmatmul.f32.gmra.mxu0 %v732
    %v851 = vpop.f32.mrf.mxu0
    %v852 = vadd.f32 %v811, %v851
    %853 = vmatmul.f32.gmra.mxu0 %v733
    %v854 = vpop.f32.mrf.mxu0
    %v855 = vadd.f32 %v814, %v854
    %856 = vmatmul.f32.gmra.mxu0 %v734
    %v857 = vpop.f32.mrf.mxu0
    %v858 = vadd.f32 %v817, %v857
    %859 = vmatmul.f32.gmra.mxu0 %v735
    %v860 = vpop.f32.mrf.mxu0
    %v861 = vadd.f32 %v820, %v860
    %862 = vmatmul.f32.gmra.mxu0 %v736
    %v863 = vpop.f32.mrf.mxu0
    %v864 = vadd.f32 %v823, %v863
    %865 = vmatmul.f32.gmra.mxu0 %v737
    %v866 = vpop.f32.mrf.mxu0
    %v867 = vadd.f32 %v826, %v866
    %868 = vdwg.mxu0
    %v869 = vld [vmem:[%s12] sm:$0x1]
    %v871 = vperm.slane %v869, 0
    %v873 = vadd.f32 %v846, %v871
    %v874 = vadd.f32 %v849, %v871
    %v875 = vadd.f32 %v852, %v871
    %v876 = vadd.f32 %v855, %v871
    %v877 = vadd.f32 %v858, %v871
    %v878 = vadd.f32 %v861, %v871
    %v879 = vadd.f32 %v864, %v871
    %v880 = vadd.f32 %v867, %v871
    %881 = vst [vmem:[%s13] sm:$0xff] %v873
    %882 = vst [vmem:[%s13 + $0x8] sm:$0xff] %v874
    %883 = vst [vmem:[%s13 + $0x10] sm:$0xff] %v875
    %884 = vst [vmem:[%s13 + $0x18] sm:$0xff] %v876
    %885 = vst [vmem:[%s13 + $0x20] sm:$0xff] %v877
    %886 = vst [vmem:[%s13 + $0x28] sm:$0xff] %v878
    %887 = vst [vmem:[%s13 + $0x30] sm:$0xff] %v879
    %888 = vst [vmem:[%s13 + $0x38] sm:$0xff] %v880
    // Predicated region
    $region79: #{lfads_teacher_forward.5} parent=1 // pred_check
      _
    $region80: #{lfads_teacher_forward.5} parent=1 // pred_check_branch
      %890 = sbr.rel (0) target = $region82
    $region81: #{lfads_teacher_forward.5} parent=1 // pred_region
      _
    $region82: #{lfads_teacher_forward.5} parent=1 // pred_fallthru
      _
    // Predicated region
    $region83: #{lfads_teacher_forward.5} parent=1 // pred_check
      _
    $region84: #{lfads_teacher_forward.5} parent=1 // pred_check_branch
      %892 = sbr.rel (0) target = $region86
    $region85: #{lfads_teacher_forward.5} parent=1 // pred_region
      _
    $region86: #{lfads_teacher_forward.5} parent=1 // pred_fallthru
      _
    %893 = vsyncpa [#allocation9], 1

// kernel: lfads_teacher_forward.6
$region0: #{lfads_teacher_forward.6}
  #allocation0 [shape = 'u32[]', space=smem, size = 0x4, offset = 0x4, fixed_abs, tag = 'smem constant byte address 0x4 - core index']
  #allocation1 [shape = 'u32[72,128]{1,0:T(1,128)}', space=vmem, size = 0x9000, scoped, tag = 'internal scratch']
  %s0 = inlined_call_operand.vmem [shape: f32[64,128], index: 0, kind: input, shape index: {}]
  %s1 = inlined_call_operand.hbm [shape: f32[128,384], index: 1, kind: input, shape index: {}]
  %s2 = inlined_call_operand.vmem [shape: f32[1,384], index: 2, kind: input, shape index: {}]
  %s3 = inlined_call_operand.hbm [shape: f32[128,128], index: 3, kind: input, shape index: {}]
  %s4 = inlined_call_operand.vmem [shape: f32[1,128], index: 4, kind: input, shape index: {}]
  %s5 = inlined_call_operand.vmem [shape: f32[64,128], index: 5, kind: output, shape index: {}]
  %s6 = sld [smem:[#allocation0]]
  $region38: #{lfads_teacher_forward.6} parent=0
    _
  %s8 = ssub.s32 1, %s6
  %s9 = scalar_select 0, %s8, %s6
  $region1: #{lfads_teacher_forward.6} parent=0
    #allocation2 [shape = 'u8[196608]{0}', space=vmem, size = 0x30000, scoped, tag = 'input window, operand 1, single buffered']
    #allocation3 [shape = 's32[1]{0}', space=sflag, size = 0x4, scoped, tag = 'scoped memory for lfads_teacher_forward.6']
    #allocation4 [shape = 'u8[65536]{0}', space=vmem, size = 0x10000, scoped, tag = 'input window, operand 3, single buffered']
    #allocation5 [shape = 's32[1]{0}', space=sflag, size = 0x4, scoped, tag = 'scoped memory for lfads_teacher_forward.6']
    %10 = vsyncpa [#allocation3], 0
    %11 = vsyncpa [#allocation5], 0
    // Predicated region
    $region2: #{lfads_teacher_forward.6} parent=1 // pred_check
      _
    $region3: #{lfads_teacher_forward.6} parent=1 // pred_check_branch
      %13 = sbr.rel (0) target = $region5
    $region4: #{lfads_teacher_forward.6} parent=1 // pred_region
      _
    $region5: #{lfads_teacher_forward.6} parent=1 // pred_fallthru
      _
    // Predicated region
    $region6: #{lfads_teacher_forward.6} parent=1 // pred_check
      _
    $region7: #{lfads_teacher_forward.6} parent=1 // pred_check_branch
      %15 = sbr.rel (0) target = $region9
    $region8: #{lfads_teacher_forward.6} parent=1 // pred_region
      %17 = vsyncadd [#allocation3], 0
      %s18 = sshll.u32 %s1, 4
      %s19 = int_to_ptr.hbm [resolvable:$true] %s18
      %s20 = sshll.u32 [#allocation2], 4
      %s21 = int_to_ptr.vmem [resolvable:$true] %s20
      %26 = dma.hbm_to_vmem [thread:$0]  %s19, 6144, %s21, [#allocation3], 384, 384, 24
    $region9: #{lfads_teacher_forward.6} parent=1 // pred_fallthru
      _
    // Predicated region
    $region10: #{lfads_teacher_forward.6} parent=1 // pred_check
      _
    $region11: #{lfads_teacher_forward.6} parent=1 // pred_check_branch
      %28 = sbr.rel (0) target = $region13
    $region12: #{lfads_teacher_forward.6} parent=1 // pred_region
      _
    $region13: #{lfads_teacher_forward.6} parent=1 // pred_fallthru
      _
    // Predicated region
    $region14: #{lfads_teacher_forward.6} parent=1 // pred_check
      _
    $region15: #{lfads_teacher_forward.6} parent=1 // pred_check_branch
      %30 = sbr.rel (0) target = $region17
    $region16: #{lfads_teacher_forward.6} parent=1 // pred_region
      %32 = vsyncadd [#allocation5], 0
      %s33 = sshll.u32 %s3, 4
      %s34 = int_to_ptr.hbm [resolvable:$true] %s33
      %s35 = sshll.u32 [#allocation4], 4
      %s36 = int_to_ptr.vmem [resolvable:$true] %s35
      %41 = dma.hbm_to_vmem [thread:$0]  %s34, 2048, %s36, [#allocation5], 128, 128, 8
    $region17: #{lfads_teacher_forward.6} parent=1 // pred_fallthru
      _
    // Predicated region
    $region18: #{lfads_teacher_forward.6} parent=1 // pred_check
      _
    $region19: #{lfads_teacher_forward.6} parent=1 // pred_check_branch
      %43 = sbr.rel (0) target = $region21
    $region20: #{lfads_teacher_forward.6} parent=1 // pred_region
      _
    $region21: #{lfads_teacher_forward.6} parent=1 // pred_fallthru
      _
    // Predicated region
    $region22: #{lfads_teacher_forward.6} parent=1 // pred_check
      _
    $region23: #{lfads_teacher_forward.6} parent=1 // pred_check_branch
      %45 = sbr.rel (0) target = $region25
    $region24: #{lfads_teacher_forward.6} parent=1 // pred_region
      %47 = dma.done [#allocation3], 6144
    $region25: #{lfads_teacher_forward.6} parent=1 // pred_fallthru
      _
    // Predicated region
    $region26: #{lfads_teacher_forward.6} parent=1 // pred_check
      _
    $region27: #{lfads_teacher_forward.6} parent=1 // pred_check_branch
      %49 = sbr.rel (0) target = $region29
    $region28: #{lfads_teacher_forward.6} parent=1 // pred_region
      %51 = dma.done [#allocation5], 2048
    $region29: #{lfads_teacher_forward.6} parent=1 // pred_fallthru
      _
    %v52 = vld [vmem:[%s0] sm:$0xff]
    %v53 = vld [vmem:[%s0 + $0x8] sm:$0xff]
    %v54 = vld [vmem:[%s0 + $0x10] sm:$0xff]
    %v55 = vld [vmem:[%s0 + $0x18] sm:$0xff]
    %v56 = vld [vmem:[%s0 + $0x20] sm:$0xff]
    %v57 = vld [vmem:[%s0 + $0x28] sm:$0xff]
    %v58 = vld [vmem:[%s0 + $0x30] sm:$0xff]
    %v59 = vld [vmem:[%s0 + $0x38] sm:$0xff]
    %v60 = vld [vmem:[#allocation2] sm:$0xff]
    %v61 = vld [vmem:[#allocation2 + $0x8] sm:$0xff]
    %v62 = vld [vmem:[#allocation2 + $0x10] sm:$0xff]
    %v63 = vld [vmem:[#allocation2 + $0x18] sm:$0xff]
    %v64 = vld [vmem:[#allocation2 + $0x20] sm:$0xff]
    %v65 = vld [vmem:[#allocation2 + $0x28] sm:$0xff]
    %v66 = vld [vmem:[#allocation2 + $0x30] sm:$0xff]
    %v67 = vld [vmem:[#allocation2 + $0x38] sm:$0xff]
    %v68 = vld [vmem:[#allocation2 + $0x40] sm:$0xff]
    %v69 = vld [vmem:[#allocation2 + $0x48] sm:$0xff]
    %v70 = vld [vmem:[#allocation2 + $0x50] sm:$0xff]
    %v71 = vld [vmem:[#allocation2 + $0x58] sm:$0xff]
    %v72 = vld [vmem:[#allocation2 + $0x60] sm:$0xff]
    %v73 = vld [vmem:[#allocation2 + $0x68] sm:$0xff]
    %v74 = vld [vmem:[#allocation2 + $0x70] sm:$0xff]
    %v75 = vld [vmem:[#allocation2 + $0x78] sm:$0xff]
    %v76 = vld [vmem:[#allocation2 + $0x80] sm:$0xff]
    %v77 = vld [vmem:[#allocation2 + $0x88] sm:$0xff]
    %v78 = vld [vmem:[#allocation2 + $0x90] sm:$0xff]
    %v79 = vld [vmem:[#allocation2 + $0x98] sm:$0xff]
    %v80 = vld [vmem:[#allocation2 + $0xa0] sm:$0xff]
    %v81 = vld [vmem:[#allocation2 + $0xa8] sm:$0xff]
    %v82 = vld [vmem:[#allocation2 + $0xb0] sm:$0xff]
    %v83 = vld [vmem:[#allocation2 + $0xb8] sm:$0xff]
    %v84 = vld [vmem:[#allocation2 + $0xc0] sm:$0xff]
    %v85 = vld [vmem:[#allocation2 + $0xc8] sm:$0xff]
    %v86 = vld [vmem:[#allocation2 + $0xd0] sm:$0xff]
    %v87 = vld [vmem:[#allocation2 + $0xd8] sm:$0xff]
    %v88 = vld [vmem:[#allocation2 + $0xe0] sm:$0xff]
    %v89 = vld [vmem:[#allocation2 + $0xe8] sm:$0xff]
    %v90 = vld [vmem:[#allocation2 + $0xf0] sm:$0xff]
    %v91 = vld [vmem:[#allocation2 + $0xf8] sm:$0xff]
    %v92 = vld [vmem:[#allocation2 + $0x100] sm:$0xff]
    %v93 = vld [vmem:[#allocation2 + $0x108] sm:$0xff]
    %v94 = vld [vmem:[#allocation2 + $0x110] sm:$0xff]
    %v95 = vld [vmem:[#allocation2 + $0x118] sm:$0xff]
    %v96 = vld [vmem:[#allocation2 + $0x120] sm:$0xff]
    %v97 = vld [vmem:[#allocation2 + $0x128] sm:$0xff]
    %v98 = vld [vmem:[#allocation2 + $0x130] sm:$0xff]
    %v99 = vld [vmem:[#allocation2 + $0x138] sm:$0xff]
    %v100 = vld [vmem:[#allocation2 + $0x140] sm:$0xff]
    %v101 = vld [vmem:[#allocation2 + $0x148] sm:$0xff]
    %v102 = vld [vmem:[#allocation2 + $0x150] sm:$0xff]
    %v103 = vld [vmem:[#allocation2 + $0x158] sm:$0xff]
    %v104 = vld [vmem:[#allocation2 + $0x160] sm:$0xff]
    %v105 = vld [vmem:[#allocation2 + $0x168] sm:$0xff]
    %v106 = vld [vmem:[#allocation2 + $0x170] sm:$0xff]
    %v107 = vld [vmem:[#allocation2 + $0x178] sm:$0xff]
    %v108 = vld [vmem:[%s2] sm:$0x7]
    %v110 = vperm.slane %v108, 0
    %v111 = vperm.slane %v108, 1
    %v112 = vperm.slane %v108, 2
    %116 = vmatpush.msra.mxu0 %v105
    %117 = vmatpush.msra.mxu0 %v102
    %118 = vmatpush.msra.mxu0 %v99
    %119 = vmatpush.msra.mxu0 %v96
    %120 = vmatpush.msra.mxu0 %v93
    %121 = vmatpush.msra.mxu0 %v90
    %122 = vmatpush.msra.mxu0 %v87
    %123 = vmatpush.msra.mxu0 %v84
    %124 = vmatpush.msra.mxu0 %v81
    %125 = vmatpush.msra.mxu0 %v78
    %126 = vmatpush.msra.mxu0 %v75
    %127 = vmatpush.msra.mxu0 %v72
    %128 = vmatpush.msra.mxu0 %v69
    %129 = vmatpush.msra.mxu0 %v66
    %130 = vmatpush.msra.mxu0 %v63
    %131 = vmatpush.msra.mxu0 %v60
    %132 = vmatmul.f32.gmra.mxu0 %v52
    %v133 = vpop.f32.mrf.mxu0
    %v134 = vadd.f32 %v110, %v133
    %135 = vmatmul.f32.gmra.mxu0 %v53
    %v136 = vpop.f32.mrf.mxu0
    %v137 = vadd.f32 %v110, %v136
    %138 = vmatmul.f32.gmra.mxu0 %v54
    %v139 = vpop.f32.mrf.mxu0
    %v140 = vadd.f32 %v110, %v139
    %141 = vmatmul.f32.gmra.mxu0 %v55
    %v142 = vpop.f32.mrf.mxu0
    %v143 = vadd.f32 %v110, %v142
    %144 = vmatmul.f32.gmra.mxu0 %v56
    %v145 = vpop.f32.mrf.mxu0
    %v146 = vadd.f32 %v110, %v145
    %147 = vmatmul.f32.gmra.mxu0 %v57
    %v148 = vpop.f32.mrf.mxu0
    %v149 = vadd.f32 %v110, %v148
    %150 = vmatmul.f32.gmra.mxu0 %v58
    %v151 = vpop.f32.mrf.mxu0
    %v152 = vadd.f32 %v110, %v151
    %153 = vmatmul.f32.gmra.mxu0 %v59
    %v154 = vpop.f32.mrf.mxu0
    %v155 = vadd.f32 %v110, %v154
    %156 = vdwg.mxu0
    %157 = vmatpush.msra.mxu0 %v106
    %158 = vmatpush.msra.mxu0 %v103
    %159 = vmatpush.msra.mxu0 %v100
    %160 = vmatpush.msra.mxu0 %v97
    %161 = vmatpush.msra.mxu0 %v94
    %162 = vmatpush.msra.mxu0 %v91
    %163 = vmatpush.msra.mxu0 %v88
    %164 = vmatpush.msra.mxu0 %v85
    %165 = vmatpush.msra.mxu0 %v82
    %166 = vmatpush.msra.mxu0 %v79
    %167 = vmatpush.msra.mxu0 %v76
    %168 = vmatpush.msra.mxu0 %v73
    %169 = vmatpush.msra.mxu0 %v70
    %170 = vmatpush.msra.mxu0 %v67
    %171 = vmatpush.msra.mxu0 %v64
    %172 = vmatpush.msra.mxu0 %v61
    %173 = vmatmul.f32.gmra.mxu0 %v52
    %v174 = vpop.f32.mrf.mxu0
    %v175 = vadd.f32 %v111, %v174
    %176 = vmatmul.f32.gmra.mxu0 %v53
    %v177 = vpop.f32.mrf.mxu0
    %v178 = vadd.f32 %v111, %v177
    %179 = vmatmul.f32.gmra.mxu0 %v54
    %v180 = vpop.f32.mrf.mxu0
    %v181 = vadd.f32 %v111, %v180
    %182 = vmatmul.f32.gmra.mxu0 %v55
    %v183 = vpop.f32.mrf.mxu0
    %v184 = vadd.f32 %v111, %v183
    %185 = vmatmul.f32.gmra.mxu0 %v56
    %v186 = vpop.f32.mrf.mxu0
    %v187 = vadd.f32 %v111, %v186
    %188 = vmatmul.f32.gmra.mxu0 %v57
    %v189 = vpop.f32.mrf.mxu0
    %v190 = vadd.f32 %v111, %v189
    %191 = vmatmul.f32.gmra.mxu0 %v58
    %v192 = vpop.f32.mrf.mxu0
    %v193 = vadd.f32 %v111, %v192
    %194 = vmatmul.f32.gmra.mxu0 %v59
    %v195 = vpop.f32.mrf.mxu0
    %v196 = vadd.f32 %v111, %v195
    %197 = vdwg.mxu0
    %198 = vmatpush.msra.mxu0 %v107
    %199 = vmatpush.msra.mxu0 %v104
    %200 = vmatpush.msra.mxu0 %v101
    %201 = vmatpush.msra.mxu0 %v98
    %202 = vmatpush.msra.mxu0 %v95
    %203 = vmatpush.msra.mxu0 %v92
    %204 = vmatpush.msra.mxu0 %v89
    %205 = vmatpush.msra.mxu0 %v86
    %206 = vmatpush.msra.mxu0 %v83
    %207 = vmatpush.msra.mxu0 %v80
    %208 = vmatpush.msra.mxu0 %v77
    %209 = vmatpush.msra.mxu0 %v74
    %210 = vmatpush.msra.mxu0 %v71
    %211 = vmatpush.msra.mxu0 %v68
    %212 = vmatpush.msra.mxu0 %v65
    %213 = vmatpush.msra.mxu0 %v62
    %214 = vmatmul.f32.gmra.mxu0 %v52
    %v215 = vpop.f32.mrf.mxu0
    %v216 = vadd.f32 %v112, %v215
    %217 = vmatmul.f32.gmra.mxu0 %v53
    %v218 = vpop.f32.mrf.mxu0
    %v219 = vadd.f32 %v112, %v218
    %220 = vmatmul.f32.gmra.mxu0 %v54
    %v221 = vpop.f32.mrf.mxu0
    %v222 = vadd.f32 %v112, %v221
    %223 = vmatmul.f32.gmra.mxu0 %v55
    %v224 = vpop.f32.mrf.mxu0
    %v225 = vadd.f32 %v112, %v224
    %226 = vmatmul.f32.gmra.mxu0 %v56
    %v227 = vpop.f32.mrf.mxu0
    %v228 = vadd.f32 %v112, %v227
    %229 = vmatmul.f32.gmra.mxu0 %v57
    %v230 = vpop.f32.mrf.mxu0
    %v231 = vadd.f32 %v112, %v230
    %232 = vmatmul.f32.gmra.mxu0 %v58
    %v233 = vpop.f32.mrf.mxu0
    %v234 = vadd.f32 %v112, %v233
    %235 = vmatmul.f32.gmra.mxu0 %v59
    %v236 = vpop.f32.mrf.mxu0
    %v237 = vadd.f32 %v112, %v236
    %238 = vdwg.mxu0
    %v239 = vrot.slane %v140, 4
    %vm240 = vcmask 1047556
    %v241 = vsel %vm240, %v239, %v134
    %v242 = vrot.slane %v134, 4
    %v243 = vsel %vm240, %v140, %v242
    %v245 = vunpack.c.l.s4 1983009808
    %v246 = vunpack.c.0.s8 %v245
    %v247 = vperm.slane %v241, %v246
    %v249 = vunpack.c.l.s4 1983009808
    %v250 = vunpack.c.0.s8 %v249
    %v251 = vperm.slane %v243, %v250
    %v252 = vrot.slane %v143, 4
    %v253 = vsel %vm240, %v252, %v137
    %v254 = vrot.slane %v137, 4
    %v255 = vsel %vm240, %v143, %v254
    %v257 = vunpack.c.l.s4 1983009808
    %v258 = vunpack.c.0.s8 %v257
    %v259 = vperm.slane %v253, %v258
    %v261 = vunpack.c.l.s4 1983009808
    %v262 = vunpack.c.0.s8 %v261
    %v263 = vperm.slane %v255, %v262
    %v264 = vrot.slane %v152, 4
    %v265 = vsel %vm240, %v264, %v146
    %v266 = vrot.slane %v146, 4
    %v267 = vsel %vm240, %v152, %v266
    %v269 = vunpack.c.l.s4 1983009808
    %v270 = vunpack.c.0.s8 %v269
    %v271 = vperm.slane %v265, %v270
    %v273 = vunpack.c.l.s4 1983009808
    %v274 = vunpack.c.0.s8 %v273
    %v275 = vperm.slane %v267, %v274
    %v276 = vrot.slane %v155, 4
    %v277 = vsel %vm240, %v276, %v149
    %v278 = vrot.slane %v149, 4
    %v279 = vsel %vm240, %v155, %v278
    %v281 = vunpack.c.l.s4 1983009808
    %v282 = vunpack.c.0.s8 %v281
    %v283 = vperm.slane %v277, %v282
    %v285 = vunpack.c.l.s4 1983009808
    %v286 = vunpack.c.0.s8 %v285
    %v287 = vperm.slane %v279, %v286
    %v288 = vrot.slane %v259, 4
    %v289 = vsel %vm240, %v288, %v247
    %v290 = vrot.slane %v247, 4
    %v291 = vsel %vm240, %v259, %v290
    %v293 = vunpack.c.l.s4 1934713408
    %v294 = vunpack.c.0.s8 %v293
    %v295 = vperm.slane %v289, %v294
    %v297 = vunpack.c.l.s4 1934713408
    %v298 = vunpack.c.0.s8 %v297
    %v299 = vperm.slane %v291, %v298
    %v300 = vrot.slane %v263, 4
    %v301 = vsel %vm240, %v300, %v251
    %v302 = vrot.slane %v251, 4
    %v303 = vsel %vm240, %v263, %v302
    %v305 = vunpack.c.l.s4 1934713408
    %v306 = vunpack.c.0.s8 %v305
    %v307 = vperm.slane %v301, %v306
    %v309 = vunpack.c.l.s4 1934713408
    %v310 = vunpack.c.0.s8 %v309
    %v311 = vperm.slane %v303, %v310
    %v312 = vrot.slane %v283, 4
    %v313 = vsel %vm240, %v312, %v271
    %v314 = vrot.slane %v271, 4
    %v315 = vsel %vm240, %v283, %v314
    %v317 = vunpack.c.l.s4 1934713408
    %v318 = vunpack.c.0.s8 %v317
    %v319 = vperm.slane %v313, %v318
    %v321 = vunpack.c.l.s4 1934713408
    %v322 = vunpack.c.0.s8 %v321
    %v323 = vperm.slane %v315, %v322
    %v324 = vrot.slane %v287, 4
    %v325 = vsel %vm240, %v324, %v275
    %v326 = vrot.slane %v275, 4
    %v327 = vsel %vm240, %v287, %v326
    %v329 = vunpack.c.l.s4 1934713408
    %v330 = vunpack.c.0.s8 %v329
    %v331 = vperm.slane %v325, %v330
    %v333 = vunpack.c.l.s4 1934713408
    %v334 = vunpack.c.0.s8 %v333
    %v335 = vperm.slane %v327, %v334
    %v336 = vrot.slane %v319, 4
    %v337 = vsel %vm240, %v336, %v295
    %v338 = vrot.slane %v295, 4
    %v339 = vsel %vm240, %v319, %v338
    %v340 = vrot.slane %v323, 4
    %v341 = vsel %vm240, %v340, %v299
    %v342 = vrot.slane %v299, 4
    %v343 = vsel %vm240, %v323, %v342
    %v344 = vrot.slane %v331, 4
    %v345 = vsel %vm240, %v344, %v307
    %v346 = vrot.slane %v307, 4
    %v347 = vsel %vm240, %v331, %v346
    %v348 = vrot.slane %v335, 4
    %v349 = vsel %vm240, %v348, %v311
    %v350 = vrot.slane %v311, 4
    %v351 = vsel %vm240, %v335, %v350
    %v352 = vrot.slane %v181, 4
    %v353 = vsel %vm240, %v352, %v175
    %v354 = vrot.slane %v175, 4
    %v355 = vsel %vm240, %v181, %v354
    %v357 = vunpack.c.l.s4 1983009808
    %v358 = vunpack.c.0.s8 %v357
    %v359 = vperm.slane %v353, %v358
    %v361 = vunpack.c.l.s4 1983009808
    %v362 = vunpack.c.0.s8 %v361
    %v363 = vperm.slane %v355, %v362
    %v364 = vrot.slane %v184, 4
    %v365 = vsel %vm240, %v364, %v178
    %v366 = vrot.slane %v178, 4
    %v367 = vsel %vm240, %v184, %v366
    %v369 = vunpack.c.l.s4 1983009808
    %v370 = vunpack.c.0.s8 %v369
    %v371 = vperm.slane %v365, %v370
    %v373 = vunpack.c.l.s4 1983009808
    %v374 = vunpack.c.0.s8 %v373
    %v375 = vperm.slane %v367, %v374
    %v376 = vrot.slane %v193, 4
    %v377 = vsel %vm240, %v376, %v187
    %v378 = vrot.slane %v187, 4
    %v379 = vsel %vm240, %v193, %v378
    %v381 = vunpack.c.l.s4 1983009808
    %v382 = vunpack.c.0.s8 %v381
    %v383 = vperm.slane %v377, %v382
    %v385 = vunpack.c.l.s4 1983009808
    %v386 = vunpack.c.0.s8 %v385
    %v387 = vperm.slane %v379, %v386
    %v388 = vrot.slane %v196, 4
    %v389 = vsel %vm240, %v388, %v190
    %v390 = vrot.slane %v190, 4
    %v391 = vsel %vm240, %v196, %v390
    %v393 = vunpack.c.l.s4 1983009808
    %v394 = vunpack.c.0.s8 %v393
    %v395 = vperm.slane %v389, %v394
    %v397 = vunpack.c.l.s4 1983009808
    %v398 = vunpack.c.0.s8 %v397
    %v399 = vperm.slane %v391, %v398
    %v400 = vrot.slane %v371, 4
    %v401 = vsel %vm240, %v400, %v359
    %v402 = vrot.slane %v359, 4
    %v403 = vsel %vm240, %v371, %v402
    %v405 = vunpack.c.l.s4 1934713408
    %v406 = vunpack.c.0.s8 %v405
    %v407 = vperm.slane %v401, %v406
    %v409 = vunpack.c.l.s4 1934713408
    %v410 = vunpack.c.0.s8 %v409
    %v411 = vperm.slane %v403, %v410
    %v412 = vrot.slane %v375, 4
    %v413 = vsel %vm240, %v412, %v363
    %v414 = vrot.slane %v363, 4
    %v415 = vsel %vm240, %v375, %v414
    %v417 = vunpack.c.l.s4 1934713408
    %v418 = vunpack.c.0.s8 %v417
    %v419 = vperm.slane %v413, %v418
    %v421 = vunpack.c.l.s4 1934713408
    %v422 = vunpack.c.0.s8 %v421
    %v423 = vperm.slane %v415, %v422
    %v424 = vrot.slane %v395, 4
    %v425 = vsel %vm240, %v424, %v383
    %v426 = vrot.slane %v383, 4
    %v427 = vsel %vm240, %v395, %v426
    %v429 = vunpack.c.l.s4 1934713408
    %v430 = vunpack.c.0.s8 %v429
    %v431 = vperm.slane %v425, %v430
    %v433 = vunpack.c.l.s4 1934713408
    %v434 = vunpack.c.0.s8 %v433
    %v435 = vperm.slane %v427, %v434
    %v436 = vrot.slane %v399, 4
    %v437 = vsel %vm240, %v436, %v387
    %v438 = vrot.slane %v387, 4
    %v439 = vsel %vm240, %v399, %v438
    %v441 = vunpack.c.l.s4 1934713408
    %v442 = vunpack.c.0.s8 %v441
    %v443 = vperm.slane %v437, %v442
    %v445 = vunpack.c.l.s4 1934713408
    %v446 = vunpack.c.0.s8 %v445
    %v447 = vperm.slane %v439, %v446
    %v448 = vrot.slane %v431, 4
    %v449 = vsel %vm240, %v448, %v407
    %v450 = vrot.slane %v407, 4
    %v451 = vsel %vm240, %v431, %v450
    %v452 = vrot.slane %v435, 4
    %v453 = vsel %vm240, %v452, %v411
    %v454 = vrot.slane %v411, 4
    %v455 = vsel %vm240, %v435, %v454
    %v456 = vrot.slane %v443, 4
    %v457 = vsel %vm240, %v456, %v419
    %v458 = vrot.slane %v419, 4
    %v459 = vsel %vm240, %v443, %v458
    %v460 = vrot.slane %v447, 4
    %v461 = vsel %vm240, %v460, %v423
    %v462 = vrot.slane %v423, 4
    %v463 = vsel %vm240, %v447, %v462
    %v464 = vrot.slane %v222, 4
    %v465 = vsel %vm240, %v464, %v216
    %v466 = vrot.slane %v216, 4
    %v467 = vsel %vm240, %v222, %v466
    %v469 = vunpack.c.l.s4 1983009808
    %v470 = vunpack.c.0.s8 %v469
    %v471 = vperm.slane %v465, %v470
    %v473 = vunpack.c.l.s4 1983009808
    %v474 = vunpack.c.0.s8 %v473
    %v475 = vperm.slane %v467, %v474
    %v476 = vrot.slane %v225, 4
    %v477 = vsel %vm240, %v476, %v219
    %v478 = vrot.slane %v219, 4
    %v479 = vsel %vm240, %v225, %v478
    %v481 = vunpack.c.l.s4 1983009808
    %v482 = vunpack.c.0.s8 %v481
    %v483 = vperm.slane %v477, %v482
    %v485 = vunpack.c.l.s4 1983009808
    %v486 = vunpack.c.0.s8 %v485
    %v487 = vperm.slane %v479, %v486
    %v488 = vrot.slane %v234, 4
    %v489 = vsel %vm240, %v488, %v228
    %v490 = vrot.slane %v228, 4
    %v491 = vsel %vm240, %v234, %v490
    %v493 = vunpack.c.l.s4 1983009808
    %v494 = vunpack.c.0.s8 %v493
    %v495 = vperm.slane %v489, %v494
    %v497 = vunpack.c.l.s4 1983009808
    %v498 = vunpack.c.0.s8 %v497
    %v499 = vperm.slane %v491, %v498
    %v500 = vrot.slane %v237, 4
    %v501 = vsel %vm240, %v500, %v231
    %v502 = vrot.slane %v231, 4
    %v503 = vsel %vm240, %v237, %v502
    %v505 = vunpack.c.l.s4 1983009808
    %v506 = vunpack.c.0.s8 %v505
    %v507 = vperm.slane %v501, %v506
    %v509 = vunpack.c.l.s4 1983009808
    %v510 = vunpack.c.0.s8 %v509
    %v511 = vperm.slane %v503, %v510
    %v512 = vrot.slane %v483, 4
    %v513 = vsel %vm240, %v512, %v471
    %v514 = vrot.slane %v471, 4
    %v515 = vsel %vm240, %v483, %v514
    %v517 = vunpack.c.l.s4 1934713408
    %v518 = vunpack.c.0.s8 %v517
    %v519 = vperm.slane %v513, %v518
    %v521 = vunpack.c.l.s4 1934713408
    %v522 = vunpack.c.0.s8 %v521
    %v523 = vperm.slane %v515, %v522
    %v524 = vrot.slane %v487, 4
    %v525 = vsel %vm240, %v524, %v475
    %v526 = vrot.slane %v475, 4
    %v527 = vsel %vm240, %v487, %v526
    %v529 = vunpack.c.l.s4 1934713408
    %v530 = vunpack.c.0.s8 %v529
    %v531 = vperm.slane %v525, %v530
    %v533 = vunpack.c.l.s4 1934713408
    %v534 = vunpack.c.0.s8 %v533
    %v535 = vperm.slane %v527, %v534
    %v536 = vrot.slane %v507, 4
    %v537 = vsel %vm240, %v536, %v495
    %v538 = vrot.slane %v495, 4
    %v539 = vsel %vm240, %v507, %v538
    %v541 = vunpack.c.l.s4 1934713408
    %v542 = vunpack.c.0.s8 %v541
    %v543 = vperm.slane %v537, %v542
    %v545 = vunpack.c.l.s4 1934713408
    %v546 = vunpack.c.0.s8 %v545
    %v547 = vperm.slane %v539, %v546
    %v548 = vrot.slane %v511, 4
    %v549 = vsel %vm240, %v548, %v499
    %v550 = vrot.slane %v499, 4
    %v551 = vsel %vm240, %v511, %v550
    %v553 = vunpack.c.l.s4 1934713408
    %v554 = vunpack.c.0.s8 %v553
    %v555 = vperm.slane %v549, %v554
    %v557 = vunpack.c.l.s4 1934713408
    %v558 = vunpack.c.0.s8 %v557
    %v559 = vperm.slane %v551, %v558
    %v560 = vrot.slane %v543, 4
    %v561 = vsel %vm240, %v560, %v519
    %v562 = vrot.slane %v519, 4
    %v563 = vsel %vm240, %v543, %v562
    %v564 = vrot.slane %v547, 4
    %v565 = vsel %vm240, %v564, %v523
    %v566 = vrot.slane %v523, 4
    %v567 = vsel %vm240, %v547, %v566
    %v568 = vrot.slane %v555, 4
    %v569 = vsel %vm240, %v568, %v531
    %v570 = vrot.slane %v531, 4
    %v571 = vsel %vm240, %v555, %v570
    %v572 = vrot.slane %v559, 4
    %v573 = vsel %vm240, %v572, %v535
    %v574 = vrot.slane %v535, 4
    %v575 = vsel %vm240, %v559, %v574
    %576 = vmatpush.xpose.msra.mxu0 0.0
    %577 = vmatpush.xpose.msra.mxu0 0.0
    %578 = vmatpush.xpose.msra.mxu0 0.0
    %579 = vmatpush.xpose.msra.mxu0 0.0
    %580 = vmatpush.xpose.msra.mxu0 0.0
    %581 = vmatpush.xpose.msra.mxu0 0.0
    %582 = vmatpush.xpose.msra.mxu0 0.0
    %583 = vmatpush.xpose.msra.mxu0 0.0
    %584 = vmatpush.xpose.msra.mxu0 0.0
    %585 = vmatpush.xpose.msra.mxu0 0.0
    %586 = vmatpush.xpose.msra.mxu0 0.0
    %587 = vmatpush.xpose.msra.mxu0 0.0
    %588 = vmatpush.xpose.msra.mxu0 0.0
    %589 = vmatpush.xpose.msra.mxu0 0.0
    %590 = vmatpush.xpose.msra.mxu0 0.0
    %591 = vmatpush.xpose.msra.mxu0 %v449
    %592 = vmatmul.f32.gmra.mxu0 %v337
    %v593 = vpop.f32.mrf.mxu0
    %v594 = vadd.f32 0.0, %v593
    %595 = vdwg.mxu0
    %596 = vmatpush.xpose.msra.mxu0 0.0
    %597 = vmatpush.xpose.msra.mxu0 0.0
    %598 = vmatpush.xpose.msra.mxu0 0.0
    %599 = vmatpush.xpose.msra.mxu0 0.0
    %600 = vmatpush.xpose.msra.mxu0 0.0
    %601 = vmatpush.xpose.msra.mxu0 0.0
    %602 = vmatpush.xpose.msra.mxu0 0.0
    %603 = vmatpush.xpose.msra.mxu0 0.0
    %604 = vmatpush.xpose.msra.mxu0 0.0
    %605 = vmatpush.xpose.msra.mxu0 0.0
    %606 = vmatpush.xpose.msra.mxu0 0.0
    %607 = vmatpush.xpose.msra.mxu0 0.0
    %608 = vmatpush.xpose.msra.mxu0 0.0
    %609 = vmatpush.xpose.msra.mxu0 0.0
    %610 = vmatpush.xpose.msra.mxu0 0.0
    %611 = vmatpush.xpose.msra.mxu0 %v451
    %612 = vmatmul.f32.gmra.mxu0 %v339
    %v613 = vpop.f32.mrf.mxu0
    %v614 = vadd.f32 0.0, %v613
    %615 = vdwg.mxu0
    %616 = vmatpush.xpose.msra.mxu0 0.0
    %617 = vmatpush.xpose.msra.mxu0 0.0
    %618 = vmatpush.xpose.msra.mxu0 0.0
    %619 = vmatpush.xpose.msra.mxu0 0.0
    %620 = vmatpush.xpose.msra.mxu0 0.0
    %621 = vmatpush.xpose.msra.mxu0 0.0
    %622 = vmatpush.xpose.msra.mxu0 0.0
    %623 = vmatpush.xpose.msra.mxu0 0.0
    %624 = vmatpush.xpose.msra.mxu0 0.0
    %625 = vmatpush.xpose.msra.mxu0 0.0
    %626 = vmatpush.xpose.msra.mxu0 0.0
    %627 = vmatpush.xpose.msra.mxu0 0.0
    %628 = vmatpush.xpose.msra.mxu0 0.0
    %629 = vmatpush.xpose.msra.mxu0 0.0
    %630 = vmatpush.xpose.msra.mxu0 0.0
    %631 = vmatpush.xpose.msra.mxu0 %v453
    %632 = vmatmul.f32.gmra.mxu0 %v341
    %v633 = vpop.f32.mrf.mxu0
    %v634 = vadd.f32 0.0, %v633
    %635 = vdwg.mxu0
    %636 = vmatpush.xpose.msra.mxu0 0.0
    %637 = vmatpush.xpose.msra.mxu0 0.0
    %638 = vmatpush.xpose.msra.mxu0 0.0
    %639 = vmatpush.xpose.msra.mxu0 0.0
    %640 = vmatpush.xpose.msra.mxu0 0.0
    %641 = vmatpush.xpose.msra.mxu0 0.0
    %642 = vmatpush.xpose.msra.mxu0 0.0
    %643 = vmatpush.xpose.msra.mxu0 0.0
    %644 = vmatpush.xpose.msra.mxu0 0.0
    %645 = vmatpush.xpose.msra.mxu0 0.0
    %646 = vmatpush.xpose.msra.mxu0 0.0
    %647 = vmatpush.xpose.msra.mxu0 0.0
    %648 = vmatpush.xpose.msra.mxu0 0.0
    %649 = vmatpush.xpose.msra.mxu0 0.0
    %650 = vmatpush.xpose.msra.mxu0 0.0
    %651 = vmatpush.xpose.msra.mxu0 %v455
    %652 = vmatmul.f32.gmra.mxu0 %v343
    %v653 = vpop.f32.mrf.mxu0
    %v654 = vadd.f32 0.0, %v653
    %655 = vdwg.mxu0
    %656 = vmatpush.xpose.msra.mxu0 0.0
    %657 = vmatpush.xpose.msra.mxu0 0.0
    %658 = vmatpush.xpose.msra.mxu0 0.0
    %659 = vmatpush.xpose.msra.mxu0 0.0
    %660 = vmatpush.xpose.msra.mxu0 0.0
    %661 = vmatpush.xpose.msra.mxu0 0.0
    %662 = vmatpush.xpose.msra.mxu0 0.0
    %663 = vmatpush.xpose.msra.mxu0 0.0
    %664 = vmatpush.xpose.msra.mxu0 0.0
    %665 = vmatpush.xpose.msra.mxu0 0.0
    %666 = vmatpush.xpose.msra.mxu0 0.0
    %667 = vmatpush.xpose.msra.mxu0 0.0
    %668 = vmatpush.xpose.msra.mxu0 0.0
    %669 = vmatpush.xpose.msra.mxu0 0.0
    %670 = vmatpush.xpose.msra.mxu0 0.0
    %671 = vmatpush.xpose.msra.mxu0 %v457
    %672 = vmatmul.f32.gmra.mxu0 %v345
    %v673 = vpop.f32.mrf.mxu0
    %v674 = vadd.f32 0.0, %v673
    %675 = vdwg.mxu0
    %676 = vmatpush.xpose.msra.mxu0 0.0
    %677 = vmatpush.xpose.msra.mxu0 0.0
    %678 = vmatpush.xpose.msra.mxu0 0.0
    %679 = vmatpush.xpose.msra.mxu0 0.0
    %680 = vmatpush.xpose.msra.mxu0 0.0
    %681 = vmatpush.xpose.msra.mxu0 0.0
    %682 = vmatpush.xpose.msra.mxu0 0.0
    %683 = vmatpush.xpose.msra.mxu0 0.0
    %684 = vmatpush.xpose.msra.mxu0 0.0
    %685 = vmatpush.xpose.msra.mxu0 0.0
    %686 = vmatpush.xpose.msra.mxu0 0.0
    %687 = vmatpush.xpose.msra.mxu0 0.0
    %688 = vmatpush.xpose.msra.mxu0 0.0
    %689 = vmatpush.xpose.msra.mxu0 0.0
    %690 = vmatpush.xpose.msra.mxu0 0.0
    %691 = vmatpush.xpose.msra.mxu0 %v459
    %692 = vmatmul.f32.gmra.mxu0 %v347
    %v693 = vpop.f32.mrf.mxu0
    %v694 = vadd.f32 0.0, %v693
    %695 = vdwg.mxu0
    %696 = vmatpush.xpose.msra.mxu0 0.0
    %697 = vmatpush.xpose.msra.mxu0 0.0
    %698 = vmatpush.xpose.msra.mxu0 0.0
    %699 = vmatpush.xpose.msra.mxu0 0.0
    %700 = vmatpush.xpose.msra.mxu0 0.0
    %701 = vmatpush.xpose.msra.mxu0 0.0
    %702 = vmatpush.xpose.msra.mxu0 0.0
    %703 = vmatpush.xpose.msra.mxu0 0.0
    %704 = vmatpush.xpose.msra.mxu0 0.0
    %705 = vmatpush.xpose.msra.mxu0 0.0
    %706 = vmatpush.xpose.msra.mxu0 0.0
    %707 = vmatpush.xpose.msra.mxu0 0.0
    %708 = vmatpush.xpose.msra.mxu0 0.0
    %709 = vmatpush.xpose.msra.mxu0 0.0
    %710 = vmatpush.xpose.msra.mxu0 0.0
    %711 = vmatpush.xpose.msra.mxu0 %v461
    %712 = vmatmul.f32.gmra.mxu0 %v349
    %v713 = vpop.f32.mrf.mxu0
    %v714 = vadd.f32 0.0, %v713
    %715 = vdwg.mxu0
    %716 = vmatpush.xpose.msra.mxu0 0.0
    %717 = vmatpush.xpose.msra.mxu0 0.0
    %718 = vmatpush.xpose.msra.mxu0 0.0
    %719 = vmatpush.xpose.msra.mxu0 0.0
    %720 = vmatpush.xpose.msra.mxu0 0.0
    %721 = vmatpush.xpose.msra.mxu0 0.0
    %722 = vmatpush.xpose.msra.mxu0 0.0
    %723 = vmatpush.xpose.msra.mxu0 0.0
    %724 = vmatpush.xpose.msra.mxu0 0.0
    %725 = vmatpush.xpose.msra.mxu0 0.0
    %726 = vmatpush.xpose.msra.mxu0 0.0
    %727 = vmatpush.xpose.msra.mxu0 0.0
    %728 = vmatpush.xpose.msra.mxu0 0.0
    %729 = vmatpush.xpose.msra.mxu0 0.0
    %730 = vmatpush.xpose.msra.mxu0 0.0
    %731 = vmatpush.xpose.msra.mxu0 %v463
    %732 = vmatmul.f32.gmra.mxu0 %v351
    %v733 = vpop.f32.mrf.mxu0
    %v734 = vadd.f32 0.0, %v733
    %735 = vdwg.mxu0
    %v736 = vmul.f32 %v594, 0.12126781
    %v737 = vmul.f32 %v614, 0.12126781
    %v738 = vmul.f32 %v634, 0.12126781
    %v739 = vmul.f32 %v654, 0.12126781
    %v740 = vmul.f32 %v674, 0.12126781
    %v741 = vmul.f32 %v694, 0.12126781
    %v742 = vmul.f32 %v714, 0.12126781
    %v743 = vmul.f32 %v734, 0.12126781
    %vm744 = vcmask 64512
    %v745 = vsel %vm744, %v736, -inf
    %746 = vmax.xlane.f32.xlu0 %v745
    %v747 = vpop.xlane.xlu0 %746
    %v748 = vsel %vm744, %v737, -inf
    %749 = vmax.xlane.f32.xlu0 %v748
    %v750 = vpop.xlane.xlu0 %749
    %v751 = vsel %vm744, %v738, -inf
    %752 = vmax.xlane.f32.xlu0 %v751
    %v753 = vpop.xlane.xlu0 %752
    %v754 = vsel %vm744, %v739, -inf
    %755 = vmax.xlane.f32.xlu0 %v754
    %v756 = vpop.xlane.xlu0 %755
    %v757 = vsel %vm744, %v740, -inf
    %758 = vmax.xlane.f32.xlu0 %v757
    %v759 = vpop.xlane.xlu0 %758
    %v760 = vsel %vm744, %v741, -inf
    %761 = vmax.xlane.f32.xlu0 %v760
    %v762 = vpop.xlane.xlu0 %761
    %v763 = vsel %vm744, %v742, -inf
    %764 = vmax.xlane.f32.xlu0 %v763
    %v765 = vpop.xlane.xlu0 %764
    %v766 = vsel %vm744, %v743, -inf
    %767 = vmax.xlane.f32.xlu0 %v766
    %v768 = vpop.xlane.xlu0 %767
    %v769 = vsub.f32 %v736, %v747
    %v770 = vsub.f32 %v737, %v750
    %v771 = vsub.f32 %v738, %v753
    %v772 = vsub.f32 %v739, %v756
    %v773 = vsub.f32 %v740, %v759
    %v774 = vsub.f32 %v741, %v762
    %v775 = vsub.f32 %v742, %v765
    %v776 = vsub.f32 %v743, %v768
    %v777 = vmul.f32 %v769, 1.442695
    %v778 = vpow.pop %v777
    %v779 = vmul.f32 %v770, 1.442695
    %v780 = vpow.pop %v779
    %v781 = vmul.f32 %v771, 1.442695
    %v782 = vpow.pop %v781
    %v783 = vmul.f32 %v772, 1.442695
    %v784 = vpow.pop %v783
    %v785 = vmul.f32 %v773, 1.442695
    %v786 = vpow.pop %v785
    %v787 = vmul.f32 %v774, 1.442695
    %v788 = vpow.pop %v787
    %v789 = vmul.f32 %v775, 1.442695
    %v790 = vpow.pop %v789
    %v791 = vmul.f32 %v776, 1.442695
    %v792 = vpow.pop %v791
    %v793 = vsel %vm744, %v778, 0.0
    %794 = vadd.xlane.f32.xlu0 %v793
    %v795 = vpop.xlane.xlu0 %794
    %v796 = vsel %vm744, %v780, 0.0
    %797 = vadd.xlane.f32.xlu0 %v796
    %v798 = vpop.xlane.xlu0 %797
    %v799 = vsel %vm744, %v782, 0.0
    %800 = vadd.xlane.f32.xlu0 %v799
    %v801 = vpop.xlane.xlu0 %800
    %v802 = vsel %vm744, %v784, 0.0
    %803 = vadd.xlane.f32.xlu0 %v802
    %v804 = vpop.xlane.xlu0 %803
    %v805 = vsel %vm744, %v786, 0.0
    %806 = vadd.xlane.f32.xlu0 %v805
    %v807 = vpop.xlane.xlu0 %806
    %v808 = vsel %vm744, %v788, 0.0
    %809 = vadd.xlane.f32.xlu0 %v808
    %v810 = vpop.xlane.xlu0 %809
    %v811 = vsel %vm744, %v790, 0.0
    %812 = vadd.xlane.f32.xlu0 %v811
    %v813 = vpop.xlane.xlu0 %812
    %v814 = vsel %vm744, %v792, 0.0
    %815 = vadd.xlane.f32.xlu0 %v814
    %v816 = vpop.xlane.xlu0 %815
    %v817 = vrcp.pop %v795
    %v818 = vrcp.pop %v798
    %v819 = vrcp.pop %v801
    %v820 = vrcp.pop %v804
    %v821 = vrcp.pop %v807
    %v822 = vrcp.pop %v810
    %v823 = vrcp.pop %v813
    %v824 = vrcp.pop %v816
    %v825 = vmul.f32 %v778, %v817
    %v826 = vmul.f32 %v780, %v818
    %v827 = vmul.f32 %v782, %v819
    %v828 = vmul.f32 %v784, %v820
    %v829 = vmul.f32 %v786, %v821
    %v830 = vmul.f32 %v788, %v822
    %v831 = vmul.f32 %v790, %v823
    %v832 = vmul.f32 %v792, %v824
    %v834 = vsel %vm744, %v825, 0
    %836 = vmatpush.msra.mxu0 0.0
    %837 = vmatpush.msra.mxu0 0.0
    %838 = vmatpush.msra.mxu0 0.0
    %839 = vmatpush.msra.mxu0 0.0
    %840 = vmatpush.msra.mxu0 0.0
    %841 = vmatpush.msra.mxu0 0.0
    %842 = vmatpush.msra.mxu0 0.0
    %843 = vmatpush.msra.mxu0 0.0
    %844 = vmatpush.msra.mxu0 0.0
    %845 = vmatpush.msra.mxu0 0.0
    %846 = vmatpush.msra.mxu0 0.0
    %847 = vmatpush.msra.mxu0 0.0
    %848 = vmatpush.msra.mxu0 0.0
    %849 = vmatpush.msra.mxu0 0.0
    %850 = vmatpush.msra.mxu0 0.0
    %851 = vmatpush.msra.mxu0 %v561
    %852 = vmatmul.f32.gmra.mxu0 %v834
    %v853 = vpop.f32.mrf.mxu0
    %v854 = vadd.f32 0.0, %v853
    %855 = vdwg.mxu0
    %v857 = vsel %vm744, %v826, 0
    %859 = vmatpush.msra.mxu0 0.0
    %860 = vmatpush.msra.mxu0 0.0
    %861 = vmatpush.msra.mxu0 0.0
    %862 = vmatpush.msra.mxu0 0.0
    %863 = vmatpush.msra.mxu0 0.0
    %864 = vmatpush.msra.mxu0 0.0
    %865 = vmatpush.msra.mxu0 0.0
    %866 = vmatpush.msra.mxu0 0.0
    %867 = vmatpush.msra.mxu0 0.0
    %868 = vmatpush.msra.mxu0 0.0
    %869 = vmatpush.msra.mxu0 0.0
    %870 = vmatpush.msra.mxu0 0.0
    %871 = vmatpush.msra.mxu0 0.0
    %872 = vmatpush.msra.mxu0 0.0
    %873 = vmatpush.msra.mxu0 0.0
    %874 = vmatpush.msra.mxu0 %v563
    %875 = vmatmul.f32.gmra.mxu0 %v857
    %v876 = vpop.f32.mrf.mxu0
    %v877 = vadd.f32 0.0, %v876
    %878 = vdwg.mxu0
    %v880 = vsel %vm744, %v827, 0
    %882 = vmatpush.msra.mxu0 0.0
    %883 = vmatpush.msra.mxu0 0.0
    %884 = vmatpush.msra.mxu0 0.0
    %885 = vmatpush.msra.mxu0 0.0
    %886 = vmatpush.msra.mxu0 0.0
    %887 = vmatpush.msra.mxu0 0.0
    %888 = vmatpush.msra.mxu0 0.0
    %889 = vmatpush.msra.mxu0 0.0
    %890 = vmatpush.msra.mxu0 0.0
    %891 = vmatpush.msra.mxu0 0.0
    %892 = vmatpush.msra.mxu0 0.0
    %893 = vmatpush.msra.mxu0 0.0
    %894 = vmatpush.msra.mxu0 0.0
    %895 = vmatpush.msra.mxu0 0.0
    %896 = vmatpush.msra.mxu0 0.0
    %897 = vmatpush.msra.mxu0 %v565
    %898 = vmatmul.f32.gmra.mxu0 %v880
    %v899 = vpop.f32.mrf.mxu0
    %v900 = vadd.f32 0.0, %v899
    %901 = vdwg.mxu0
    %v903 = vsel %vm744, %v828, 0
    %905 = vmatpush.msra.mxu0 0.0
    %906 = vmatpush.msra.mxu0 0.0
    %907 = vmatpush.msra.mxu0 0.0
    %908 = vmatpush.msra.mxu0 0.0
    %909 = vmatpush.msra.mxu0 0.0
    %910 = vmatpush.msra.mxu0 0.0
    %911 = vmatpush.msra.mxu0 0.0
    %912 = vmatpush.msra.mxu0 0.0
    %913 = vmatpush.msra.mxu0 0.0
    %914 = vmatpush.msra.mxu0 0.0
    %915 = vmatpush.msra.mxu0 0.0
    %916 = vmatpush.msra.mxu0 0.0
    %917 = vmatpush.msra.mxu0 0.0
    %918 = vmatpush.msra.mxu0 0.0
    %919 = vmatpush.msra.mxu0 0.0
    %920 = vmatpush.msra.mxu0 %v567
    %921 = vmatmul.f32.gmra.mxu0 %v903
    %v922 = vpop.f32.mrf.mxu0
    %v923 = vadd.f32 0.0, %v922
    %924 = vdwg.mxu0
    %v926 = vsel %vm744, %v829, 0
    %928 = vmatpush.msra.mxu0 0.0
    %929 = vmatpush.msra.mxu0 0.0
    %930 = vmatpush.msra.mxu0 0.0
    %931 = vmatpush.msra.mxu0 0.0
    %932 = vmatpush.msra.mxu0 0.0
    %933 = vmatpush.msra.mxu0 0.0
    %934 = vmatpush.msra.mxu0 0.0
    %935 = vmatpush.msra.mxu0 0.0
    %936 = vmatpush.msra.mxu0 0.0
    %937 = vmatpush.msra.mxu0 0.0
    %938 = vmatpush.msra.mxu0 0.0
    %939 = vmatpush.msra.mxu0 0.0
    %940 = vmatpush.msra.mxu0 0.0
    %941 = vmatpush.msra.mxu0 0.0
    %942 = vmatpush.msra.mxu0 0.0
    %943 = vmatpush.msra.mxu0 %v569
    %944 = vmatmul.f32.gmra.mxu0 %v926
    %v945 = vpop.f32.mrf.mxu0
    %v946 = vadd.f32 0.0, %v945
    %947 = vdwg.mxu0
    %v949 = vsel %vm744, %v830, 0
    %951 = vmatpush.msra.mxu0 0.0
    %952 = vmatpush.msra.mxu0 0.0
    %953 = vmatpush.msra.mxu0 0.0
    %954 = vmatpush.msra.mxu0 0.0
    %955 = vmatpush.msra.mxu0 0.0
    %956 = vmatpush.msra.mxu0 0.0
    %957 = vmatpush.msra.mxu0 0.0
    %958 = vmatpush.msra.mxu0 0.0
    %959 = vmatpush.msra.mxu0 0.0
    %960 = vmatpush.msra.mxu0 0.0
    %961 = vmatpush.msra.mxu0 0.0
    %962 = vmatpush.msra.mxu0 0.0
    %963 = vmatpush.msra.mxu0 0.0
    %964 = vmatpush.msra.mxu0 0.0
    %965 = vmatpush.msra.mxu0 0.0
    %966 = vmatpush.msra.mxu0 %v571
    %967 = vmatmul.f32.gmra.mxu0 %v949
    %v968 = vpop.f32.mrf.mxu0
    %v969 = vadd.f32 0.0, %v968
    %970 = vdwg.mxu0
    %v972 = vsel %vm744, %v831, 0
    %974 = vmatpush.msra.mxu0 0.0
    %975 = vmatpush.msra.mxu0 0.0
    %976 = vmatpush.msra.mxu0 0.0
    %977 = vmatpush.msra.mxu0 0.0
    %978 = vmatpush.msra.mxu0 0.0
    %979 = vmatpush.msra.mxu0 0.0
    %980 = vmatpush.msra.mxu0 0.0
    %981 = vmatpush.msra.mxu0 0.0
    %982 = vmatpush.msra.mxu0 0.0
    %983 = vmatpush.msra.mxu0 0.0
    %984 = vmatpush.msra.mxu0 0.0
    %985 = vmatpush.msra.mxu0 0.0
    %986 = vmatpush.msra.mxu0 0.0
    %987 = vmatpush.msra.mxu0 0.0
    %988 = vmatpush.msra.mxu0 0.0
    %989 = vmatpush.msra.mxu0 %v573
    %990 = vmatmul.f32.gmra.mxu0 %v972
    %v991 = vpop.f32.mrf.mxu0
    %v992 = vadd.f32 0.0, %v991
    %993 = vdwg.mxu0
    %v995 = vsel %vm744, %v832, 0
    %997 = vmatpush.msra.mxu0 0.0
    %998 = vmatpush.msra.mxu0 0.0
    %999 = vmatpush.msra.mxu0 0.0
    %1000 = vmatpush.msra.mxu0 0.0
    %1001 = vmatpush.msra.mxu0 0.0
    %1002 = vmatpush.msra.mxu0 0.0
    %1003 = vmatpush.msra.mxu0 0.0
    %1004 = vmatpush.msra.mxu0 0.0
    %1005 = vmatpush.msra.mxu0 0.0
    %1006 = vmatpush.msra.mxu0 0.0
    %1007 = vmatpush.msra.mxu0 0.0
    %1008 = vmatpush.msra.mxu0 0.0
    %1009 = vmatpush.msra.mxu0 0.0
    %1010 = vmatpush.msra.mxu0 0.0
    %1011 = vmatpush.msra.mxu0 0.0
    %1012 = vmatpush.msra.mxu0 %v575
    %1013 = vmatmul.f32.gmra.mxu0 %v995
    %v1014 = vpop.f32.mrf.mxu0
    %v1015 = vadd.f32 0.0, %v1014
    %1016 = vdwg.mxu0
    %v1017 = vrot.slane %v900, 4
    %v1018 = vsel %vm240, %v1017, %v854
    %v1019 = vrot.slane %v854, 4
    %v1020 = vsel %vm240, %v900, %v1019
    %v1022 = vunpack.c.l.s4 1983009808
    %v1023 = vunpack.c.0.s8 %v1022
    %v1024 = vperm.slane %v1018, %v1023
    %v1026 = vunpack.c.l.s4 1983009808
    %v1027 = vunpack.c.0.s8 %v1026
    %v1028 = vperm.slane %v1020, %v1027
    %v1029 = vrot.slane %v923, 4
    %v1030 = vsel %vm240, %v1029, %v877
    %v1031 = vrot.slane %v877, 4
    %v1032 = vsel %vm240, %v923, %v1031
    %v1034 = vunpack.c.l.s4 1983009808
    %v1035 = vunpack.c.0.s8 %v1034
    %v1036 = vperm.slane %v1030, %v1035
    %v1038 = vunpack.c.l.s4 1983009808
    %v1039 = vunpack.c.0.s8 %v1038
    %v1040 = vperm.slane %v1032, %v1039
    %v1041 = vrot.slane %v992, 4
    %v1042 = vsel %vm240, %v1041, %v946
    %v1043 = vrot.slane %v946, 4
    %v1044 = vsel %vm240, %v992, %v1043
    %v1046 = vunpack.c.l.s4 1983009808
    %v1047 = vunpack.c.0.s8 %v1046
    %v1048 = vperm.slane %v1042, %v1047
    %v1050 = vunpack.c.l.s4 1983009808
    %v1051 = vunpack.c.0.s8 %v1050
    %v1052 = vperm.slane %v1044, %v1051
    %v1053 = vrot.slane %v1015, 4
    %v1054 = vsel %vm240, %v1053, %v969
    %v1055 = vrot.slane %v969, 4
    %v1056 = vsel %vm240, %v1015, %v1055
    %v1058 = vunpack.c.l.s4 1983009808
    %v1059 = vunpack.c.0.s8 %v1058
    %v1060 = vperm.slane %v1054, %v1059
    %v1062 = vunpack.c.l.s4 1983009808
    %v1063 = vunpack.c.0.s8 %v1062
    %v1064 = vperm.slane %v1056, %v1063
    %v1065 = vrot.slane %v1036, 4
    %v1066 = vsel %vm240, %v1065, %v1024
    %v1067 = vrot.slane %v1024, 4
    %v1068 = vsel %vm240, %v1036, %v1067
    %v1070 = vunpack.c.l.s4 1934713408
    %v1071 = vunpack.c.0.s8 %v1070
    %v1072 = vperm.slane %v1066, %v1071
    %v1074 = vunpack.c.l.s4 1934713408
    %v1075 = vunpack.c.0.s8 %v1074
    %v1076 = vperm.slane %v1068, %v1075
    %v1077 = vrot.slane %v1040, 4
    %v1078 = vsel %vm240, %v1077, %v1028
    %v1079 = vrot.slane %v1028, 4
    %v1080 = vsel %vm240, %v1040, %v1079
    %v1082 = vunpack.c.l.s4 1934713408
    %v1083 = vunpack.c.0.s8 %v1082
    %v1084 = vperm.slane %v1078, %v1083
    %v1086 = vunpack.c.l.s4 1934713408
    %v1087 = vunpack.c.0.s8 %v1086
    %v1088 = vperm.slane %v1080, %v1087
    %v1089 = vrot.slane %v1060, 4
    %v1090 = vsel %vm240, %v1089, %v1048
    %v1091 = vrot.slane %v1048, 4
    %v1092 = vsel %vm240, %v1060, %v1091
    %v1094 = vunpack.c.l.s4 1934713408
    %v1095 = vunpack.c.0.s8 %v1094
    %v1096 = vperm.slane %v1090, %v1095
    %v1098 = vunpack.c.l.s4 1934713408
    %v1099 = vunpack.c.0.s8 %v1098
    %v1100 = vperm.slane %v1092, %v1099
    %v1101 = vrot.slane %v1064, 4
    %v1102 = vsel %vm240, %v1101, %v1052
    %v1103 = vrot.slane %v1052, 4
    %v1104 = vsel %vm240, %v1064, %v1103
    %v1106 = vunpack.c.l.s4 1934713408
    %v1107 = vunpack.c.0.s8 %v1106
    %v1108 = vperm.slane %v1102, %v1107
    %v1110 = vunpack.c.l.s4 1934713408
    %v1111 = vunpack.c.0.s8 %v1110
    %v1112 = vperm.slane %v1104, %v1111
    %v1113 = vrot.slane %v1096, 4
    %v1114 = vsel %vm240, %v1113, %v1072
    %v1115 = vrot.slane %v1072, 4
    %v1116 = vsel %vm240, %v1096, %v1115
    %v1117 = vrot.slane %v1100, 4
    %v1118 = vsel %vm240, %v1117, %v1076
    %v1119 = vrot.slane %v1076, 4
    %v1120 = vsel %vm240, %v1100, %v1119
    %v1121 = vrot.slane %v1108, 4
    %v1122 = vsel %vm240, %v1121, %v1084
    %v1123 = vrot.slane %v1084, 4
    %v1124 = vsel %vm240, %v1108, %v1123
    %v1125 = vrot.slane %v1112, 4
    %v1126 = vsel %vm240, %v1125, %v1088
    %v1127 = vrot.slane %v1088, 4
    %v1128 = vsel %vm240, %v1112, %v1127
    %v1129 = vld [vmem:[#allocation4] sm:$0xff]
    %v1130 = vld [vmem:[#allocation4 + $0x8] sm:$0xff]
    %v1131 = vld [vmem:[#allocation4 + $0x10] sm:$0xff]
    %v1132 = vld [vmem:[#allocation4 + $0x18] sm:$0xff]
    %v1133 = vld [vmem:[#allocation4 + $0x20] sm:$0xff]
    %v1134 = vld [vmem:[#allocation4 + $0x28] sm:$0xff]
    %v1135 = vld [vmem:[#allocation4 + $0x30] sm:$0xff]
    %v1136 = vld [vmem:[#allocation4 + $0x38] sm:$0xff]
    %v1137 = vld [vmem:[#allocation4 + $0x40] sm:$0xff]
    %v1138 = vld [vmem:[#allocation4 + $0x48] sm:$0xff]
    %v1139 = vld [vmem:[#allocation4 + $0x50] sm:$0xff]
    %v1140 = vld [vmem:[#allocation4 + $0x58] sm:$0xff]
    %v1141 = vld [vmem:[#allocation4 + $0x60] sm:$0xff]
    %v1142 = vld [vmem:[#allocation4 + $0x68] sm:$0xff]
    %v1143 = vld [vmem:[#allocation4 + $0x70] sm:$0xff]
    %v1144 = vld [vmem:[#allocation4 + $0x78] sm:$0xff]
    %v1145 = vld [vmem:[%s4] sm:$0x1]
    %v1147 = vperm.slane %v1145, 0
    %1149 = vmatpush.msra.mxu0 %v1144
    %1150 = vmatpush.msra.mxu0 %v1143
    %1151 = vmatpush.msra.mxu0 %v1142
    %1152 = vmatpush.msra.mxu0 %v1141
    %1153 = vmatpush.msra.mxu0 %v1140
    %1154 = vmatpush.msra.mxu0 %v1139
    %1155 = vmatpush.msra.mxu0 %v1138
    %1156 = vmatpush.msra.mxu0 %v1137
    %1157 = vmatpush.msra.mxu0 %v1136
    %1158 = vmatpush.msra.mxu0 %v1135
    %1159 = vmatpush.msra.mxu0 %v1134
    %1160 = vmatpush.msra.mxu0 %v1133
    %1161 = vmatpush.msra.mxu0 %v1132
    %1162 = vmatpush.msra.mxu0 %v1131
    %1163 = vmatpush.msra.mxu0 %v1130
    %1164 = vmatpush.msra.mxu0 %v1129
    %1165 = vmatmul.f32.gmra.mxu0 %v1114
    %v1166 = vpop.f32.mrf.mxu0
    %v1167 = vadd.f32 %v1147, %v1166
    %1168 = vmatmul.f32.gmra.mxu0 %v1116
    %v1169 = vpop.f32.mrf.mxu0
    %v1170 = vadd.f32 %v1147, %v1169
    %1171 = vmatmul.f32.gmra.mxu0 %v1118
    %v1172 = vpop.f32.mrf.mxu0
    %v1173 = vadd.f32 %v1147, %v1172
    %1174 = vmatmul.f32.gmra.mxu0 %v1120
    %v1175 = vpop.f32.mrf.mxu0
    %v1176 = vadd.f32 %v1147, %v1175
    %1177 = vmatmul.f32.gmra.mxu0 %v1122
    %v1178 = vpop.f32.mrf.mxu0
    %v1179 = vadd.f32 %v1147, %v1178
    %1180 = vmatmul.f32.gmra.mxu0 %v1124
    %v1181 = vpop.f32.mrf.mxu0
    %v1182 = vadd.f32 %v1147, %v1181
    %1183 = vmatmul.f32.gmra.mxu0 %v1126
    %v1184 = vpop.f32.mrf.mxu0
    %v1185 = vadd.f32 %v1147, %v1184
    %1186 = vmatmul.f32.gmra.mxu0 %v1128
    %v1187 = vpop.f32.mrf.mxu0
    %v1188 = vadd.f32 %v1147, %v1187
    %1189 = vdwg.mxu0
    %1190 = vst [vmem:[%s5] sm:$0xff] %v1167
    %1191 = vst [vmem:[%s5 + $0x8] sm:$0xff] %v1170
    %1192 = vst [vmem:[%s5 + $0x10] sm:$0xff] %v1173
    %1193 = vst [vmem:[%s5 + $0x18] sm:$0xff] %v1176
    %1194 = vst [vmem:[%s5 + $0x20] sm:$0xff] %v1179
    %1195 = vst [vmem:[%s5 + $0x28] sm:$0xff] %v1182
    %1196 = vst [vmem:[%s5 + $0x30] sm:$0xff] %v1185
    %1197 = vst [vmem:[%s5 + $0x38] sm:$0xff] %v1188
    // Predicated region
    $region30: #{lfads_teacher_forward.6} parent=1 // pred_check
      _
    $region31: #{lfads_teacher_forward.6} parent=1 // pred_check_branch
      %1199 = sbr.rel (0) target = $region33
    $region32: #{lfads_teacher_forward.6} parent=1 // pred_region
      _
    $region33: #{lfads_teacher_forward.6} parent=1 // pred_fallthru
      _
    // Predicated region
    $region34: #{lfads_teacher_forward.6} parent=1 // pred_check
      _
    $region35: #{lfads_teacher_forward.6} parent=1 // pred_check_branch
      %1201 = sbr.rel (0) target = $region37
    $region36: #{lfads_teacher_forward.6} parent=1 // pred_region
      _
    $region37: #{lfads_teacher_forward.6} parent=1 // pred_fallthru
      _
    %1202 = vsyncpa [#allocation3], 1
    %1203 = vsyncpa [#allocation5], 1

// kernel: lfads_teacher_forward.7
$region0: #{lfads_teacher_forward.7}
  #allocation0 [shape = 'u32[]', space=smem, size = 0x4, offset = 0x4, fixed_abs, tag = 'smem constant byte address 0x4 - core index']
  #allocation1 [shape = 'u32[72,128]{1,0:T(1,128)}', space=vmem, size = 0x9000, scoped, tag = 'internal scratch']
  #allocation2 [shape = 'f32[64,384]{1,0:T(8,128)}', space=vmem, size = 0x18000, scoped, tag = 'scratch operand']
  #allocation3 [shape = 'f32[64,128]{1,0:T(8,128)}', space=vmem, size = 0x8000, scoped, tag = 'scratch operand']
  #allocation4 [shape = 'f32[8,128]{1,0:T(8,128)}', space=vmem, size = 0x1000, scoped, tag = 'scratch operand']
  #allocation5 [shape = 'f32[64,384]{1,0:T(8,128)}', space=vmem, size = 0x18000, scoped, tag = 'scratch operand']
  #allocation6 [shape = 'f32[64,128]{1,0:T(8,128)}', space=vmem, size = 0x8000, scoped, tag = 'scratch operand']
  #allocation7 [shape = 'f32[8,128]{1,0:T(8,128)}', space=vmem, size = 0x1000, scoped, tag = 'scratch operand']
  %s0 = inlined_call_operand.vmem [shape: f32[64,128], index: 0, kind: input, shape index: {}]
  %s1 = inlined_call_operand.hbm [shape: f32[128,384], index: 1, kind: input, shape index: {}]
  %s2 = inlined_call_operand.vmem [shape: f32[1,384], index: 2, kind: input, shape index: {}]
  %s3 = inlined_call_operand.hbm [shape: f32[128,384], index: 3, kind: input, shape index: {}]
  %s4 = inlined_call_operand.vmem [shape: f32[1,128], index: 4, kind: input, shape index: {}]
  %s5 = inlined_call_operand.hbm [shape: f32[128,384], index: 5, kind: input, shape index: {}]
  %s6 = inlined_call_operand.vmem [shape: f32[1,384], index: 6, kind: input, shape index: {}]
  %s7 = inlined_call_operand.hbm [shape: f32[128,384], index: 7, kind: input, shape index: {}]
  %s8 = inlined_call_operand.vmem [shape: f32[1,128], index: 8, kind: input, shape index: {}]
  %s9 = inlined_call_operand.vmem [shape: f32[128,64], index: 9, kind: input, shape index: {}]
  %s10 = inlined_call_operand.vmem [shape: f32[1,64], index: 10, kind: input, shape index: {}]
  %s11 = inlined_call_operand.vmem [shape: f32[64,64], index: 11, kind: output, shape index: {}]
  %s12 = sld [smem:[#allocation0]]
  $region98: #{lfads_teacher_forward.7} parent=0
    _
  %s14 = ssub.s32 1, %s12
  %s15 = scalar_select 0, %s14, %s12
  $region1: #{lfads_teacher_forward.7} parent=0
    #allocation8 [shape = 'u8[196608]{0}', space=vmem, size = 0x30000, scoped, tag = 'input window, operand 1, single buffered']
    #allocation9 [shape = 's32[1]{0}', space=sflag, size = 0x4, scoped, tag = 'scoped memory for lfads_teacher_forward.7']
    #allocation10 [shape = 'u8[196608]{0}', space=vmem, size = 0x30000, scoped, tag = 'input window, operand 3, single buffered']
    #allocation11 [shape = 's32[1]{0}', space=sflag, size = 0x4, scoped, tag = 'scoped memory for lfads_teacher_forward.7']
    #allocation12 [shape = 'u8[196608]{0}', space=vmem, size = 0x30000, scoped, tag = 'input window, operand 5, single buffered']
    #allocation13 [shape = 'u8[196608]{0}', space=vmem, size = 0x30000, scoped, tag = 'input window, operand 7, single buffered']
    #allocation14 [shape = 's32[1]{0}', space=sflag, size = 0x4, scoped, tag = 'scoped memory for lfads_teacher_forward.7']
    %16 = vsyncpa [#allocation9], 0
    %17 = vsyncpa [#allocation11], 0
    %18 = vsyncpa [#allocation14], 0
    // Predicated region
    $region2: #{lfads_teacher_forward.7} parent=1 // pred_check
      _
    $region3: #{lfads_teacher_forward.7} parent=1 // pred_check_branch
      %20 = sbr.rel (0) target = $region5
    $region4: #{lfads_teacher_forward.7} parent=1 // pred_region
      _
    $region5: #{lfads_teacher_forward.7} parent=1 // pred_fallthru
      _
    // Predicated region
    $region6: #{lfads_teacher_forward.7} parent=1 // pred_check
      _
    $region7: #{lfads_teacher_forward.7} parent=1 // pred_check_branch
      %22 = sbr.rel (0) target = $region9
    $region8: #{lfads_teacher_forward.7} parent=1 // pred_region
      %24 = vsyncadd [#allocation9], 0
      %s25 = sshll.u32 %s1, 4
      %s26 = int_to_ptr.hbm [resolvable:$true] %s25
      %s27 = sshll.u32 [#allocation8], 4
      %s28 = int_to_ptr.vmem [resolvable:$true] %s27
      %33 = dma.hbm_to_vmem [thread:$0]  %s26, 6144, %s28, [#allocation9], 384, 384, 24
    $region9: #{lfads_teacher_forward.7} parent=1 // pred_fallthru
      _
    // Predicated region
    $region10: #{lfads_teacher_forward.7} parent=1 // pred_check
      _
    $region11: #{lfads_teacher_forward.7} parent=1 // pred_check_branch
      %35 = sbr.rel (0) target = $region13
    $region12: #{lfads_teacher_forward.7} parent=1 // pred_region
      _
    $region13: #{lfads_teacher_forward.7} parent=1 // pred_fallthru
      _
    // Predicated region
    $region14: #{lfads_teacher_forward.7} parent=1 // pred_check
      _
    $region15: #{lfads_teacher_forward.7} parent=1 // pred_check_branch
      %37 = sbr.rel (0) target = $region17
    $region16: #{lfads_teacher_forward.7} parent=1 // pred_region
      %39 = vsyncadd [#allocation11], 0
      %s40 = sshll.u32 %s3, 4
      %s41 = int_to_ptr.hbm [resolvable:$true] %s40
      %s42 = sshll.u32 [#allocation10], 4
      %s43 = int_to_ptr.vmem [resolvable:$true] %s42
      %48 = dma.hbm_to_vmem [thread:$0]  %s41, 6144, %s43, [#allocation11], 384, 384, 24
    $region17: #{lfads_teacher_forward.7} parent=1 // pred_fallthru
      _
    // Predicated region
    $region18: #{lfads_teacher_forward.7} parent=1 // pred_check
      _
    $region19: #{lfads_teacher_forward.7} parent=1 // pred_check_branch
      %50 = sbr.rel (0) target = $region21
    $region20: #{lfads_teacher_forward.7} parent=1 // pred_region
      _
    $region21: #{lfads_teacher_forward.7} parent=1 // pred_fallthru
      _
    // Predicated region
    $region22: #{lfads_teacher_forward.7} parent=1 // pred_check
      _
    $region23: #{lfads_teacher_forward.7} parent=1 // pred_check_branch
      %52 = sbr.rel (0) target = $region25
    $region24: #{lfads_teacher_forward.7} parent=1 // pred_region
      %54 = vsyncadd [#allocation11], 0
      %s55 = sshll.u32 %s5, 4
      %s56 = int_to_ptr.hbm [resolvable:$true] %s55
      %s57 = sshll.u32 [#allocation12], 4
      %s58 = int_to_ptr.vmem [resolvable:$true] %s57
      %63 = dma.hbm_to_vmem [thread:$0]  %s56, 6144, %s58, [#allocation11], 384, 384, 24
    $region25: #{lfads_teacher_forward.7} parent=1 // pred_fallthru
      _
    // Predicated region
    $region26: #{lfads_teacher_forward.7} parent=1 // pred_check
      _
    $region27: #{lfads_teacher_forward.7} parent=1 // pred_check_branch
      %65 = sbr.rel (0) target = $region29
    $region28: #{lfads_teacher_forward.7} parent=1 // pred_region
      _
    $region29: #{lfads_teacher_forward.7} parent=1 // pred_fallthru
      _
    // Predicated region
    $region30: #{lfads_teacher_forward.7} parent=1 // pred_check
      _
    $region31: #{lfads_teacher_forward.7} parent=1 // pred_check_branch
      %67 = sbr.rel (0) target = $region33
    $region32: #{lfads_teacher_forward.7} parent=1 // pred_region
      %69 = vsyncadd [#allocation14], 0
      %s70 = sshll.u32 %s7, 4
      %s71 = int_to_ptr.hbm [resolvable:$true] %s70
      %s72 = sshll.u32 [#allocation13], 4
      %s73 = int_to_ptr.vmem [resolvable:$true] %s72
      %78 = dma.hbm_to_vmem [thread:$0]  %s71, 6144, %s73, [#allocation14], 384, 384, 24
    $region33: #{lfads_teacher_forward.7} parent=1 // pred_fallthru
      _
    // Predicated region
    $region34: #{lfads_teacher_forward.7} parent=1 // pred_check
      _
    $region35: #{lfads_teacher_forward.7} parent=1 // pred_check_branch
      %80 = sbr.rel (0) target = $region37
    $region36: #{lfads_teacher_forward.7} parent=1 // pred_region
      _
    $region37: #{lfads_teacher_forward.7} parent=1 // pred_fallthru
      _
    // Predicated region
    $region38: #{lfads_teacher_forward.7} parent=1 // pred_check
      _
    $region39: #{lfads_teacher_forward.7} parent=1 // pred_check_branch
      %82 = sbr.rel (0) target = $region41
    $region40: #{lfads_teacher_forward.7} parent=1 // pred_region
      _
    $region41: #{lfads_teacher_forward.7} parent=1 // pred_fallthru
      _
    // Predicated region
    $region42: #{lfads_teacher_forward.7} parent=1 // pred_check
      _
    $region43: #{lfads_teacher_forward.7} parent=1 // pred_check_branch
      %84 = sbr.rel (0) target = $region45
    $region44: #{lfads_teacher_forward.7} parent=1 // pred_region
      _
    $region45: #{lfads_teacher_forward.7} parent=1 // pred_fallthru
      _
    // Predicated region
    $region46: #{lfads_teacher_forward.7} parent=1 // pred_check
      _
    $region47: #{lfads_teacher_forward.7} parent=1 // pred_check_branch
      %86 = sbr.rel (0) target = $region49
    $region48: #{lfads_teacher_forward.7} parent=1 // pred_region
      %88 = dma.done [#allocation9], 6144
    $region49: #{lfads_teacher_forward.7} parent=1 // pred_fallthru
      _
    // Predicated region
    $region50: #{lfads_teacher_forward.7} parent=1 // pred_check
      _
    $region51: #{lfads_teacher_forward.7} parent=1 // pred_check_branch
      %90 = sbr.rel (0) target = $region53
    $region52: #{lfads_teacher_forward.7} parent=1 // pred_region
      %92 = dma.done [#allocation11], 6144
    $region53: #{lfads_teacher_forward.7} parent=1 // pred_fallthru
      _
    // Predicated region
    $region54: #{lfads_teacher_forward.7} parent=1 // pred_check
      _
    $region55: #{lfads_teacher_forward.7} parent=1 // pred_check_branch
      %94 = sbr.rel (0) target = $region57
    $region56: #{lfads_teacher_forward.7} parent=1 // pred_region
      %96 = dma.done [#allocation11], 6144
    $region57: #{lfads_teacher_forward.7} parent=1 // pred_fallthru
      _
    // Predicated region
    $region58: #{lfads_teacher_forward.7} parent=1 // pred_check
      _
    $region59: #{lfads_teacher_forward.7} parent=1 // pred_check_branch
      %98 = sbr.rel (0) target = $region61
    $region60: #{lfads_teacher_forward.7} parent=1 // pred_region
      %100 = dma.done [#allocation14], 6144
    $region61: #{lfads_teacher_forward.7} parent=1 // pred_fallthru
      _
    %v101 = vld [vmem:[%s0] sm:$0xff]
    %v102 = vld [vmem:[%s0 + $0x8] sm:$0xff]
    %v103 = vld [vmem:[%s0 + $0x10] sm:$0xff]
    %v104 = vld [vmem:[%s0 + $0x18] sm:$0xff]
    %v105 = vld [vmem:[%s0 + $0x20] sm:$0xff]
    %v106 = vld [vmem:[%s0 + $0x28] sm:$0xff]
    %v107 = vld [vmem:[%s0 + $0x30] sm:$0xff]
    %v108 = vld [vmem:[%s0 + $0x38] sm:$0xff]
    %v109 = vld [vmem:[#allocation8] sm:$0xff]
    %v110 = vld [vmem:[#allocation8 + $0x8] sm:$0xff]
    %v111 = vld [vmem:[#allocation8 + $0x10] sm:$0xff]
    %v112 = vld [vmem:[#allocation8 + $0x18] sm:$0xff]
    %v113 = vld [vmem:[#allocation8 + $0x20] sm:$0xff]
    %v114 = vld [vmem:[#allocation8 + $0x28] sm:$0xff]
    %v115 = vld [vmem:[#allocation8 + $0x30] sm:$0xff]
    %v116 = vld [vmem:[#allocation8 + $0x38] sm:$0xff]
    %v117 = vld [vmem:[#allocation8 + $0x40] sm:$0xff]
    %v118 = vld [vmem:[#allocation8 + $0x48] sm:$0xff]
    %v119 = vld [vmem:[#allocation8 + $0x50] sm:$0xff]
    %v120 = vld [vmem:[#allocation8 + $0x58] sm:$0xff]
    %v121 = vld [vmem:[#allocation8 + $0x60] sm:$0xff]
    %v122 = vld [vmem:[#allocation8 + $0x68] sm:$0xff]
    %v123 = vld [vmem:[#allocation8 + $0x70] sm:$0xff]
    %v124 = vld [vmem:[#allocation8 + $0x78] sm:$0xff]
    %v125 = vld [vmem:[#allocation8 + $0x80] sm:$0xff]
    %v126 = vld [vmem:[#allocation8 + $0x88] sm:$0xff]
    %v127 = vld [vmem:[#allocation8 + $0x90] sm:$0xff]
    %v128 = vld [vmem:[#allocation8 + $0x98] sm:$0xff]
    %v129 = vld [vmem:[#allocation8 + $0xa0] sm:$0xff]
    %v130 = vld [vmem:[#allocation8 + $0xa8] sm:$0xff]
    %v131 = vld [vmem:[#allocation8 + $0xb0] sm:$0xff]
    %v132 = vld [vmem:[#allocation8 + $0xb8] sm:$0xff]
    %v133 = vld [vmem:[#allocation8 + $0xc0] sm:$0xff]
    %v134 = vld [vmem:[#allocation8 + $0xc8] sm:$0xff]
    %v135 = vld [vmem:[#allocation8 + $0xd0] sm:$0xff]
    %v136 = vld [vmem:[#allocation8 + $0xd8] sm:$0xff]
    %v137 = vld [vmem:[#allocation8 + $0xe0] sm:$0xff]
    %v138 = vld [vmem:[#allocation8 + $0xe8] sm:$0xff]
    %v139 = vld [vmem:[#allocation8 + $0xf0] sm:$0xff]
    %v140 = vld [vmem:[#allocation8 + $0xf8] sm:$0xff]
    %v141 = vld [vmem:[#allocation8 + $0x100] sm:$0xff]
    %v142 = vld [vmem:[#allocation8 + $0x108] sm:$0xff]
    %v143 = vld [vmem:[#allocation8 + $0x110] sm:$0xff]
    %v144 = vld [vmem:[#allocation8 + $0x118] sm:$0xff]
    %v145 = vld [vmem:[#allocation8 + $0x120] sm:$0xff]
    %v146 = vld [vmem:[#allocation8 + $0x128] sm:$0xff]
    %v147 = vld [vmem:[#allocation8 + $0x130] sm:$0xff]
    %v148 = vld [vmem:[#allocation8 + $0x138] sm:$0xff]
    %v149 = vld [vmem:[#allocation8 + $0x140] sm:$0xff]
    %v150 = vld [vmem:[#allocation8 + $0x148] sm:$0xff]
    %v151 = vld [vmem:[#allocation8 + $0x150] sm:$0xff]
    %v152 = vld [vmem:[#allocation8 + $0x158] sm:$0xff]
    %v153 = vld [vmem:[#allocation8 + $0x160] sm:$0xff]
    %v154 = vld [vmem:[#allocation8 + $0x168] sm:$0xff]
    %v155 = vld [vmem:[#allocation8 + $0x170] sm:$0xff]
    %v156 = vld [vmem:[#allocation8 + $0x178] sm:$0xff]
    %v157 = vld [vmem:[%s2] sm:$0x7]
    %v159 = vperm.slane %v157, 0
    %v160 = vperm.slane %v157, 1
    %v161 = vperm.slane %v157, 2
    %165 = vmatpush.msra.mxu0 %v154
    %166 = vmatpush.msra.mxu0 %v151
    %167 = vmatpush.msra.mxu0 %v148
    %168 = vmatpush.msra.mxu0 %v145
    %169 = vmatpush.msra.mxu0 %v142
    %170 = vmatpush.msra.mxu0 %v139
    %171 = vmatpush.msra.mxu0 %v136
    %172 = vmatpush.msra.mxu0 %v133
    %173 = vmatpush.msra.mxu0 %v130
    %174 = vmatpush.msra.mxu0 %v127
    %175 = vmatpush.msra.mxu0 %v124
    %176 = vmatpush.msra.mxu0 %v121
    %177 = vmatpush.msra.mxu0 %v118
    %178 = vmatpush.msra.mxu0 %v115
    %179 = vmatpush.msra.mxu0 %v112
    %180 = vmatpush.msra.mxu0 %v109
    %181 = vmatmul.f32.gmra.mxu0 %v101
    %v182 = vpop.f32.mrf.mxu0
    %v183 = vadd.f32 %v159, %v182
    %184 = vmatmul.f32.gmra.mxu0 %v102
    %v185 = vpop.f32.mrf.mxu0
    %v186 = vadd.f32 %v159, %v185
    %187 = vmatmul.f32.gmra.mxu0 %v103
    %v188 = vpop.f32.mrf.mxu0
    %v189 = vadd.f32 %v159, %v188
    %190 = vmatmul.f32.gmra.mxu0 %v104
    %v191 = vpop.f32.mrf.mxu0
    %v192 = vadd.f32 %v159, %v191
    %193 = vmatmul.f32.gmra.mxu0 %v105
    %v194 = vpop.f32.mrf.mxu0
    %v195 = vadd.f32 %v159, %v194
    %196 = vmatmul.f32.gmra.mxu0 %v106
    %v197 = vpop.f32.mrf.mxu0
    %v198 = vadd.f32 %v159, %v197
    %199 = vmatmul.f32.gmra.mxu0 %v107
    %v200 = vpop.f32.mrf.mxu0
    %v201 = vadd.f32 %v159, %v200
    %202 = vmatmul.f32.gmra.mxu0 %v108
    %v203 = vpop.f32.mrf.mxu0
    %v204 = vadd.f32 %v159, %v203
    %205 = vdwg.mxu0
    %206 = vmatpush.msra.mxu0 %v155
    %207 = vmatpush.msra.mxu0 %v152
    %208 = vmatpush.msra.mxu0 %v149
    %209 = vmatpush.msra.mxu0 %v146
    %210 = vmatpush.msra.mxu0 %v143
    %211 = vmatpush.msra.mxu0 %v140
    %212 = vmatpush.msra.mxu0 %v137
    %213 = vmatpush.msra.mxu0 %v134
    %214 = vmatpush.msra.mxu0 %v131
    %215 = vmatpush.msra.mxu0 %v128
    %216 = vmatpush.msra.mxu0 %v125
    %217 = vmatpush.msra.mxu0 %v122
    %218 = vmatpush.msra.mxu0 %v119
    %219 = vmatpush.msra.mxu0 %v116
    %220 = vmatpush.msra.mxu0 %v113
    %221 = vmatpush.msra.mxu0 %v110
    %222 = vmatmul.f32.gmra.mxu0 %v101
    %v223 = vpop.f32.mrf.mxu0
    %v224 = vadd.f32 %v160, %v223
    %225 = vmatmul.f32.gmra.mxu0 %v102
    %v226 = vpop.f32.mrf.mxu0
    %v227 = vadd.f32 %v160, %v226
    %228 = vmatmul.f32.gmra.mxu0 %v103
    %v229 = vpop.f32.mrf.mxu0
    %v230 = vadd.f32 %v160, %v229
    %231 = vmatmul.f32.gmra.mxu0 %v104
    %v232 = vpop.f32.mrf.mxu0
    %v233 = vadd.f32 %v160, %v232
    %234 = vmatmul.f32.gmra.mxu0 %v105
    %v235 = vpop.f32.mrf.mxu0
    %v236 = vadd.f32 %v160, %v235
    %237 = vmatmul.f32.gmra.mxu0 %v106
    %v238 = vpop.f32.mrf.mxu0
    %v239 = vadd.f32 %v160, %v238
    %240 = vmatmul.f32.gmra.mxu0 %v107
    %v241 = vpop.f32.mrf.mxu0
    %v242 = vadd.f32 %v160, %v241
    %243 = vmatmul.f32.gmra.mxu0 %v108
    %v244 = vpop.f32.mrf.mxu0
    %v245 = vadd.f32 %v160, %v244
    %246 = vdwg.mxu0
    %247 = vmatpush.msra.mxu0 %v156
    %248 = vmatpush.msra.mxu0 %v153
    %249 = vmatpush.msra.mxu0 %v150
    %250 = vmatpush.msra.mxu0 %v147
    %251 = vmatpush.msra.mxu0 %v144
    %252 = vmatpush.msra.mxu0 %v141
    %253 = vmatpush.msra.mxu0 %v138
    %254 = vmatpush.msra.mxu0 %v135
    %255 = vmatpush.msra.mxu0 %v132
    %256 = vmatpush.msra.mxu0 %v129
    %257 = vmatpush.msra.mxu0 %v126
    %258 = vmatpush.msra.mxu0 %v123
    %259 = vmatpush.msra.mxu0 %v120
    %260 = vmatpush.msra.mxu0 %v117
    %261 = vmatpush.msra.mxu0 %v114
    %262 = vmatpush.msra.mxu0 %v111
    %263 = vmatmul.f32.gmra.mxu0 %v101
    %v264 = vpop.f32.mrf.mxu0
    %v265 = vadd.f32 %v161, %v264
    %266 = vmatmul.f32.gmra.mxu0 %v102
    %v267 = vpop.f32.mrf.mxu0
    %v268 = vadd.f32 %v161, %v267
    %269 = vmatmul.f32.gmra.mxu0 %v103
    %v270 = vpop.f32.mrf.mxu0
    %v271 = vadd.f32 %v161, %v270
    %272 = vmatmul.f32.gmra.mxu0 %v104
    %v273 = vpop.f32.mrf.mxu0
    %v274 = vadd.f32 %v161, %v273
    %275 = vmatmul.f32.gmra.mxu0 %v105
    %v276 = vpop.f32.mrf.mxu0
    %v277 = vadd.f32 %v161, %v276
    %278 = vmatmul.f32.gmra.mxu0 %v106
    %v279 = vpop.f32.mrf.mxu0
    %v280 = vadd.f32 %v161, %v279
    %281 = vmatmul.f32.gmra.mxu0 %v107
    %v282 = vpop.f32.mrf.mxu0
    %v283 = vadd.f32 %v161, %v282
    %284 = vmatmul.f32.gmra.mxu0 %v108
    %v285 = vpop.f32.mrf.mxu0
    %v286 = vadd.f32 %v161, %v285
    %287 = vdwg.mxu0
    %288 = vst [vmem:[#allocation2] sm:$0xff] %v183
    %289 = vst [vmem:[#allocation2 + $0x8] sm:$0xff] %v224
    %290 = vst [vmem:[#allocation2 + $0x10] sm:$0xff] %v265
    %291 = vst [vmem:[#allocation2 + $0x18] sm:$0xff] %v186
    %292 = vst [vmem:[#allocation2 + $0x20] sm:$0xff] %v227
    %293 = vst [vmem:[#allocation2 + $0x28] sm:$0xff] %v268
    %294 = vst [vmem:[#allocation2 + $0x30] sm:$0xff] %v189
    %295 = vst [vmem:[#allocation2 + $0x38] sm:$0xff] %v230
    %296 = vst [vmem:[#allocation2 + $0x40] sm:$0xff] %v271
    %297 = vst [vmem:[#allocation2 + $0x48] sm:$0xff] %v192
    %298 = vst [vmem:[#allocation2 + $0x50] sm:$0xff] %v233
    %299 = vst [vmem:[#allocation2 + $0x58] sm:$0xff] %v274
    %300 = vst [vmem:[#allocation2 + $0x60] sm:$0xff] %v195
    %301 = vst [vmem:[#allocation2 + $0x68] sm:$0xff] %v236
    %302 = vst [vmem:[#allocation2 + $0x70] sm:$0xff] %v277
    %303 = vst [vmem:[#allocation2 + $0x78] sm:$0xff] %v198
    %304 = vst [vmem:[#allocation2 + $0x80] sm:$0xff] %v239
    %305 = vst [vmem:[#allocation2 + $0x88] sm:$0xff] %v280
    %306 = vst [vmem:[#allocation2 + $0x90] sm:$0xff] %v201
    %307 = vst [vmem:[#allocation2 + $0x98] sm:$0xff] %v242
    %308 = vst [vmem:[#allocation2 + $0xa0] sm:$0xff] %v283
    %309 = vst [vmem:[#allocation2 + $0xa8] sm:$0xff] %v204
    %310 = vst [vmem:[#allocation2 + $0xb0] sm:$0xff] %v245
    %311 = vst [vmem:[#allocation2 + $0xb8] sm:$0xff] %v286
    %v312 = vlaneseq
    %v313 = vand.u32 %v312, 127
    %v314 = vadd.s32 %v313, 128
    %v315 = vadd.s32 %v313, 256
    %vm316 = vcmp.lt.s32.totalorder %v313, 0
    %v317 = vsub.s32 0, %v313
    %v318 = vsel %vm316, %v317, %v313
    %v319 = vshrl.u32 %v318, 7
    %v320 = vand.u32 %v318, 127
    %v321 = vsub.s32 0, %v320
    %v322 = vsel %vm316, %v321, %v320
    %vm323 = vcmp.lt.s32.totalorder %v314, 0
    %v324 = vsub.s32 0, %v314
    %v325 = vsel %vm323, %v324, %v314
    %v326 = vshrl.u32 %v325, 7
    %v327 = vand.u32 %v325, 127
    %v328 = vsub.s32 0, %v327
    %v329 = vsel %vm323, %v328, %v327
    %vm330 = vcmp.lt.s32.totalorder %v315, 0
    %v331 = vsub.s32 0, %v315
    %v332 = vsel %vm330, %v331, %v315
    %v333 = vshrl.u32 %v332, 7
    %v334 = vand.u32 %v332, 127
    %v335 = vsub.s32 0, %v334
    %v336 = vsel %vm330, %v335, %v334
    %vm337 = vcmp.ne.s32.totalorder %v322, 0
    %vm338 = vcmp.ne.s32.totalorder %v329, 0
    %vm339 = vcmp.ne.s32.totalorder %v336, 0
    %vm340 = vcmp.lt.s32.totalorder %v322, 0
    %vm341 = vcmp.lt.s32.totalorder %v329, 0
    %vm342 = vcmp.lt.s32.totalorder %v336, 0
    %vm343 = vmand %vm340, %vm337
    %vm344 = vmand %vm341, %vm338
    %vm345 = vmand %vm342, %vm339
    %v346 = vadd.s32 %v322, 128
    %v347 = vadd.s32 %v329, 128
    %v348 = vadd.s32 %v336, 128
    %v349 = vsel %vm343, %v346, %v322
    %v350 = vsel %vm344, %v347, %v329
    %v351 = vsel %vm345, %v348, %v336
    %vm352 = vcmp.lt.s32.totalorder %v349, 64
    %vm353 = vcmp.lt.s32.totalorder %v350, 64
    %vm354 = vcmp.lt.s32.totalorder %v351, 64
    loop: start=0, step=1, limit=4
    $region62: #{lfads_teacher_forward.7} parent=1 // loop_pre_header
      _
    $region63: #{lfads_teacher_forward.7} parent=1 // loop_header
      %s356 = sphi 0, %s360
      %p357 = scmp.ge.s32.totalorder %s356, 4
    $region64: #{lfads_teacher_forward.7} parent=1 // loop_header_branch
      %359 = sbr.rel (%p357) target = $region68
    $region65: #{lfads_teacher_forward.7} parent=1 // loop_body
      %s361 = smul.u32 %s356, 8
      %s362 = ssub.s32 7, %s356
      %s363 = smul.u32 %s362, 8
      %s364 = sshra.s32 %s361, 3
      %s365 = sand.u32 %s361, 7
      %s366 = smul.u32 %s364, 3
      %s367 = smul.addr %s366, 8
      %s368 = scalar_lea.vmem [#allocation2], %s367
      %v369 = vld [vmem:[%s368] sm:$0xff]
      %v370 = vld [vmem:[%s368 + $0x8] sm:$0xff]
      %v371 = vld [vmem:[%s368 + $0x10] sm:$0xff]
      %s372 = sshra.s32 %s363, 3
      %s373 = sand.u32 %s363, 7
      %s374 = smul.u32 %s372, 3
      %s375 = smul.addr %s374, 8
      %s376 = scalar_lea.vmem [#allocation2], %s375
      %v377 = vld [vmem:[%s376] sm:$0xff]
      %v378 = vld [vmem:[%s376 + $0x8] sm:$0xff]
      %v379 = vld [vmem:[%s376 + $0x10] sm:$0xff]
      %v380 = vsel %vm352, %v369, %v377
      %v381 = vsel %vm353, %v370, %v378
      %v382 = vsel %vm354, %v371, %v379
      %383 = vst [vmem:[%s368] sm:$0xff] %v380
      %384 = vst [vmem:[%s368 + $0x8] sm:$0xff] %v381
      %385 = vst [vmem:[%s368 + $0x10] sm:$0xff] %v382
      %v386 = vsel %vm352, %v377, %v369
      %v387 = vsel %vm353, %v378, %v370
      %v388 = vsel %vm354, %v379, %v371
      %389 = vst [vmem:[%s376] sm:$0xff] %v386
      %390 = vst [vmem:[%s376 + $0x8] sm:$0xff] %v387
      %391 = vst [vmem:[%s376 + $0x10] sm:$0xff] %v388
    $region66: #{lfads_teacher_forward.7} parent=1 // loop_footer
      %s360 = sadd.s32 1, %s356
    $region67: #{lfads_teacher_forward.7} parent=1 // loop_footer_branch
      %355 = sbr.rel target = $region63
    $region68: #{lfads_teacher_forward.7} parent=1 // loop_exit
      _
    %v392 = vld [vmem:[%s4] sm:$0x1]
    %v394 = vperm.slane %v392, 0
    %396 = vst [vmem:[#allocation4] sm:$0xff] 0.0
    loop: start=0, step=1, limit=8
    $region69: #{lfads_teacher_forward.7} parent=1 // loop_pre_header
      _
    $region70: #{lfads_teacher_forward.7} parent=1 // loop_header
      %s398 = sphi 0, %s402
      %p399 = scmp.ge.s32.totalorder %s398, 8
    $region71: #{lfads_teacher_forward.7} parent=1 // loop_header_branch
      %401 = sbr.rel (%p399) target = $region75
    $region72: #{lfads_teacher_forward.7} parent=1 // loop_body
      %s403 = smul.u32 %s398, 8
      %s404 = ssub.s32 7, %s398
      %s405 = smul.u32 %s404, 8
      %v406 = vld [vmem:[#allocation4] sm:$0xff]
      %v407 = vld [vmem:[#allocation10] sm:$0xff]
      %v408 = vld [vmem:[#allocation10 + $0x8] sm:$0xff]
      %v409 = vld [vmem:[#allocation10 + $0x10] sm:$0xff]
      %v410 = vld [vmem:[#allocation10 + $0x18] sm:$0xff]
      %v411 = vld [vmem:[#allocation10 + $0x20] sm:$0xff]
      %v412 = vld [vmem:[#allocation10 + $0x28] sm:$0xff]
      %v413 = vld [vmem:[#allocation10 + $0x30] sm:$0xff]
      %v414 = vld [vmem:[#allocation10 + $0x38] sm:$0xff]
      %v415 = vld [vmem:[#allocation10 + $0x40] sm:$0xff]
      %v416 = vld [vmem:[#allocation10 + $0x48] sm:$0xff]
      %v417 = vld [vmem:[#allocation10 + $0x50] sm:$0xff]
      %v418 = vld [vmem:[#allocation10 + $0x58] sm:$0xff]
      %v419 = vld [vmem:[#allocation10 + $0x60] sm:$0xff]
      %v420 = vld [vmem:[#allocation10 + $0x68] sm:$0xff]
      %v421 = vld [vmem:[#allocation10 + $0x70] sm:$0xff]
      %v422 = vld [vmem:[#allocation10 + $0x78] sm:$0xff]
      %v423 = vld [vmem:[#allocation10 + $0x80] sm:$0xff]
      %v424 = vld [vmem:[#allocation10 + $0x88] sm:$0xff]
      %v425 = vld [vmem:[#allocation10 + $0x90] sm:$0xff]
      %v426 = vld [vmem:[#allocation10 + $0x98] sm:$0xff]
      %v427 = vld [vmem:[#allocation10 + $0xa0] sm:$0xff]
      %v428 = vld [vmem:[#allocation10 + $0xa8] sm:$0xff]
      %v429 = vld [vmem:[#allocation10 + $0xb0] sm:$0xff]
      %v430 = vld [vmem:[#allocation10 + $0xb8] sm:$0xff]
      %v431 = vld [vmem:[#allocation10 + $0xc0] sm:$0xff]
      %v432 = vld [vmem:[#allocation10 + $0xc8] sm:$0xff]
      %v433 = vld [vmem:[#allocation10 + $0xd0] sm:$0xff]
      %v434 = vld [vmem:[#allocation10 + $0xd8] sm:$0xff]
      %v435 = vld [vmem:[#allocation10 + $0xe0] sm:$0xff]
      %v436 = vld [vmem:[#allocation10 + $0xe8] sm:$0xff]
      %v437 = vld [vmem:[#allocation10 + $0xf0] sm:$0xff]
      %v438 = vld [vmem:[#allocation10 + $0xf8] sm:$0xff]
      %v439 = vld [vmem:[#allocation10 + $0x100] sm:$0xff]
      %v440 = vld [vmem:[#allocation10 + $0x108] sm:$0xff]
      %v441 = vld [vmem:[#allocation10 + $0x110] sm:$0xff]
      %v442 = vld [vmem:[#allocation10 + $0x118] sm:$0xff]
      %v443 = vld [vmem:[#allocation10 + $0x120] sm:$0xff]
      %v444 = vld [vmem:[#allocation10 + $0x128] sm:$0xff]
      %v445 = vld [vmem:[#allocation10 + $0x130] sm:$0xff]
      %v446 = vld [vmem:[#allocation10 + $0x138] sm:$0xff]
      %v447 = vld [vmem:[#allocation10 + $0x140] sm:$0xff]
      %v448 = vld [vmem:[#allocation10 + $0x148] sm:$0xff]
      %v449 = vld [vmem:[#allocation10 + $0x150] sm:$0xff]
      %v450 = vld [vmem:[#allocation10 + $0x158] sm:$0xff]
      %v451 = vld [vmem:[#allocation10 + $0x160] sm:$0xff]
      %v452 = vld [vmem:[#allocation10 + $0x168] sm:$0xff]
      %v453 = vld [vmem:[#allocation10 + $0x170] sm:$0xff]
      %v454 = vld [vmem:[#allocation10 + $0x178] sm:$0xff]
      %455 = vmatpush.msra.mxu0 %v452
      %456 = vmatpush.msra.mxu0 %v449
      %457 = vmatpush.msra.mxu0 %v446
      %458 = vmatpush.msra.mxu0 %v443
      %459 = vmatpush.msra.mxu0 %v440
      %460 = vmatpush.msra.mxu0 %v437
      %461 = vmatpush.msra.mxu0 %v434
      %462 = vmatpush.msra.mxu0 %v431
      %463 = vmatpush.msra.mxu0 %v428
      %464 = vmatpush.msra.mxu0 %v425
      %465 = vmatpush.msra.mxu0 %v422
      %466 = vmatpush.msra.mxu0 %v419
      %467 = vmatpush.msra.mxu0 %v416
      %468 = vmatpush.msra.mxu0 %v413
      %469 = vmatpush.msra.mxu0 %v410
      %470 = vmatpush.msra.mxu0 %v407
      %471 = vmatmul.f32.gmra.mxu0 %v406
      %v472 = vpop.f32.mrf.mxu0
      %v473 = vadd.f32 0.0, %v472
      %474 = vdwg.mxu0
      %475 = vmatpush.msra.mxu0 %v453
      %476 = vmatpush.msra.mxu0 %v450
      %477 = vmatpush.msra.mxu0 %v447
      %478 = vmatpush.msra.mxu0 %v444
      %479 = vmatpush.msra.mxu0 %v441
      %480 = vmatpush.msra.mxu0 %v438
      %481 = vmatpush.msra.mxu0 %v435
      %482 = vmatpush.msra.mxu0 %v432
      %483 = vmatpush.msra.mxu0 %v429
      %484 = vmatpush.msra.mxu0 %v426
      %485 = vmatpush.msra.mxu0 %v423
      %486 = vmatpush.msra.mxu0 %v420
      %487 = vmatpush.msra.mxu0 %v417
      %488 = vmatpush.msra.mxu0 %v414
      %489 = vmatpush.msra.mxu0 %v411
      %490 = vmatpush.msra.mxu0 %v408
      %491 = vmatmul.f32.gmra.mxu0 %v406
      %v492 = vpop.f32.mrf.mxu0
      %v493 = vadd.f32 0.0, %v492
      %494 = vdwg.mxu0
      %495 = vmatpush.msra.mxu0 %v454
      %496 = vmatpush.msra.mxu0 %v451
      %497 = vmatpush.msra.mxu0 %v448
      %498 = vmatpush.msra.mxu0 %v445
      %499 = vmatpush.msra.mxu0 %v442
      %500 = vmatpush.msra.mxu0 %v439
      %501 = vmatpush.msra.mxu0 %v436
      %502 = vmatpush.msra.mxu0 %v433
      %503 = vmatpush.msra.mxu0 %v430
      %504 = vmatpush.msra.mxu0 %v427
      %505 = vmatpush.msra.mxu0 %v424
      %506 = vmatpush.msra.mxu0 %v421
      %507 = vmatpush.msra.mxu0 %v418
      %508 = vmatpush.msra.mxu0 %v415
      %509 = vmatpush.msra.mxu0 %v412
      %510 = vmatpush.msra.mxu0 %v409
      %511 = vmatmul.f32.gmra.mxu0 %v406
      %v512 = vpop.f32.mrf.mxu0
      %v513 = vadd.f32 0.0, %v512
      %514 = vdwg.mxu0
      %s515 = sshra.s32 %s403, 3
      %s516 = sand.u32 %s403, 7
      %s517 = smul.u32 %s515, 3
      %s518 = smul.addr %s517, 8
      %s519 = scalar_lea.vmem [#allocation2], %s518
      %v520 = vld [vmem:[%s519] sm:$0xff]
      %v521 = vld [vmem:[%s519 + $0x8] sm:$0xff]
      %v522 = vld [vmem:[%s519 + $0x10] sm:$0xff]
      %v523 = vadd.f32 %v520, %v473
      %v524 = vxor.u32 %v523, 2147483648
      %v525 = vmul.f32 %v524, 1.442695
      %v526 = vpow.pop %v525
      %v527 = vadd.f32 %v526, 1.0
      %v528 = vrcp.pop %v527
      %v529 = vmul.f32 %v527, %v528
      %v530 = vsub.f32 1.0, %v529
      %v531 = vmul.f32 %v528, %v530
      %v532 = vadd.f32 %v528, %v531
      %vm533 = vweird.f32 %v527
      %vm534 = vweird.f32 %v528
      %vm535 = vmor %vm533, %vm534
      %v536 = vsel %vm535, %v528, %v532
      %v537 = vand.u32 2147483647, %v527
      %vm538 = vcmp.eq.f32.partialorder %v537, 8.507059e+37
      %v539 = vand.u32 %v527, 2147483648
      %v540 = vor.u32 1.1754944e-38, %v539
      %v541 = vsel %vm538, %v540, %v536
      %v542 = vmul.f32 1.0, %v541
      %v543 = vadd.f32 %v521, %v493
      %v544 = vxor.u32 %v543, 2147483648
      %v545 = vmul.f32 %v544, 1.442695
      %v546 = vpow.pop %v545
      %v547 = vadd.f32 %v546, 1.0
      %v548 = vrcp.pop %v547
      %v549 = vmul.f32 %v547, %v548
      %v550 = vsub.f32 1.0, %v549
      %v551 = vmul.f32 %v548, %v550
      %v552 = vadd.f32 %v548, %v551
      %vm553 = vweird.f32 %v547
      %vm554 = vweird.f32 %v548
      %vm555 = vmor %vm553, %vm554
      %v556 = vsel %vm555, %v548, %v552
      %v557 = vand.u32 2147483647, %v547
      %vm558 = vcmp.eq.f32.partialorder %v557, 8.507059e+37
      %v559 = vand.u32 %v547, 2147483648
      %v560 = vor.u32 1.1754944e-38, %v559
      %v561 = vsel %vm558, %v560, %v556
      %v562 = vmul.f32 1.0, %v561
      %v563 = vadd.f32 %v513, %v394
      %v564 = vmul.f32 %v542, %v563
      %v565 = vadd.f32 %v522, %v564
      %v566 = vtanh.pop %v565
      %v567 = vsub.f32 1.0, %v562
      %v568 = vmul.f32 %v567, %v566
      %v569 = vmul.f32 %v562, %v406
      %v570 = vadd.f32 %v568, %v569
      %571 = vst [vmem:[#allocation4] sm:$0xff] %v570
      %s572 = scalar_lea.vmem [#allocation3], %s403
      %vm573 = vcmask 523264
      %574 = vst.msk [vmem:[%s572] sm:$0xff] %vm573, %v570
      %s575 = scalar_lea.vmem [#allocation3], %s405
      %vm576 = vcmask 1048064
      %577 = vst.msk [vmem:[%s575] sm:$0xff] %vm576, %v570
    $region73: #{lfads_teacher_forward.7} parent=1 // loop_footer
      %s402 = sadd.s32 1, %s398
    $region74: #{lfads_teacher_forward.7} parent=1 // loop_footer_branch
      %397 = sbr.rel target = $region70
    $region75: #{lfads_teacher_forward.7} parent=1 // loop_exit
      _
    %v578 = vld [vmem:[#allocation3] sm:$0xff]
    %v579 = vld [vmem:[#allocation3 + $0x8] sm:$0xff]
    %v580 = vld [vmem:[#allocation3 + $0x10] sm:$0xff]
    %v581 = vld [vmem:[#allocation3 + $0x18] sm:$0xff]
    %v582 = vld [vmem:[#allocation3 + $0x20] sm:$0xff]
    %v583 = vld [vmem:[#allocation3 + $0x28] sm:$0xff]
    %v584 = vld [vmem:[#allocation3 + $0x30] sm:$0xff]
    %v585 = vld [vmem:[#allocation3 + $0x38] sm:$0xff]
    %v586 = vld [vmem:[#allocation12] sm:$0xff]
    %v587 = vld [vmem:[#allocation12 + $0x8] sm:$0xff]
    %v588 = vld [vmem:[#allocation12 + $0x10] sm:$0xff]
    %v589 = vld [vmem:[#allocation12 + $0x18] sm:$0xff]
    %v590 = vld [vmem:[#allocation12 + $0x20] sm:$0xff]
    %v591 = vld [vmem:[#allocation12 + $0x28] sm:$0xff]
    %v592 = vld [vmem:[#allocation12 + $0x30] sm:$0xff]
    %v593 = vld [vmem:[#allocation12 + $0x38] sm:$0xff]
    %v594 = vld [vmem:[#allocation12 + $0x40] sm:$0xff]
    %v595 = vld [vmem:[#allocation12 + $0x48] sm:$0xff]
    %v596 = vld [vmem:[#allocation12 + $0x50] sm:$0xff]
    %v597 = vld [vmem:[#allocation12 + $0x58] sm:$0xff]
    %v598 = vld [vmem:[#allocation12 + $0x60] sm:$0xff]
    %v599 = vld [vmem:[#allocation12 + $0x68] sm:$0xff]
    %v600 = vld [vmem:[#allocation12 + $0x70] sm:$0xff]
    %v601 = vld [vmem:[#allocation12 + $0x78] sm:$0xff]
    %v602 = vld [vmem:[#allocation12 + $0x80] sm:$0xff]
    %v603 = vld [vmem:[#allocation12 + $0x88] sm:$0xff]
    %v604 = vld [vmem:[#allocation12 + $0x90] sm:$0xff]
    %v605 = vld [vmem:[#allocation12 + $0x98] sm:$0xff]
    %v606 = vld [vmem:[#allocation12 + $0xa0] sm:$0xff]
    %v607 = vld [vmem:[#allocation12 + $0xa8] sm:$0xff]
    %v608 = vld [vmem:[#allocation12 + $0xb0] sm:$0xff]
    %v609 = vld [vmem:[#allocation12 + $0xb8] sm:$0xff]
    %v610 = vld [vmem:[#allocation12 + $0xc0] sm:$0xff]
    %v611 = vld [vmem:[#allocation12 + $0xc8] sm:$0xff]
    %v612 = vld [vmem:[#allocation12 + $0xd0] sm:$0xff]
    %v613 = vld [vmem:[#allocation12 + $0xd8] sm:$0xff]
    %v614 = vld [vmem:[#allocation12 + $0xe0] sm:$0xff]
    %v615 = vld [vmem:[#allocation12 + $0xe8] sm:$0xff]
    %v616 = vld [vmem:[#allocation12 + $0xf0] sm:$0xff]
    %v617 = vld [vmem:[#allocation12 + $0xf8] sm:$0xff]
    %v618 = vld [vmem:[#allocation12 + $0x100] sm:$0xff]
    %v619 = vld [vmem:[#allocation12 + $0x108] sm:$0xff]
    %v620 = vld [vmem:[#allocation12 + $0x110] sm:$0xff]
    %v621 = vld [vmem:[#allocation12 + $0x118] sm:$0xff]
    %v622 = vld [vmem:[#allocation12 + $0x120] sm:$0xff]
    %v623 = vld [vmem:[#allocation12 + $0x128] sm:$0xff]
    %v624 = vld [vmem:[#allocation12 + $0x130] sm:$0xff]
    %v625 = vld [vmem:[#allocation12 + $0x138] sm:$0xff]
    %v626 = vld [vmem:[#allocation12 + $0x140] sm:$0xff]
    %v627 = vld [vmem:[#allocation12 + $0x148] sm:$0xff]
    %v628 = vld [vmem:[#allocation12 + $0x150] sm:$0xff]
    %v629 = vld [vmem:[#allocation12 + $0x158] sm:$0xff]
    %v630 = vld [vmem:[#allocation12 + $0x160] sm:$0xff]
    %v631 = vld [vmem:[#allocation12 + $0x168] sm:$0xff]
    %v632 = vld [vmem:[#allocation12 + $0x170] sm:$0xff]
    %v633 = vld [vmem:[#allocation12 + $0x178] sm:$0xff]
    %v634 = vld [vmem:[%s6] sm:$0x7]
    %v636 = vperm.slane %v634, 0
    %v637 = vperm.slane %v634, 1
    %v638 = vperm.slane %v634, 2
    %642 = vmatpush.msra.mxu0 %v631
    %643 = vmatpush.msra.mxu0 %v628
    %644 = vmatpush.msra.mxu0 %v625
    %645 = vmatpush.msra.mxu0 %v622
    %646 = vmatpush.msra.mxu0 %v619
    %647 = vmatpush.msra.mxu0 %v616
    %648 = vmatpush.msra.mxu0 %v613
    %649 = vmatpush.msra.mxu0 %v610
    %650 = vmatpush.msra.mxu0 %v607
    %651 = vmatpush.msra.mxu0 %v604
    %652 = vmatpush.msra.mxu0 %v601
    %653 = vmatpush.msra.mxu0 %v598
    %654 = vmatpush.msra.mxu0 %v595
    %655 = vmatpush.msra.mxu0 %v592
    %656 = vmatpush.msra.mxu0 %v589
    %657 = vmatpush.msra.mxu0 %v586
    %658 = vmatmul.f32.gmra.mxu0 %v578
    %v659 = vpop.f32.mrf.mxu0
    %v660 = vadd.f32 %v636, %v659
    %661 = vmatmul.f32.gmra.mxu0 %v579
    %v662 = vpop.f32.mrf.mxu0
    %v663 = vadd.f32 %v636, %v662
    %664 = vmatmul.f32.gmra.mxu0 %v580
    %v665 = vpop.f32.mrf.mxu0
    %v666 = vadd.f32 %v636, %v665
    %667 = vmatmul.f32.gmra.mxu0 %v581
    %v668 = vpop.f32.mrf.mxu0
    %v669 = vadd.f32 %v636, %v668
    %670 = vmatmul.f32.gmra.mxu0 %v582
    %v671 = vpop.f32.mrf.mxu0
    %v672 = vadd.f32 %v636, %v671
    %673 = vmatmul.f32.gmra.mxu0 %v583
    %v674 = vpop.f32.mrf.mxu0
    %v675 = vadd.f32 %v636, %v674
    %676 = vmatmul.f32.gmra.mxu0 %v584
    %v677 = vpop.f32.mrf.mxu0
    %v678 = vadd.f32 %v636, %v677
    %679 = vmatmul.f32.gmra.mxu0 %v585
    %v680 = vpop.f32.mrf.mxu0
    %v681 = vadd.f32 %v636, %v680
    %682 = vdwg.mxu0
    %683 = vmatpush.msra.mxu0 %v632
    %684 = vmatpush.msra.mxu0 %v629
    %685 = vmatpush.msra.mxu0 %v626
    %686 = vmatpush.msra.mxu0 %v623
    %687 = vmatpush.msra.mxu0 %v620
    %688 = vmatpush.msra.mxu0 %v617
    %689 = vmatpush.msra.mxu0 %v614
    %690 = vmatpush.msra.mxu0 %v611
    %691 = vmatpush.msra.mxu0 %v608
    %692 = vmatpush.msra.mxu0 %v605
    %693 = vmatpush.msra.mxu0 %v602
    %694 = vmatpush.msra.mxu0 %v599
    %695 = vmatpush.msra.mxu0 %v596
    %696 = vmatpush.msra.mxu0 %v593
    %697 = vmatpush.msra.mxu0 %v590
    %698 = vmatpush.msra.mxu0 %v587
    %699 = vmatmul.f32.gmra.mxu0 %v578
    %v700 = vpop.f32.mrf.mxu0
    %v701 = vadd.f32 %v637, %v700
    %702 = vmatmul.f32.gmra.mxu0 %v579
    %v703 = vpop.f32.mrf.mxu0
    %v704 = vadd.f32 %v637, %v703
    %705 = vmatmul.f32.gmra.mxu0 %v580
    %v706 = vpop.f32.mrf.mxu0
    %v707 = vadd.f32 %v637, %v706
    %708 = vmatmul.f32.gmra.mxu0 %v581
    %v709 = vpop.f32.mrf.mxu0
    %v710 = vadd.f32 %v637, %v709
    %711 = vmatmul.f32.gmra.mxu0 %v582
    %v712 = vpop.f32.mrf.mxu0
    %v713 = vadd.f32 %v637, %v712
    %714 = vmatmul.f32.gmra.mxu0 %v583
    %v715 = vpop.f32.mrf.mxu0
    %v716 = vadd.f32 %v637, %v715
    %717 = vmatmul.f32.gmra.mxu0 %v584
    %v718 = vpop.f32.mrf.mxu0
    %v719 = vadd.f32 %v637, %v718
    %720 = vmatmul.f32.gmra.mxu0 %v585
    %v721 = vpop.f32.mrf.mxu0
    %v722 = vadd.f32 %v637, %v721
    %723 = vdwg.mxu0
    %724 = vmatpush.msra.mxu0 %v633
    %725 = vmatpush.msra.mxu0 %v630
    %726 = vmatpush.msra.mxu0 %v627
    %727 = vmatpush.msra.mxu0 %v624
    %728 = vmatpush.msra.mxu0 %v621
    %729 = vmatpush.msra.mxu0 %v618
    %730 = vmatpush.msra.mxu0 %v615
    %731 = vmatpush.msra.mxu0 %v612
    %732 = vmatpush.msra.mxu0 %v609
    %733 = vmatpush.msra.mxu0 %v606
    %734 = vmatpush.msra.mxu0 %v603
    %735 = vmatpush.msra.mxu0 %v600
    %736 = vmatpush.msra.mxu0 %v597
    %737 = vmatpush.msra.mxu0 %v594
    %738 = vmatpush.msra.mxu0 %v591
    %739 = vmatpush.msra.mxu0 %v588
    %740 = vmatmul.f32.gmra.mxu0 %v578
    %v741 = vpop.f32.mrf.mxu0
    %v742 = vadd.f32 %v638, %v741
    %743 = vmatmul.f32.gmra.mxu0 %v579
    %v744 = vpop.f32.mrf.mxu0
    %v745 = vadd.f32 %v638, %v744
    %746 = vmatmul.f32.gmra.mxu0 %v580
    %v747 = vpop.f32.mrf.mxu0
    %v748 = vadd.f32 %v638, %v747
    %749 = vmatmul.f32.gmra.mxu0 %v581
    %v750 = vpop.f32.mrf.mxu0
    %v751 = vadd.f32 %v638, %v750
    %752 = vmatmul.f32.gmra.mxu0 %v582
    %v753 = vpop.f32.mrf.mxu0
    %v754 = vadd.f32 %v638, %v753
    %755 = vmatmul.f32.gmra.mxu0 %v583
    %v756 = vpop.f32.mrf.mxu0
    %v757 = vadd.f32 %v638, %v756
    %758 = vmatmul.f32.gmra.mxu0 %v584
    %v759 = vpop.f32.mrf.mxu0
    %v760 = vadd.f32 %v638, %v759
    %761 = vmatmul.f32.gmra.mxu0 %v585
    %v762 = vpop.f32.mrf.mxu0
    %v763 = vadd.f32 %v638, %v762
    %764 = vdwg.mxu0
    %765 = vst [vmem:[#allocation5] sm:$0xff] %v660
    %766 = vst [vmem:[#allocation5 + $0x8] sm:$0xff] %v701
    %767 = vst [vmem:[#allocation5 + $0x10] sm:$0xff] %v742
    %768 = vst [vmem:[#allocation5 + $0x18] sm:$0xff] %v663
    %769 = vst [vmem:[#allocation5 + $0x20] sm:$0xff] %v704
    %770 = vst [vmem:[#allocation5 + $0x28] sm:$0xff] %v745
    %771 = vst [vmem:[#allocation5 + $0x30] sm:$0xff] %v666
    %772 = vst [vmem:[#allocation5 + $0x38] sm:$0xff] %v707
    %773 = vst [vmem:[#allocation5 + $0x40] sm:$0xff] %v748
    %774 = vst [vmem:[#allocation5 + $0x48] sm:$0xff] %v669
    %775 = vst [vmem:[#allocation5 + $0x50] sm:$0xff] %v710
    %776 = vst [vmem:[#allocation5 + $0x58] sm:$0xff] %v751
    %777 = vst [vmem:[#allocation5 + $0x60] sm:$0xff] %v672
    %778 = vst [vmem:[#allocation5 + $0x68] sm:$0xff] %v713
    %779 = vst [vmem:[#allocation5 + $0x70] sm:$0xff] %v754
    %780 = vst [vmem:[#allocation5 + $0x78] sm:$0xff] %v675
    %781 = vst [vmem:[#allocation5 + $0x80] sm:$0xff] %v716
    %782 = vst [vmem:[#allocation5 + $0x88] sm:$0xff] %v757
    %783 = vst [vmem:[#allocation5 + $0x90] sm:$0xff] %v678
    %784 = vst [vmem:[#allocation5 + $0x98] sm:$0xff] %v719
    %785 = vst [vmem:[#allocation5 + $0xa0] sm:$0xff] %v760
    %786 = vst [vmem:[#allocation5 + $0xa8] sm:$0xff] %v681
    %787 = vst [vmem:[#allocation5 + $0xb0] sm:$0xff] %v722
    %788 = vst [vmem:[#allocation5 + $0xb8] sm:$0xff] %v763
    loop: start=0, step=1, limit=4
    $region76: #{lfads_teacher_forward.7} parent=1 // loop_pre_header
      _
    $region77: #{lfads_teacher_forward.7} parent=1 // loop_header
      %s790 = sphi 0, %s794
      %p791 = scmp.ge.s32.totalorder %s790, 4
    $region78: #{lfads_teacher_forward.7} parent=1 // loop_header_branch
      %793 = sbr.rel (%p791) target = $region82
    $region79: #{lfads_teacher_forward.7} parent=1 // loop_body
      %s795 = smul.u32 %s790, 8
      %s796 = ssub.s32 7, %s790
      %s797 = smul.u32 %s796, 8
      %s798 = sshra.s32 %s795, 3
      %s799 = sand.u32 %s795, 7
      %s800 = smul.u32 %s798, 3
      %s801 = smul.addr %s800, 8
      %s802 = scalar_lea.vmem [#allocation5], %s801
      %v803 = vld [vmem:[%s802] sm:$0xff]
      %v804 = vld [vmem:[%s802 + $0x8] sm:$0xff]
      %v805 = vld [vmem:[%s802 + $0x10] sm:$0xff]
      %s806 = sshra.s32 %s797, 3
      %s807 = sand.u32 %s797, 7
      %s808 = smul.u32 %s806, 3
      %s809 = smul.addr %s808, 8
      %s810 = scalar_lea.vmem [#allocation5], %s809
      %v811 = vld [vmem:[%s810] sm:$0xff]
      %v812 = vld [vmem:[%s810 + $0x8] sm:$0xff]
      %v813 = vld [vmem:[%s810 + $0x10] sm:$0xff]
      %v814 = vsel %vm352, %v803, %v811
      %v815 = vsel %vm353, %v804, %v812
      %v816 = vsel %vm354, %v805, %v813
      %817 = vst [vmem:[%s802] sm:$0xff] %v814
      %818 = vst [vmem:[%s802 + $0x8] sm:$0xff] %v815
      %819 = vst [vmem:[%s802 + $0x10] sm:$0xff] %v816
      %v820 = vsel %vm352, %v811, %v803
      %v821 = vsel %vm353, %v812, %v804
      %v822 = vsel %vm354, %v813, %v805
      %823 = vst [vmem:[%s810] sm:$0xff] %v820
      %824 = vst [vmem:[%s810 + $0x8] sm:$0xff] %v821
      %825 = vst [vmem:[%s810 + $0x10] sm:$0xff] %v822
    $region80: #{lfads_teacher_forward.7} parent=1 // loop_footer
      %s794 = sadd.s32 1, %s790
    $region81: #{lfads_teacher_forward.7} parent=1 // loop_footer_branch
      %789 = sbr.rel target = $region77
    $region82: #{lfads_teacher_forward.7} parent=1 // loop_exit
      _
    %v826 = vld [vmem:[%s8] sm:$0x1]
    %v828 = vperm.slane %v826, 0
    %830 = vst [vmem:[#allocation7] sm:$0xff] 0.0
    loop: start=0, step=1, limit=8
    $region83: #{lfads_teacher_forward.7} parent=1 // loop_pre_header
      _
    $region84: #{lfads_teacher_forward.7} parent=1 // loop_header
      %s832 = sphi 0, %s836
      %p833 = scmp.ge.s32.totalorder %s832, 8
    $region85: #{lfads_teacher_forward.7} parent=1 // loop_header_branch
      %835 = sbr.rel (%p833) target = $region89
    $region86: #{lfads_teacher_forward.7} parent=1 // loop_body
      %s837 = smul.u32 %s832, 8
      %s838 = ssub.s32 7, %s832
      %s839 = smul.u32 %s838, 8
      %v840 = vld [vmem:[#allocation7] sm:$0xff]
      %v841 = vld [vmem:[#allocation13] sm:$0xff]
      %v842 = vld [vmem:[#allocation13 + $0x8] sm:$0xff]
      %v843 = vld [vmem:[#allocation13 + $0x10] sm:$0xff]
      %v844 = vld [vmem:[#allocation13 + $0x18] sm:$0xff]
      %v845 = vld [vmem:[#allocation13 + $0x20] sm:$0xff]
      %v846 = vld [vmem:[#allocation13 + $0x28] sm:$0xff]
      %v847 = vld [vmem:[#allocation13 + $0x30] sm:$0xff]
      %v848 = vld [vmem:[#allocation13 + $0x38] sm:$0xff]
      %v849 = vld [vmem:[#allocation13 + $0x40] sm:$0xff]
      %v850 = vld [vmem:[#allocation13 + $0x48] sm:$0xff]
      %v851 = vld [vmem:[#allocation13 + $0x50] sm:$0xff]
      %v852 = vld [vmem:[#allocation13 + $0x58] sm:$0xff]
      %v853 = vld [vmem:[#allocation13 + $0x60] sm:$0xff]
      %v854 = vld [vmem:[#allocation13 + $0x68] sm:$0xff]
      %v855 = vld [vmem:[#allocation13 + $0x70] sm:$0xff]
      %v856 = vld [vmem:[#allocation13 + $0x78] sm:$0xff]
      %v857 = vld [vmem:[#allocation13 + $0x80] sm:$0xff]
      %v858 = vld [vmem:[#allocation13 + $0x88] sm:$0xff]
      %v859 = vld [vmem:[#allocation13 + $0x90] sm:$0xff]
      %v860 = vld [vmem:[#allocation13 + $0x98] sm:$0xff]
      %v861 = vld [vmem:[#allocation13 + $0xa0] sm:$0xff]
      %v862 = vld [vmem:[#allocation13 + $0xa8] sm:$0xff]
      %v863 = vld [vmem:[#allocation13 + $0xb0] sm:$0xff]
      %v864 = vld [vmem:[#allocation13 + $0xb8] sm:$0xff]
      %v865 = vld [vmem:[#allocation13 + $0xc0] sm:$0xff]
      %v866 = vld [vmem:[#allocation13 + $0xc8] sm:$0xff]
      %v867 = vld [vmem:[#allocation13 + $0xd0] sm:$0xff]
      %v868 = vld [vmem:[#allocation13 + $0xd8] sm:$0xff]
      %v869 = vld [vmem:[#allocation13 + $0xe0] sm:$0xff]
      %v870 = vld [vmem:[#allocation13 + $0xe8] sm:$0xff]
      %v871 = vld [vmem:[#allocation13 + $0xf0] sm:$0xff]
      %v872 = vld [vmem:[#allocation13 + $0xf8] sm:$0xff]
      %v873 = vld [vmem:[#allocation13 + $0x100] sm:$0xff]
      %v874 = vld [vmem:[#allocation13 + $0x108] sm:$0xff]
      %v875 = vld [vmem:[#allocation13 + $0x110] sm:$0xff]
      %v876 = vld [vmem:[#allocation13 + $0x118] sm:$0xff]
      %v877 = vld [vmem:[#allocation13 + $0x120] sm:$0xff]
      %v878 = vld [vmem:[#allocation13 + $0x128] sm:$0xff]
      %v879 = vld [vmem:[#allocation13 + $0x130] sm:$0xff]
      %v880 = vld [vmem:[#allocation13 + $0x138] sm:$0xff]
      %v881 = vld [vmem:[#allocation13 + $0x140] sm:$0xff]
      %v882 = vld [vmem:[#allocation13 + $0x148] sm:$0xff]
      %v883 = vld [vmem:[#allocation13 + $0x150] sm:$0xff]
      %v884 = vld [vmem:[#allocation13 + $0x158] sm:$0xff]
      %v885 = vld [vmem:[#allocation13 + $0x160] sm:$0xff]
      %v886 = vld [vmem:[#allocation13 + $0x168] sm:$0xff]
      %v887 = vld [vmem:[#allocation13 + $0x170] sm:$0xff]
      %v888 = vld [vmem:[#allocation13 + $0x178] sm:$0xff]
      %889 = vmatpush.msra.mxu0 %v886
      %890 = vmatpush.msra.mxu0 %v883
      %891 = vmatpush.msra.mxu0 %v880
      %892 = vmatpush.msra.mxu0 %v877
      %893 = vmatpush.msra.mxu0 %v874
      %894 = vmatpush.msra.mxu0 %v871
      %895 = vmatpush.msra.mxu0 %v868
      %896 = vmatpush.msra.mxu0 %v865
      %897 = vmatpush.msra.mxu0 %v862
      %898 = vmatpush.msra.mxu0 %v859
      %899 = vmatpush.msra.mxu0 %v856
      %900 = vmatpush.msra.mxu0 %v853
      %901 = vmatpush.msra.mxu0 %v850
      %902 = vmatpush.msra.mxu0 %v847
      %903 = vmatpush.msra.mxu0 %v844
      %904 = vmatpush.msra.mxu0 %v841
      %905 = vmatmul.f32.gmra.mxu0 %v840
      %v906 = vpop.f32.mrf.mxu0
      %v907 = vadd.f32 0.0, %v906
      %908 = vdwg.mxu0
      %909 = vmatpush.msra.mxu0 %v887
      %910 = vmatpush.msra.mxu0 %v884
      %911 = vmatpush.msra.mxu0 %v881
      %912 = vmatpush.msra.mxu0 %v878
      %913 = vmatpush.msra.mxu0 %v875
      %914 = vmatpush.msra.mxu0 %v872
      %915 = vmatpush.msra.mxu0 %v869
      %916 = vmatpush.msra.mxu0 %v866
      %917 = vmatpush.msra.mxu0 %v863
      %918 = vmatpush.msra.mxu0 %v860
      %919 = vmatpush.msra.mxu0 %v857
      %920 = vmatpush.msra.mxu0 %v854
      %921 = vmatpush.msra.mxu0 %v851
      %922 = vmatpush.msra.mxu0 %v848
      %923 = vmatpush.msra.mxu0 %v845
      %924 = vmatpush.msra.mxu0 %v842
      %925 = vmatmul.f32.gmra.mxu0 %v840
      %v926 = vpop.f32.mrf.mxu0
      %v927 = vadd.f32 0.0, %v926
      %928 = vdwg.mxu0
      %929 = vmatpush.msra.mxu0 %v888
      %930 = vmatpush.msra.mxu0 %v885
      %931 = vmatpush.msra.mxu0 %v882
      %932 = vmatpush.msra.mxu0 %v879
      %933 = vmatpush.msra.mxu0 %v876
      %934 = vmatpush.msra.mxu0 %v873
      %935 = vmatpush.msra.mxu0 %v870
      %936 = vmatpush.msra.mxu0 %v867
      %937 = vmatpush.msra.mxu0 %v864
      %938 = vmatpush.msra.mxu0 %v861
      %939 = vmatpush.msra.mxu0 %v858
      %940 = vmatpush.msra.mxu0 %v855
      %941 = vmatpush.msra.mxu0 %v852
      %942 = vmatpush.msra.mxu0 %v849
      %943 = vmatpush.msra.mxu0 %v846
      %944 = vmatpush.msra.mxu0 %v843
      %945 = vmatmul.f32.gmra.mxu0 %v840
      %v946 = vpop.f32.mrf.mxu0
      %v947 = vadd.f32 0.0, %v946
      %948 = vdwg.mxu0
      %s949 = sshra.s32 %s837, 3
      %s950 = sand.u32 %s837, 7
      %s951 = smul.u32 %s949, 3
      %s952 = smul.addr %s951, 8
      %s953 = scalar_lea.vmem [#allocation5], %s952
      %v954 = vld [vmem:[%s953] sm:$0xff]
      %v955 = vld [vmem:[%s953 + $0x8] sm:$0xff]
      %v956 = vld [vmem:[%s953 + $0x10] sm:$0xff]
      %v957 = vadd.f32 %v954, %v907
      %v958 = vxor.u32 %v957, 2147483648
      %v959 = vmul.f32 %v958, 1.442695
      %v960 = vpow.pop %v959
      %v961 = vadd.f32 %v960, 1.0
      %v962 = vrcp.pop %v961
      %v963 = vmul.f32 %v961, %v962
      %v964 = vsub.f32 1.0, %v963
      %v965 = vmul.f32 %v962, %v964
      %v966 = vadd.f32 %v962, %v965
      %vm967 = vweird.f32 %v961
      %vm968 = vweird.f32 %v962
      %vm969 = vmor %vm967, %vm968
      %v970 = vsel %vm969, %v962, %v966
      %v971 = vand.u32 2147483647, %v961
      %vm972 = vcmp.eq.f32.partialorder %v971, 8.507059e+37
      %v973 = vand.u32 %v961, 2147483648
      %v974 = vor.u32 1.1754944e-38, %v973
      %v975 = vsel %vm972, %v974, %v970
      %v976 = vmul.f32 1.0, %v975
      %v977 = vadd.f32 %v955, %v927
      %v978 = vxor.u32 %v977, 2147483648
      %v979 = vmul.f32 %v978, 1.442695
      %v980 = vpow.pop %v979
      %v981 = vadd.f32 %v980, 1.0
      %v982 = vrcp.pop %v981
      %v983 = vmul.f32 %v981, %v982
      %v984 = vsub.f32 1.0, %v983
      %v985 = vmul.f32 %v982, %v984
      %v986 = vadd.f32 %v982, %v985
      %vm987 = vweird.f32 %v981
      %vm988 = vweird.f32 %v982
      %vm989 = vmor %vm987, %vm988
      %v990 = vsel %vm989, %v982, %v986
      %v991 = vand.u32 2147483647, %v981
      %vm992 = vcmp.eq.f32.partialorder %v991, 8.507059e+37
      %v993 = vand.u32 %v981, 2147483648
      %v994 = vor.u32 1.1754944e-38, %v993
      %v995 = vsel %vm992, %v994, %v990
      %v996 = vmul.f32 1.0, %v995
      %v997 = vadd.f32 %v947, %v828
      %v998 = vmul.f32 %v976, %v997
      %v999 = vadd.f32 %v956, %v998
      %v1000 = vtanh.pop %v999
      %v1001 = vsub.f32 1.0, %v996
      %v1002 = vmul.f32 %v1001, %v1000
      %v1003 = vmul.f32 %v996, %v840
      %v1004 = vadd.f32 %v1002, %v1003
      %1005 = vst [vmem:[#allocation7] sm:$0xff] %v1004
      %s1006 = scalar_lea.vmem [#allocation6], %s837
      %vm1007 = vcmask 523264
      %1008 = vst.msk [vmem:[%s1006] sm:$0xff] %vm1007, %v1004
      %s1009 = scalar_lea.vmem [#allocation6], %s839
      %vm1010 = vcmask 1048064
      %1011 = vst.msk [vmem:[%s1009] sm:$0xff] %vm1010, %v1004
    $region87: #{lfads_teacher_forward.7} parent=1 // loop_footer
      %s836 = sadd.s32 1, %s832
    $region88: #{lfads_teacher_forward.7} parent=1 // loop_footer_branch
      %831 = sbr.rel target = $region84
    $region89: #{lfads_teacher_forward.7} parent=1 // loop_exit
      _
    %v1012 = vld [vmem:[#allocation6] sm:$0xff]
    %v1013 = vld [vmem:[#allocation6 + $0x8] sm:$0xff]
    %v1014 = vld [vmem:[#allocation6 + $0x10] sm:$0xff]
    %v1015 = vld [vmem:[#allocation6 + $0x18] sm:$0xff]
    %v1016 = vld [vmem:[#allocation6 + $0x20] sm:$0xff]
    %v1017 = vld [vmem:[#allocation6 + $0x28] sm:$0xff]
    %v1018 = vld [vmem:[#allocation6 + $0x30] sm:$0xff]
    %v1019 = vld [vmem:[#allocation6 + $0x38] sm:$0xff]
    %v1020 = vld [vmem:[%s9] sm:$0xff]
    %v1021 = vld [vmem:[%s9 + $0x8] sm:$0xff]
    %v1022 = vld [vmem:[%s9 + $0x10] sm:$0xff]
    %v1023 = vld [vmem:[%s9 + $0x18] sm:$0xff]
    %v1024 = vld [vmem:[%s9 + $0x20] sm:$0xff]
    %v1025 = vld [vmem:[%s9 + $0x28] sm:$0xff]
    %v1026 = vld [vmem:[%s9 + $0x30] sm:$0xff]
    %v1027 = vld [vmem:[%s9 + $0x38] sm:$0xff]
    %v1028 = vld [vmem:[%s9 + $0x40] sm:$0xff]
    %v1029 = vld [vmem:[%s9 + $0x48] sm:$0xff]
    %v1030 = vld [vmem:[%s9 + $0x50] sm:$0xff]
    %v1031 = vld [vmem:[%s9 + $0x58] sm:$0xff]
    %v1032 = vld [vmem:[%s9 + $0x60] sm:$0xff]
    %v1033 = vld [vmem:[%s9 + $0x68] sm:$0xff]
    %v1034 = vld [vmem:[%s9 + $0x70] sm:$0xff]
    %v1035 = vld [vmem:[%s9 + $0x78] sm:$0xff]
    %v1036 = vld [vmem:[%s10] sm:$0x1]
    %v1038 = vperm.slane %v1036, 0
    %1040 = vmatpush.msra.mxu0 %v1035
    %1041 = vmatpush.msra.mxu0 %v1034
    %1042 = vmatpush.msra.mxu0 %v1033
    %1043 = vmatpush.msra.mxu0 %v1032
    %1044 = vmatpush.msra.mxu0 %v1031
    %1045 = vmatpush.msra.mxu0 %v1030
    %1046 = vmatpush.msra.mxu0 %v1029
    %1047 = vmatpush.msra.mxu0 %v1028
    %1048 = vmatpush.msra.mxu0 %v1027
    %1049 = vmatpush.msra.mxu0 %v1026
    %1050 = vmatpush.msra.mxu0 %v1025
    %1051 = vmatpush.msra.mxu0 %v1024
    %1052 = vmatpush.msra.mxu0 %v1023
    %1053 = vmatpush.msra.mxu0 %v1022
    %1054 = vmatpush.msra.mxu0 %v1021
    %1055 = vmatpush.msra.mxu0 %v1020
    %1056 = vmatmul.f32.gmra.mxu0 %v1012
    %v1057 = vpop.f32.mrf.mxu0
    %v1058 = vadd.f32 %v1038, %v1057
    %1059 = vmatmul.f32.gmra.mxu0 %v1013
    %v1060 = vpop.f32.mrf.mxu0
    %v1061 = vadd.f32 %v1038, %v1060
    %1062 = vmatmul.f32.gmra.mxu0 %v1014
    %v1063 = vpop.f32.mrf.mxu0
    %v1064 = vadd.f32 %v1038, %v1063
    %1065 = vmatmul.f32.gmra.mxu0 %v1015
    %v1066 = vpop.f32.mrf.mxu0
    %v1067 = vadd.f32 %v1038, %v1066
    %1068 = vmatmul.f32.gmra.mxu0 %v1016
    %v1069 = vpop.f32.mrf.mxu0
    %v1070 = vadd.f32 %v1038, %v1069
    %1071 = vmatmul.f32.gmra.mxu0 %v1017
    %v1072 = vpop.f32.mrf.mxu0
    %v1073 = vadd.f32 %v1038, %v1072
    %1074 = vmatmul.f32.gmra.mxu0 %v1018
    %v1075 = vpop.f32.mrf.mxu0
    %v1076 = vadd.f32 %v1038, %v1075
    %1077 = vmatmul.f32.gmra.mxu0 %v1019
    %v1078 = vpop.f32.mrf.mxu0
    %v1079 = vadd.f32 %v1038, %v1078
    %1080 = vdwg.mxu0
    %vm1081 = vcmask 523264
    %1082 = vst.msk [vmem:[%s11] sm:$0xff] %vm1081, %v1058
    %1083 = vst.msk [vmem:[%s11 + $0x8] sm:$0xff] %vm1081, %v1061
    %1084 = vst.msk [vmem:[%s11 + $0x10] sm:$0xff] %vm1081, %v1064
    %1085 = vst.msk [vmem:[%s11 + $0x18] sm:$0xff] %vm1081, %v1067
    %1086 = vst.msk [vmem:[%s11 + $0x20] sm:$0xff] %vm1081, %v1070
    %1087 = vst.msk [vmem:[%s11 + $0x28] sm:$0xff] %vm1081, %v1073
    %1088 = vst.msk [vmem:[%s11 + $0x30] sm:$0xff] %vm1081, %v1076
    %1089 = vst.msk [vmem:[%s11 + $0x38] sm:$0xff] %vm1081, %v1079
    // Predicated region
    $region90: #{lfads_teacher_forward.7} parent=1 // pred_check
      _
    $region91: #{lfads_teacher_forward.7} parent=1 // pred_check_branch
      %1091 = sbr.rel (0) target = $region93
    $region92: #{lfads_teacher_forward.7} parent=1 // pred_region
      _
    $region93: #{lfads_teacher_forward.7} parent=1 // pred_fallthru
      _
    // Predicated region
    $region94: #{lfads_teacher_forward.7} parent=1 // pred_check
      _
    $region95: #{lfads_teacher_forward.7} parent=1 // pred_check_branch
      %1093 = sbr.rel (0) target = $region97
    $region96: #{lfads_teacher_forward.7} parent=1 // pred_region
      _
    $region97: #{lfads_teacher_forward.7} parent=1 // pred_fallthru
      _
    %1094 = vsyncpa [#allocation9], 1
    %1095 = vsyncpa [#allocation11], 1
    %1096 = vsyncpa [#allocation14], 1

// kernel: lfads_teacher_forward.9
$region0: #{lfads_teacher_forward.9}
  #allocation0 [shape = 'u32[]', space=smem, size = 0x4, offset = 0x4, fixed_abs, tag = 'smem constant byte address 0x4 - core index']
  #allocation1 [shape = 'u32[72,128]{1,0:T(1,128)}', space=vmem, size = 0x9000, scoped, tag = 'internal scratch']
  %s0 = inlined_call_operand.vmem [shape: f32[64,64], index: 0, kind: input, shape index: {}]
  %s1 = inlined_call_operand.vmem [shape: f32[64,16], index: 1, kind: input, shape index: {}]
  %s2 = inlined_call_operand.vmem [shape: f32[64,64], index: 2, kind: input, shape index: {}]
  %s3 = inlined_call_operand.vmem [shape: f32[1,64], index: 3, kind: input, shape index: {}]
  %s4 = inlined_call_operand.vmem [shape: f32[64,32], index: 4, kind: input, shape index: {}]
  %s5 = inlined_call_operand.vmem [shape: f32[1,32], index: 5, kind: input, shape index: {}]
  %s6 = inlined_call_operand.vmem [shape: f32[32,64], index: 6, kind: input, shape index: {}]
  %s7 = inlined_call_operand.vmem [shape: f32[1,64], index: 7, kind: input, shape index: {}]
  %s8 = inlined_call_operand.vmem [shape: f32[64,128], index: 8, kind: input, shape index: {}]
  %s9 = inlined_call_operand.vmem [shape: f32[1,128], index: 9, kind: input, shape index: {}]
  %s10 = inlined_call_operand.vmem [shape: f32[64,128], index: 10, kind: output, shape index: {0}]
  %s11 = inlined_call_operand.hbm [shape: f32[1,1], index: 11, kind: output, shape index: {1}]
  %12 = xla_tuple %s10, %s11
  %s13 = sld [smem:[#allocation0]]
  $region58: #{lfads_teacher_forward.9} parent=0
    _
  %s15 = ssub.s32 1, %s13
  %s16 = scalar_select 0, %s15, %s13
  $region1: #{lfads_teacher_forward.9} parent=0
    #allocation2 [shape = 'u8[512]{0}', space=vmem, size = 0x400, scoped, tag = 'output window, operand 1, single buffered']
    #allocation3 [shape = 's32[1]{0}', space=sflag, size = 0x4, scoped, tag = 'scoped memory for lfads_teacher_forward.9']
    %17 = vsyncpa [#allocation3], 0
    // Predicated region
    $region2: #{lfads_teacher_forward.9} parent=1 // pred_check
      _
    $region3: #{lfads_teacher_forward.9} parent=1 // pred_check_branch
      %19 = sbr.rel (0) target = $region5
    $region4: #{lfads_teacher_forward.9} parent=1 // pred_region
      _
    $region5: #{lfads_teacher_forward.9} parent=1 // pred_fallthru
      _
    // Predicated region
    $region6: #{lfads_teacher_forward.9} parent=1 // pred_check
      _
    $region7: #{lfads_teacher_forward.9} parent=1 // pred_check_branch
      %21 = sbr.rel (0) target = $region9
    $region8: #{lfads_teacher_forward.9} parent=1 // pred_region
      _
    $region9: #{lfads_teacher_forward.9} parent=1 // pred_fallthru
      _
    // Predicated region
    $region10: #{lfads_teacher_forward.9} parent=1 // pred_check
      _
    $region11: #{lfads_teacher_forward.9} parent=1 // pred_check_branch
      %23 = sbr.rel (0) target = $region13
    $region12: #{lfads_teacher_forward.9} parent=1 // pred_region
      _
    $region13: #{lfads_teacher_forward.9} parent=1 // pred_fallthru
      _
    // Predicated region
    $region14: #{lfads_teacher_forward.9} parent=1 // pred_check
      _
    $region15: #{lfads_teacher_forward.9} parent=1 // pred_check_branch
      %25 = sbr.rel (0) target = $region17
    $region16: #{lfads_teacher_forward.9} parent=1 // pred_region
      _
    $region17: #{lfads_teacher_forward.9} parent=1 // pred_fallthru
      _
    // Predicated region
    $region18: #{lfads_teacher_forward.9} parent=1 // pred_check
      _
    $region19: #{lfads_teacher_forward.9} parent=1 // pred_check_branch
      %27 = sbr.rel (0) target = $region21
    $region20: #{lfads_teacher_forward.9} parent=1 // pred_region
      _
    $region21: #{lfads_teacher_forward.9} parent=1 // pred_fallthru
      _
    // Predicated region
    $region22: #{lfads_teacher_forward.9} parent=1 // pred_check
      _
    $region23: #{lfads_teacher_forward.9} parent=1 // pred_check_branch
      %29 = sbr.rel (0) target = $region25
    $region24: #{lfads_teacher_forward.9} parent=1 // pred_region
      _
    $region25: #{lfads_teacher_forward.9} parent=1 // pred_fallthru
      _
    // Predicated region
    $region26: #{lfads_teacher_forward.9} parent=1 // pred_check
      _
    $region27: #{lfads_teacher_forward.9} parent=1 // pred_check_branch
      %31 = sbr.rel (0) target = $region29
    $region28: #{lfads_teacher_forward.9} parent=1 // pred_region
      _
    $region29: #{lfads_teacher_forward.9} parent=1 // pred_fallthru
      _
    // Predicated region
    $region30: #{lfads_teacher_forward.9} parent=1 // pred_check
      _
    $region31: #{lfads_teacher_forward.9} parent=1 // pred_check_branch
      %33 = sbr.rel (0) target = $region33
    $region32: #{lfads_teacher_forward.9} parent=1 // pred_region
      _
    $region33: #{lfads_teacher_forward.9} parent=1 // pred_fallthru
      _
    // Predicated region
    $region34: #{lfads_teacher_forward.9} parent=1 // pred_check
      _
    $region35: #{lfads_teacher_forward.9} parent=1 // pred_check_branch
      %35 = sbr.rel (0) target = $region37
    $region36: #{lfads_teacher_forward.9} parent=1 // pred_region
      _
    $region37: #{lfads_teacher_forward.9} parent=1 // pred_fallthru
      _
    // Predicated region
    $region38: #{lfads_teacher_forward.9} parent=1 // pred_check
      _
    $region39: #{lfads_teacher_forward.9} parent=1 // pred_check_branch
      %37 = sbr.rel (0) target = $region41
    $region40: #{lfads_teacher_forward.9} parent=1 // pred_region
      _
    $region41: #{lfads_teacher_forward.9} parent=1 // pred_fallthru
      _
    %v38 = vld [vmem:[%s0] sm:$0xff]
    %v39 = vld [vmem:[%s0 + $0x8] sm:$0xff]
    %v40 = vld [vmem:[%s0 + $0x10] sm:$0xff]
    %v41 = vld [vmem:[%s0 + $0x18] sm:$0xff]
    %v42 = vld [vmem:[%s0 + $0x20] sm:$0xff]
    %v43 = vld [vmem:[%s0 + $0x28] sm:$0xff]
    %v44 = vld [vmem:[%s0 + $0x30] sm:$0xff]
    %v45 = vld [vmem:[%s0 + $0x38] sm:$0xff]
    %v46 = vld [vmem:[%s2] sm:$0xff]
    %v47 = vld [vmem:[%s2 + $0x8] sm:$0xff]
    %v48 = vld [vmem:[%s2 + $0x10] sm:$0xff]
    %v49 = vld [vmem:[%s2 + $0x18] sm:$0xff]
    %v50 = vld [vmem:[%s2 + $0x20] sm:$0xff]
    %v51 = vld [vmem:[%s2 + $0x28] sm:$0xff]
    %v52 = vld [vmem:[%s2 + $0x30] sm:$0xff]
    %v53 = vld [vmem:[%s2 + $0x38] sm:$0xff]
    %v54 = vld [vmem:[%s3] sm:$0x1]
    %v56 = vperm.slane %v54, 0
    %vm58 = vcmask 523264
    %v60 = vsel %vm58, %v38, 0
    %v63 = vsel %vm58, %v39, 0
    %v66 = vsel %vm58, %v40, 0
    %v69 = vsel %vm58, %v41, 0
    %v72 = vsel %vm58, %v42, 0
    %v75 = vsel %vm58, %v43, 0
    %v78 = vsel %vm58, %v44, 0
    %v81 = vsel %vm58, %v45, 0
    %83 = vmatpush.msra.mxu0 0.0
    %84 = vmatpush.msra.mxu0 0.0
    %85 = vmatpush.msra.mxu0 0.0
    %86 = vmatpush.msra.mxu0 0.0
    %87 = vmatpush.msra.mxu0 0.0
    %88 = vmatpush.msra.mxu0 0.0
    %89 = vmatpush.msra.mxu0 0.0
    %90 = vmatpush.msra.mxu0 0.0
    %91 = vmatpush.msra.mxu0 %v53
    %92 = vmatpush.msra.mxu0 %v52
    %93 = vmatpush.msra.mxu0 %v51
    %94 = vmatpush.msra.mxu0 %v50
    %95 = vmatpush.msra.mxu0 %v49
    %96 = vmatpush.msra.mxu0 %v48
    %97 = vmatpush.msra.mxu0 %v47
    %98 = vmatpush.msra.mxu0 %v46
    %99 = vmatmul.f32.gmra.mxu0 %v60
    %v100 = vpop.f32.mrf.mxu0
    %v101 = vadd.f32 %v56, %v100
    %102 = vmatmul.f32.gmra.mxu0 %v63
    %v103 = vpop.f32.mrf.mxu0
    %v104 = vadd.f32 %v56, %v103
    %105 = vmatmul.f32.gmra.mxu0 %v66
    %v106 = vpop.f32.mrf.mxu0
    %v107 = vadd.f32 %v56, %v106
    %108 = vmatmul.f32.gmra.mxu0 %v69
    %v109 = vpop.f32.mrf.mxu0
    %v110 = vadd.f32 %v56, %v109
    %111 = vmatmul.f32.gmra.mxu0 %v72
    %v112 = vpop.f32.mrf.mxu0
    %v113 = vadd.f32 %v56, %v112
    %114 = vmatmul.f32.gmra.mxu0 %v75
    %v115 = vpop.f32.mrf.mxu0
    %v116 = vadd.f32 %v56, %v115
    %117 = vmatmul.f32.gmra.mxu0 %v78
    %v118 = vpop.f32.mrf.mxu0
    %v119 = vadd.f32 %v56, %v118
    %120 = vmatmul.f32.gmra.mxu0 %v81
    %v121 = vpop.f32.mrf.mxu0
    %v122 = vadd.f32 %v56, %v121
    %123 = vdwg.mxu0
    %v124 = vld [vmem:[%s4] sm:$0xff]
    %v125 = vld [vmem:[%s4 + $0x8] sm:$0xff]
    %v126 = vld [vmem:[%s4 + $0x10] sm:$0xff]
    %v127 = vld [vmem:[%s4 + $0x18] sm:$0xff]
    %v128 = vld [vmem:[%s4 + $0x20] sm:$0xff]
    %v129 = vld [vmem:[%s4 + $0x28] sm:$0xff]
    %v130 = vld [vmem:[%s4 + $0x30] sm:$0xff]
    %v131 = vld [vmem:[%s4 + $0x38] sm:$0xff]
    %v132 = vld [vmem:[%s5] sm:$0x1]
    %v134 = vperm.slane %v132, 0
    %v137 = vsel %vm58, %v101, 0
    %v140 = vsel %vm58, %v104, 0
    %v143 = vsel %vm58, %v107, 0
    %v146 = vsel %vm58, %v110, 0
    %v149 = vsel %vm58, %v113, 0
    %v152 = vsel %vm58, %v116, 0
    %v155 = vsel %vm58, %v119, 0
    %v158 = vsel %vm58, %v122, 0
    %160 = vmatpush.msra.mxu0 0.0
    %161 = vmatpush.msra.mxu0 0.0
    %162 = vmatpush.msra.mxu0 0.0
    %163 = vmatpush.msra.mxu0 0.0
    %164 = vmatpush.msra.mxu0 0.0
    %165 = vmatpush.msra.mxu0 0.0
    %166 = vmatpush.msra.mxu0 0.0
    %167 = vmatpush.msra.mxu0 0.0
    %168 = vmatpush.msra.mxu0 %v131
    %169 = vmatpush.msra.mxu0 %v130
    %170 = vmatpush.msra.mxu0 %v129
    %171 = vmatpush.msra.mxu0 %v128
    %172 = vmatpush.msra.mxu0 %v127
    %173 = vmatpush.msra.mxu0 %v126
    %174 = vmatpush.msra.mxu0 %v125
    %175 = vmatpush.msra.mxu0 %v124
    %176 = vmatmul.f32.gmra.mxu0 %v137
    %v177 = vpop.f32.mrf.mxu0
    %v178 = vadd.f32 %v134, %v177
    %179 = vmatmul.f32.gmra.mxu0 %v140
    %v180 = vpop.f32.mrf.mxu0
    %v181 = vadd.f32 %v134, %v180
    %182 = vmatmul.f32.gmra.mxu0 %v143
    %v183 = vpop.f32.mrf.mxu0
    %v184 = vadd.f32 %v134, %v183
    %185 = vmatmul.f32.gmra.mxu0 %v146
    %v186 = vpop.f32.mrf.mxu0
    %v187 = vadd.f32 %v134, %v186
    %188 = vmatmul.f32.gmra.mxu0 %v149
    %v189 = vpop.f32.mrf.mxu0
    %v190 = vadd.f32 %v134, %v189
    %191 = vmatmul.f32.gmra.mxu0 %v152
    %v192 = vpop.f32.mrf.mxu0
    %v193 = vadd.f32 %v134, %v192
    %194 = vmatmul.f32.gmra.mxu0 %v155
    %v195 = vpop.f32.mrf.mxu0
    %v196 = vadd.f32 %v134, %v195
    %197 = vmatmul.f32.gmra.mxu0 %v158
    %v198 = vpop.f32.mrf.mxu0
    %v199 = vadd.f32 %v134, %v198
    %200 = vdwg.mxu0
    %v201 = vld [vmem:[%s6] sm:$0xff]
    %v202 = vld [vmem:[%s6 + $0x8] sm:$0xff]
    %v203 = vld [vmem:[%s6 + $0x10] sm:$0xff]
    %v204 = vld [vmem:[%s6 + $0x18] sm:$0xff]
    %v205 = vld [vmem:[%s7] sm:$0x1]
    %v207 = vperm.slane %v205, 0
    %vm209 = vcmask 261120
    %v211 = vsel %vm209, %v178, 0
    %v214 = vsel %vm209, %v181, 0
    %v217 = vsel %vm209, %v184, 0
    %v220 = vsel %vm209, %v187, 0
    %v223 = vsel %vm209, %v190, 0
    %v226 = vsel %vm209, %v193, 0
    %v229 = vsel %vm209, %v196, 0
    %v232 = vsel %vm209, %v199, 0
    %234 = vmatpush.msra.mxu0 0.0
    %235 = vmatpush.msra.mxu0 0.0
    %236 = vmatpush.msra.mxu0 0.0
    %237 = vmatpush.msra.mxu0 0.0
    %238 = vmatpush.msra.mxu0 0.0
    %239 = vmatpush.msra.mxu0 0.0
    %240 = vmatpush.msra.mxu0 0.0
    %241 = vmatpush.msra.mxu0 0.0
    %242 = vmatpush.msra.mxu0 0.0
    %243 = vmatpush.msra.mxu0 0.0
    %244 = vmatpush.msra.mxu0 0.0
    %245 = vmatpush.msra.mxu0 0.0
    %246 = vmatpush.msra.mxu0 %v204
    %247 = vmatpush.msra.mxu0 %v203
    %248 = vmatpush.msra.mxu0 %v202
    %249 = vmatpush.msra.mxu0 %v201
    %250 = vmatmul.f32.gmra.mxu0 %v211
    %v251 = vpop.f32.mrf.mxu0
    %v252 = vadd.f32 %v207, %v251
    %253 = vmatmul.f32.gmra.mxu0 %v214
    %v254 = vpop.f32.mrf.mxu0
    %v255 = vadd.f32 %v207, %v254
    %256 = vmatmul.f32.gmra.mxu0 %v217
    %v257 = vpop.f32.mrf.mxu0
    %v258 = vadd.f32 %v207, %v257
    %259 = vmatmul.f32.gmra.mxu0 %v220
    %v260 = vpop.f32.mrf.mxu0
    %v261 = vadd.f32 %v207, %v260
    %262 = vmatmul.f32.gmra.mxu0 %v223
    %v263 = vpop.f32.mrf.mxu0
    %v264 = vadd.f32 %v207, %v263
    %265 = vmatmul.f32.gmra.mxu0 %v226
    %v266 = vpop.f32.mrf.mxu0
    %v267 = vadd.f32 %v207, %v266
    %268 = vmatmul.f32.gmra.mxu0 %v229
    %v269 = vpop.f32.mrf.mxu0
    %v270 = vadd.f32 %v207, %v269
    %271 = vmatmul.f32.gmra.mxu0 %v232
    %v272 = vpop.f32.mrf.mxu0
    %v273 = vadd.f32 %v207, %v272
    %274 = vdwg.mxu0
    %v275 = vmax.f32 %v252, 0.0
    %v276 = vmax.f32 %v255, 0.0
    %v277 = vmax.f32 %v258, 0.0
    %v278 = vmax.f32 %v261, 0.0
    %v279 = vmax.f32 %v264, 0.0
    %v280 = vmax.f32 %v267, 0.0
    %v281 = vmax.f32 %v270, 0.0
    %v282 = vmax.f32 %v273, 0.0
    %v283 = vld [vmem:[%s8] sm:$0xff]
    %v284 = vld [vmem:[%s8 + $0x8] sm:$0xff]
    %v285 = vld [vmem:[%s8 + $0x10] sm:$0xff]
    %v286 = vld [vmem:[%s8 + $0x18] sm:$0xff]
    %v287 = vld [vmem:[%s8 + $0x20] sm:$0xff]
    %v288 = vld [vmem:[%s8 + $0x28] sm:$0xff]
    %v289 = vld [vmem:[%s8 + $0x30] sm:$0xff]
    %v290 = vld [vmem:[%s8 + $0x38] sm:$0xff]
    %v291 = vld [vmem:[%s9] sm:$0x1]
    %v293 = vperm.slane %v291, 0
    %v296 = vsel %vm58, %v275, 0
    %v299 = vsel %vm58, %v276, 0
    %v302 = vsel %vm58, %v277, 0
    %v305 = vsel %vm58, %v278, 0
    %v308 = vsel %vm58, %v279, 0
    %v311 = vsel %vm58, %v280, 0
    %v314 = vsel %vm58, %v281, 0
    %v317 = vsel %vm58, %v282, 0
    %319 = vmatpush.msra.mxu0 0.0
    %320 = vmatpush.msra.mxu0 0.0
    %321 = vmatpush.msra.mxu0 0.0
    %322 = vmatpush.msra.mxu0 0.0
    %323 = vmatpush.msra.mxu0 0.0
    %324 = vmatpush.msra.mxu0 0.0
    %325 = vmatpush.msra.mxu0 0.0
    %326 = vmatpush.msra.mxu0 0.0
    %327 = vmatpush.msra.mxu0 %v290
    %328 = vmatpush.msra.mxu0 %v289
    %329 = vmatpush.msra.mxu0 %v288
    %330 = vmatpush.msra.mxu0 %v287
    %331 = vmatpush.msra.mxu0 %v286
    %332 = vmatpush.msra.mxu0 %v285
    %333 = vmatpush.msra.mxu0 %v284
    %334 = vmatpush.msra.mxu0 %v283
    %335 = vmatmul.f32.gmra.mxu0 %v296
    %v336 = vpop.f32.mrf.mxu0
    %v337 = vadd.f32 %v293, %v336
    %338 = vmatmul.f32.gmra.mxu0 %v299
    %v339 = vpop.f32.mrf.mxu0
    %v340 = vadd.f32 %v293, %v339
    %341 = vmatmul.f32.gmra.mxu0 %v302
    %v342 = vpop.f32.mrf.mxu0
    %v343 = vadd.f32 %v293, %v342
    %344 = vmatmul.f32.gmra.mxu0 %v305
    %v345 = vpop.f32.mrf.mxu0
    %v346 = vadd.f32 %v293, %v345
    %347 = vmatmul.f32.gmra.mxu0 %v308
    %v348 = vpop.f32.mrf.mxu0
    %v349 = vadd.f32 %v293, %v348
    %350 = vmatmul.f32.gmra.mxu0 %v311
    %v351 = vpop.f32.mrf.mxu0
    %v352 = vadd.f32 %v293, %v351
    %353 = vmatmul.f32.gmra.mxu0 %v314
    %v354 = vpop.f32.mrf.mxu0
    %v355 = vadd.f32 %v293, %v354
    %356 = vmatmul.f32.gmra.mxu0 %v317
    %v357 = vpop.f32.mrf.mxu0
    %v358 = vadd.f32 %v293, %v357
    %359 = vdwg.mxu0
    %360 = vst [vmem:[%s10] sm:$0xff] %v337
    %361 = vst [vmem:[%s10 + $0x8] sm:$0xff] %v340
    %362 = vst [vmem:[%s10 + $0x10] sm:$0xff] %v343
    %363 = vst [vmem:[%s10 + $0x18] sm:$0xff] %v346
    %364 = vst [vmem:[%s10 + $0x20] sm:$0xff] %v349
    %365 = vst [vmem:[%s10 + $0x28] sm:$0xff] %v352
    %366 = vst [vmem:[%s10 + $0x30] sm:$0xff] %v355
    %367 = vst [vmem:[%s10 + $0x38] sm:$0xff] %v358
    %v368 = vld [vmem:[%s1] sm:$0xff]
    %v369 = vld [vmem:[%s1 + $0x8] sm:$0xff]
    %v370 = vld [vmem:[%s1 + $0x10] sm:$0xff]
    %v371 = vld [vmem:[%s1 + $0x18] sm:$0xff]
    %v372 = vld [vmem:[%s1 + $0x20] sm:$0xff]
    %v373 = vld [vmem:[%s1 + $0x28] sm:$0xff]
    %v374 = vld [vmem:[%s1 + $0x30] sm:$0xff]
    %v375 = vld [vmem:[%s1 + $0x38] sm:$0xff]
    %vm376 = vcmp.ne.f32.partialorder %v368, -100.0
    %vm377 = vcmp.ne.f32.partialorder %v369, -100.0
    %vm378 = vcmp.ne.f32.partialorder %v370, -100.0
    %vm379 = vcmp.ne.f32.partialorder %v371, -100.0
    %vm380 = vcmp.ne.f32.partialorder %v372, -100.0
    %vm381 = vcmp.ne.f32.partialorder %v373, -100.0
    %vm382 = vcmp.ne.f32.partialorder %v374, -100.0
    %vm383 = vcmp.ne.f32.partialorder %v375, -100.0
    %v384 = vsel %vm376, 1, 0
    %v385 = vsel %vm377, 1, 0
    %v386 = vsel %vm378, 1, 0
    %v387 = vsel %vm379, 1, 0
    %v388 = vsel %vm380, 1, 0
    %v389 = vsel %vm381, 1, 0
    %v390 = vsel %vm382, 1, 0
    %v391 = vsel %vm383, 1, 0
    %v392 = vcvt.s32.f32 %v384
    %v393 = vcvt.s32.f32 %v385
    %v394 = vcvt.s32.f32 %v386
    %v395 = vcvt.s32.f32 %v387
    %v396 = vcvt.s32.f32 %v388
    %v397 = vcvt.s32.f32 %v389
    %v398 = vcvt.s32.f32 %v390
    %v399 = vcvt.s32.f32 %v391
    %v400 = vmul.f32 %v337, 1.442695
    %v401 = vpow.pop %v400
    %v402 = vmul.f32 %v340, 1.442695
    %v403 = vpow.pop %v402
    %v404 = vmul.f32 %v343, 1.442695
    %v405 = vpow.pop %v404
    %v406 = vmul.f32 %v346, 1.442695
    %v407 = vpow.pop %v406
    %v408 = vmul.f32 %v349, 1.442695
    %v409 = vpow.pop %v408
    %v410 = vmul.f32 %v352, 1.442695
    %v411 = vpow.pop %v410
    %v412 = vmul.f32 %v355, 1.442695
    %v413 = vpow.pop %v412
    %v414 = vmul.f32 %v358, 1.442695
    %v415 = vpow.pop %v414
    %v416 = vmul.f32 %v368, %v337
    %v417 = vmul.f32 %v369, %v340
    %v418 = vmul.f32 %v370, %v343
    %v419 = vmul.f32 %v371, %v346
    %v420 = vmul.f32 %v372, %v349
    %v421 = vmul.f32 %v373, %v352
    %v422 = vmul.f32 %v374, %v355
    %v423 = vmul.f32 %v375, %v358
    %v424 = vsub.f32 %v401, %v416
    %v425 = vsub.f32 %v403, %v417
    %v426 = vsub.f32 %v405, %v418
    %v427 = vsub.f32 %v407, %v419
    %v428 = vsub.f32 %v409, %v420
    %v429 = vsub.f32 %v411, %v421
    %v430 = vsub.f32 %v413, %v422
    %v431 = vsub.f32 %v415, %v423
    %v432 = vmul.f32 %v424, %v392
    %v433 = vmul.f32 %v425, %v393
    %v434 = vmul.f32 %v426, %v394
    %v435 = vmul.f32 %v427, %v395
    %v436 = vmul.f32 %v428, %v396
    %v437 = vmul.f32 %v429, %v397
    %v438 = vmul.f32 %v430, %v398
    %v439 = vmul.f32 %v431, %v399
    %vm440 = vcmask 130048
    %v441 = vsel %vm440, %v432, 0.0
    %442 = vadd.xlane.f32.xlu0 %v441
    %v443 = vpop.xlane.xlu0 %442
    %v444 = vsel %vm440, %v433, 0.0
    %445 = vadd.xlane.f32.xlu0 %v444
    %v446 = vpop.xlane.xlu0 %445
    %v447 = vsel %vm440, %v434, 0.0
    %448 = vadd.xlane.f32.xlu0 %v447
    %v449 = vpop.xlane.xlu0 %448
    %v450 = vsel %vm440, %v435, 0.0
    %451 = vadd.xlane.f32.xlu0 %v450
    %v452 = vpop.xlane.xlu0 %451
    %v453 = vsel %vm440, %v436, 0.0
    %454 = vadd.xlane.f32.xlu0 %v453
    %v455 = vpop.xlane.xlu0 %454
    %v456 = vsel %vm440, %v437, 0.0
    %457 = vadd.xlane.f32.xlu0 %v456
    %v458 = vpop.xlane.xlu0 %457
    %v459 = vsel %vm440, %v438, 0.0
    %460 = vadd.xlane.f32.xlu0 %v459
    %v461 = vpop.xlane.xlu0 %460
    %v462 = vsel %vm440, %v439, 0.0
    %463 = vadd.xlane.f32.xlu0 %v462
    %v464 = vpop.xlane.xlu0 %463
    %v465 = vadd.f32 %v443, %v446
    %v466 = vadd.f32 %v465, %v449
    %v467 = vadd.f32 %v466, %v452
    %v468 = vadd.f32 %v467, %v455
    %v469 = vadd.f32 %v468, %v458
    %v470 = vadd.f32 %v469, %v461
    %v471 = vadd.f32 %v470, %v464
    %v472 = vrot.slane %v471, 4
    %v473 = vadd.f32 %v471, %v472
    %v474 = vrot.slane %v473, 2
    %v475 = vadd.f32 %v473, %v474
    %v476 = vrot.slane %v475, 1
    %v477 = vadd.f32 %v475, %v476
    %v478 = vsel %vm440, %v392, 0.0
    %479 = vadd.xlane.f32.xlu0 %v478
    %v480 = vpop.xlane.xlu0 %479
    %v481 = vsel %vm440, %v393, 0.0
    %482 = vadd.xlane.f32.xlu0 %v481
    %v483 = vpop.xlane.xlu0 %482
    %v484 = vsel %vm440, %v394, 0.0
    %485 = vadd.xlane.f32.xlu0 %v484
    %v486 = vpop.xlane.xlu0 %485
    %v487 = vsel %vm440, %v395, 0.0
    %488 = vadd.xlane.f32.xlu0 %v487
    %v489 = vpop.xlane.xlu0 %488
    %v490 = vsel %vm440, %v396, 0.0
    %491 = vadd.xlane.f32.xlu0 %v490
    %v492 = vpop.xlane.xlu0 %491
    %v493 = vsel %vm440, %v397, 0.0
    %494 = vadd.xlane.f32.xlu0 %v493
    %v495 = vpop.xlane.xlu0 %494
    %v496 = vsel %vm440, %v398, 0.0
    %497 = vadd.xlane.f32.xlu0 %v496
    %v498 = vpop.xlane.xlu0 %497
    %v499 = vsel %vm440, %v399, 0.0
    %500 = vadd.xlane.f32.xlu0 %v499
    %v501 = vpop.xlane.xlu0 %500
    %v502 = vadd.f32 %v480, %v483
    %v503 = vadd.f32 %v502, %v486
    %v504 = vadd.f32 %v503, %v489
    %v505 = vadd.f32 %v504, %v492
    %v506 = vadd.f32 %v505, %v495
    %v507 = vadd.f32 %v506, %v498
    %v508 = vadd.f32 %v507, %v501
    %v509 = vrot.slane %v508, 4
    %v510 = vadd.f32 %v508, %v509
    %v511 = vrot.slane %v510, 2
    %v512 = vadd.f32 %v510, %v511
    %v513 = vrot.slane %v512, 1
    %v514 = vadd.f32 %v512, %v513
    %v515 = vmax.f32 %v514, 1.0
    %v516 = vrcp.pop %v515
    %v517 = vmul.f32 %v515, %v516
    %v518 = vsub.f32 1.0, %v517
    %v519 = vmul.f32 %v516, %v518
    %v520 = vadd.f32 %v516, %v519
    %vm521 = vweird.f32 %v515
    %vm522 = vweird.f32 %v516
    %vm523 = vmor %vm521, %vm522
    %v524 = vsel %vm523, %v516, %v520
    %v525 = vand.u32 2147483647, %v515
    %vm526 = vcmp.eq.f32.partialorder %v525, 8.507059e+37
    %v527 = vand.u32 %v515, 2147483648
    %v528 = vor.u32 1.1754944e-38, %v527
    %v529 = vsel %vm526, %v528, %v524
    %v530 = vmul.f32 %v477, %v529
    %vm531 = vcmask 0
    %532 = vst.msk [vmem:[#allocation2] sm:$0x1] %vm531, %v530
    // Predicated region
    $region42: #{lfads_teacher_forward.9} parent=1 // pred_check
      _
    $region43: #{lfads_teacher_forward.9} parent=1 // pred_check_branch
      %534 = sbr.rel (0) target = $region45
    $region44: #{lfads_teacher_forward.9} parent=1 // pred_region
      _
    $region45: #{lfads_teacher_forward.9} parent=1 // pred_fallthru
      _
    // Predicated region
    $region46: #{lfads_teacher_forward.9} parent=1 // pred_check
      _
    $region47: #{lfads_teacher_forward.9} parent=1 // pred_check_branch
      %536 = sbr.rel (0) target = $region49
    $region48: #{lfads_teacher_forward.9} parent=1 // pred_region
      %538 = vsyncadd [#allocation3], 0
      %s540 = sshll.u32 [#allocation2], 4
      %s541 = int_to_ptr.vmem [resolvable:$true] %s540
      %s542 = sshll.u32 %s11, 4
      %s543 = int_to_ptr.hbm [resolvable:$true] %s542
      %545 = dma.vmem_to_hbm [thread:$0]  %s541, 16, %s543, [#allocation3]
    $region49: #{lfads_teacher_forward.9} parent=1 // pred_fallthru
      _
    // Predicated region
    $region50: #{lfads_teacher_forward.9} parent=1 // pred_check
      _
    $region51: #{lfads_teacher_forward.9} parent=1 // pred_check_branch
      %547 = sbr.rel (0) target = $region53
    $region52: #{lfads_teacher_forward.9} parent=1 // pred_region
      _
    $region53: #{lfads_teacher_forward.9} parent=1 // pred_fallthru
      _
    // Predicated region
    $region54: #{lfads_teacher_forward.9} parent=1 // pred_check
      _
    $region55: #{lfads_teacher_forward.9} parent=1 // pred_check_branch
      %549 = sbr.rel (0) target = $region57
    $region56: #{lfads_teacher_forward.9} parent=1 // pred_region
      %551 = dma.done [#allocation3], 16
    $region57: #{lfads_teacher_forward.9} parent=1 // pred_fallthru
      _
    %552 = vsyncpa [#allocation3], 1

</llo_original>
